<compile_context>
chip_gen: v7x
topology: tpu7x:2x2x1
jax: 0.10.0
libtpu: 0.0.40
codegen_flags: <defaults>
</compile_context>

<pallas_src>
import functools
from math import sqrt

import jax
import jax.numpy as jnp
from jax.experimental import pallas as pl
from jax.experimental.pallas import tpu as pltpu

LN_EPS = 1e-5                     # torch.nn.LayerNorm default
MXU_DTYPE = jnp.bfloat16          # matmul operand dtype (accumulation stays f32)
_MAX_TILE_COLS = 8192             # cap per-step latency even when VMEM allows more


# --------------------------- hardware-aware sizing ----------------------------

def _tpu_defaults():
    """Trace-time HW query; conservative (v7x-safe) fallbacks if unavailable."""
    vmem_phys = 64 * 1024 * 1024
    num_cores = 1
    try:
        info = pltpu.get_tpu_info()
        vmem_phys = int(getattr(info, "vmem_capacity_bytes", vmem_phys))
        for attr in ("num_cores", "tensorcore_count", "core_count"):
            val = getattr(info, attr, None)
            if val:
                num_cores = int(val)
                break
    except Exception:
        pass
    vmem_limit = max(32 * 1024 * 1024,
                     min(int(0.7 * vmem_phys), 100 * 1024 * 1024))
    return vmem_limit, num_cores


def _choose_tile_cols(n, f32_rows, vmem_limit, num_cores):
    """Lane-axis tile width: multiple of 128, sized by a VMEM byte budget."""
    if n <= 128:
        return n
    budget = vmem_limit // 6                       # headroom for weights/temps
    tile = budget // max(1, f32_rows * 4 * 2)      # f32 bytes, double-buffered
    tile = max(128, min(tile, _MAX_TILE_COLS, n))
    tile = (tile // 128) * 128
    if num_cores > 1:                              # give every TensorCore a step
        while tile > 128 and pl.cdiv(n, tile) < num_cores:
            tile = max(128, ((tile // 2) // 128) * 128)
    return tile


def _choose_batch_tile(batch, heads, seq, dim, vmem_limit, num_cores):
    """Batch elements per attention grid step (divisor of batch)."""
    tb = min(8, batch)
    while batch % tb:
        tb -= 1
    while tb > 1 and tb * heads * seq * dim * 4 * 8 > vmem_limit // 2:
        tb -= 1
        while batch % tb:
            tb -= 1
    if num_cores > 1:
        while tb > 1 and (batch // tb) < num_cores:
            tb -= 1
            while batch % tb:
                tb -= 1
    return max(tb, 1)


# ----------------------------- in-kernel helpers ------------------------------

def _layernorm_cols(x, gamma, beta):
    """LayerNorm over the feature (sublane) axis of a (C, T) tile."""
    mean = jnp.mean(x, axis=0, keepdims=True)
    var = jnp.mean(jnp.square(x - mean), axis=0, keepdims=True)
    return (x - mean) * jax.lax.rsqrt(var + LN_EPS) * gamma + beta


def _layernorm_last(x, gamma, beta):
    """LayerNorm over the last (lane) axis."""
    mean = jnp.mean(x, axis=-1, keepdims=True)
    var = jnp.mean(jnp.square(x - mean), axis=-1, keepdims=True)
    return (x - mean) * jax.lax.rsqrt(var + LN_EPS) * gamma + beta


def _gelu(x):
    # TODO(synk): torch.nn.GELU() default is the exact erf form; tanh
    # approximation used because erf lowering on Mosaic is not guaranteed.
    c = jnp.sqrt(2.0 / jnp.pi).astype(x.dtype)
    return 0.5 * x * (1.0 + jnp.tanh(c * (x + 0.044715 * x * x * x)))


# -------------------------------- Pallas kernels ------------------------------

def _proj_ln_qkv_kernel(xin_ref, pw_ref, pb_ref, g_ref, b_ref, qw_ref,
                        x_ref, qkv_ref):
    # x^T = W_p @ x_in^T + b_p ; qkv^T = W_qkv @ LayerNorm_C(x^T)
    x = (jnp.dot(pw_ref[...], xin_ref[...].astype(MXU_DTYPE),
                 preferred_element_type=jnp.float32) + pb_ref[...])
    x_ref[...] = x
    xn = _layernorm_cols(x, g_ref[...], b_ref[...])
    qkv_ref[...] = jnp.dot(qw_ref[...], xn.astype(MXU_DTYPE),
                           preferred_element_type=jnp.float32)


def _ln_qkv_kernel(x_ref, g_ref, b_ref, qw_ref, qkv_ref):
    xn = _layernorm_cols(x_ref[...], g_ref[...], b_ref[...])
    qkv_ref[...] = jnp.dot(qw_ref[...], xn.astype(MXU_DTYPE),
                           preferred_element_type=jnp.float32)


def _ens_attention_kernel(q_ref, k_ref, v_ref, g_ref, b_ref, s_ref, o_ref):
    # Block (TB, H, E, D).  Cosine-norm over D, learned per-head scaling on BOTH
    # q and k, softmax scale 1.0 (matches EnsAttention.forward exactly).
    tb, nh, e, d = q_ref.shape
    bh = tb * nh
    g, beta, s = g_ref[...], b_ref[...], s_ref[...]

    qn = (_layernorm_last(q_ref[...], g, beta) * s).astype(MXU_DTYPE).reshape(bh, e, d)
    kn = (_layernorm_last(k_ref[...], g, beta) * s).astype(MXU_DTYPE).reshape(bh, e, d)
    v = v_ref[...].astype(MXU_DTYPE).reshape(bh, e, d)

    scores = jnp.einsum('bqd,bkd->bqk', qn, kn,
                        preferred_element_type=jnp.float32)
    m = jnp.max(scores, axis=-1, keepdims=True)
    p = jnp.exp(scores - m)
    p = p * pl.reciprocal(jnp.sum(p, axis=-1, keepdims=True), approx=True)
    out = jnp.einsum('bqk,bkd->bqd', p.astype(MXU_DTYPE), v,
                     preferred_element_type=jnp.float32)
    o_ref[...] = out.reshape(tb, nh, e, d)


def _epilogue_body(attn_ref, res_ref, ow_ref, ob_ref, mg_ref, mb_ref,
                   w1_ref, b1_ref, w2_ref, b2_ref):
    # EnsAttention epilogue:  y^T = res^T + W_o @ attn^T + b_o
    y = (res_ref[...]
         + jnp.dot(ow_ref[...], attn_ref[...].astype(MXU_DTYPE),
                   preferred_element_type=jnp.float32)
         + ob_ref[...])
    # MLPBlock:  y^T + W_2 @ GELU(W_1 @ LayerNorm_C(y^T) + b_1) + b_2
    hid = _gelu(jnp.dot(w1_ref[...],
                        _layernorm_cols(y, mg_ref[...], mb_ref[...]).astype(MXU_DTYPE),
                        preferred_element_type=jnp.float32) + b1_ref[...])
    return (y + jnp.dot(w2_ref[...], hid.astype(MXU_DTYPE),
                        preferred_element_type=jnp.float32) + b2_ref[...])


def _epilogue_kernel(attn_ref, res_ref, ow_ref, ob_ref, mg_ref, mb_ref,
                     w1_ref, b1_ref, w2_ref, b2_ref, o_ref):
    o_ref[...] = _epilogue_body(attn_ref, res_ref, ow_ref, ob_ref, mg_ref, mb_ref,
                                w1_ref, b1_ref, w2_ref, b2_ref)


def _epilogue_out_kernel(attn_ref, res_ref, ow_ref, ob_ref, mg_ref, mb_ref,
                         w1_ref, b1_ref, w2_ref, b2_ref, fw_ref, fb_ref, o_ref):
    x = _epilogue_body(attn_ref, res_ref, ow_ref, ob_ref, mg_ref, mb_ref,
                       w1_ref, b1_ref, w2_ref, b2_ref)
    # Fused output_layer: lane-dense (1, TILE_N) store instead of an (N, 1) one.
    o_ref[...] = (jnp.dot(fw_ref[...], x.astype(MXU_DTYPE),
                          preferred_element_type=jnp.float32) + fb_ref[...])


# -------------------------------- spec helpers ---------------------------------

def _col_spec(rows, tile_cols):
    return pl.BlockSpec((rows, tile_cols), lambda i: (0, i))


def _resident(shape):
    # Grid-invariant operand (weights / biases / LN params).
    # TODO(synk): pipeline_mode=pl.Buffered(1) here for production channel counts
    # on v7x (double-buffering grid-invariant weights wastes VMEM).
    nd = len(shape)
    return pl.BlockSpec(shape, lambda i, _nd=nd: (0,) * _nd)


def _cparams(n_axes, vmem_limit):
    return pltpu.CompilerParams(
        dimension_semantics=("parallel",) * n_axes,
        vmem_limit_bytes=int(vmem_limit))


# --------------------------------- wrappers ------------------------------------

def proj_ln_qkv(x_in_t, pw, pb, ln_g, ln_b, qkv_w, *, vmem_limit, num_cores):
    c_in, n = x_in_t.shape
    c = pw.shape[0]
    f = qkv_w.shape[0]
    tn = _choose_tile_cols(n, c_in + 2 * c + f, vmem_limit, num_cores)
    return pl.pallas_call(
        _proj_ln_qkv_kernel,
        out_shape=(jax.ShapeDtypeStruct((c, n), jnp.float32),
                   jax.ShapeDtypeStruct((f, n), jnp.float32)),
        grid=(pl.cdiv(n, tn),),
        in_specs=[_col_spec(c_in, tn), _resident((c, c_in)), _resident((c, 1)),
                  _resident((c, 1)), _resident((c, 1)), _resident((f, c))],
        out_specs=(_col_spec(c, tn), _col_spec(f, tn)),
        compiler_params=_cparams(1, vmem_limit),
    )(x_in_t, pw.astype(MXU_DTYPE), pb.reshape(c, 1),
      ln_g.reshape(c, 1), ln_b.reshape(c, 1), qkv_w.astype(MXU_DTYPE))


def ln_qkv(x_t, ln_g, ln_b, qkv_w, *, vmem_limit, num_cores):
    c, n = x_t.shape
    f = qkv_w.shape[0]
    tn = _choose_tile_cols(n, c + f, vmem_limit, num_cores)
    return pl.pallas_call(
        _ln_qkv_kernel,
        out_shape=jax.ShapeDtypeStruct((f, n), jnp.float32),
        grid=(pl.cdiv(n, tn),),
        in_specs=[_col_spec(c, tn), _resident((c, 1)), _resident((c, 1)),
                  _resident((f, c))],
        out_specs=_col_spec(f, tn),
        compiler_params=_cparams(1, vmem_limit),
    )(x_t, ln_g.reshape(c, 1), ln_b.reshape(c, 1), qkv_w.astype(MXU_DTYPE))


def ens_attention(q, k, v, cos_g, cos_b, scaling, *, vmem_limit, num_cores):
    batch, heads, e, d = q.shape
    tb = _choose_batch_tile(batch, heads, e, d, vmem_limit, num_cores)
    qkv_spec = pl.BlockSpec((tb, heads, e, d), lambda i: (i, 0, 0, 0))
    ln_spec = pl.BlockSpec((1, 1, 1, d), lambda i: (0, 0, 0, 0))
    sc_spec = pl.BlockSpec((1, heads, 1, 1), lambda i: (0, 0, 0, 0))
    return pl.pallas_call(
        _ens_attention_kernel,
        out_shape=jax.ShapeDtypeStruct((batch, heads, e, d), jnp.float32),
        grid=(batch // tb,),
        in_specs=[qkv_spec, qkv_spec, qkv_spec, ln_spec, ln_spec, sc_spec],
        out_specs=qkv_spec,
        compiler_params=_cparams(1, vmem_limit),
    )(q, k, v, cos_g.reshape(1, 1, 1, d), cos_b.reshape(1, 1, 1, d),
      scaling.reshape(1, heads, 1, 1))


def attn_out_mlp(attn_t, res_t, blk, *, final=None, vmem_limit, num_cores):
    c, n = attn_t.shape
    hidden = blk["lin_in_w"].shape[0]
    tn = _choose_tile_cols(n, 4 * c + hidden, vmem_limit, num_cores)
    common_specs = [
        _col_spec(c, tn), _col_spec(c, tn),
        _resident((c, c)), _resident((c, 1)),
        _resident((c, 1)), _resident((c, 1)),
        _resident((hidden, c)), _resident((hidden, 1)),
        _resident((c, hidden)), _resident((c, 1)),
    ]
    common_args = (
        attn_t, res_t,
        blk["attn_out_w"].astype(MXU_DTYPE), blk["attn_out_b"].reshape(c, 1),
        blk["mlp_norm_g"].reshape(c, 1), blk["mlp_norm_b"].reshape(c, 1),
        blk["lin_in_w"].astype(MXU_DTYPE), blk["lin_in_b"].reshape(hidden, 1),
        blk["lin_out_w"].astype(MXU_DTYPE), blk["lin_out_b"].reshape(c, 1),
    )
    if final is None:
        return pl.pallas_call(
            _epilogue_kernel,
            out_shape=jax.ShapeDtypeStruct((c, n), jnp.float32),
            grid=(pl.cdiv(n, tn),),
            in_specs=common_specs,
            out_specs=_col_spec(c, tn),
            compiler_params=_cparams(1, vmem_limit),
        )(*common_args)
    out_w, out_b = final
    return pl.pallas_call(
        _epilogue_out_kernel,
        out_shape=jax.ShapeDtypeStruct((1, n), jnp.float32),
        grid=(pl.cdiv(n, tn),),
        in_specs=common_specs + [_resident((1, c)), _resident((1, 1))],
        out_specs=_col_spec(1, tn),
        compiler_params=_cparams(1, vmem_limit),
    )(*common_args, out_w.astype(MXU_DTYPE), out_b.reshape(1, 1))


# ------------------------------ model forward ----------------------------------

def stacked_transformer_forward(x, params, *, n_heads):
    b, e, t, h, w, c_in = x.shape
    thw = t * h * w
    n_tok = b * e * thw
    c = params["proj_w"].shape[0]
    assert c % n_heads == 0
    ac = c // n_heads
    d = thw * ac
    blocks = params["blocks"]
    assert blocks, "StackedTransformer needs at least one TransformerBlock"

    vmem_limit, num_cores = _tpu_defaults()

    # feature-major (lane-dense) token slab: (c_in, N)
    x_in_t = jnp.moveaxis(x, -1, 0).reshape(c_in, n_tok)

    x_t = None
    out_t = None
    for idx, blk in enumerate(blocks):
        if idx == 0:
            # projection_layer fused into the first block's LayerNorm+qkv kernel
            x_t, qkv_t = proj_ln_qkv(x_in_t, params["proj_w"], params["proj_b"],
                                     blk["in_norm_g"], blk["in_norm_b"],
                                     blk["qkv_w"],
                                     vmem_limit=vmem_limit, num_cores=num_cores)
        else:
            qkv_t = ln_qkv(x_t, blk["in_norm_g"], blk["in_norm_b"], blk["qkv_w"],
                           vmem_limit=vmem_limit, num_cores=num_cores)

        # head split: (3C, N) -> (3, b, H, e, D), D = thw * attention_channels
        # TODO(synk): fold this XLA transpose (and its inverse below) into the
        # attention kernel once narrow-lane (width=ac<128) blocks are safe.
        qkv = qkv_t.reshape(3, n_heads, ac, b, e, thw)
        qkv = jnp.transpose(qkv, (0, 3, 1, 4, 5, 2)).reshape(3, b, n_heads, e, d)

        attn = ens_attention(qkv[0], qkv[1], qkv[2],
                             blk["cos_norm_g"], blk["cos_norm_b"], blk["scaling"],
                             vmem_limit=vmem_limit, num_cores=num_cores)

        # head merge back to feature-major (C, N)
        attn_t = jnp.transpose(attn.reshape(b, n_heads, e, thw, ac),
                               (1, 4, 0, 2, 3)).reshape(c, n_tok)

        if idx == len(blocks) - 1:
            out_t = attn_out_mlp(attn_t, x_t, blk,
                                 final=(params["out_w"], params["out_b"]),
                                 vmem_limit=vmem_limit, num_cores=num_cores)
        else:
            x_t = attn_out_mlp(attn_t, x_t, blk,
                               vmem_limit=vmem_limit, num_cores=num_cores)

    return out_t.reshape(b, e, t, h, w, 1)


# ------------------------------- parameter init --------------------------------

def _linear_params(key, out_f, in_f, *, weight_std=None, bias=True):
    kw, kb = jax.random.split(key)
    bound = 1.0 / sqrt(in_f)
    if weight_std is None:
        wgt = jax.random.uniform(kw, (out_f, in_f), jnp.float32, -bound, bound)
    else:
        wgt = weight_std * jax.random.normal(kw, (out_f, in_f), jnp.float32)
    if not bias:
        return wgt
    bia = jax.random.uniform(kb, (out_f,), jnp.float32, -bound, bound)
    return wgt, bia


def init_params(key, n_data_shape, n_heads, mlp_mult, projection_channels,
                num_blocks):
    t, h, w, c_in = n_data_shape
    c = projection_channels
    assert c % n_heads == 0
    ac = c // n_heads
    d = t * h * w * ac
    hidden = int(c * mlp_mult)

    keys = jax.random.split(key, 2 + num_blocks)
    proj_w, proj_b = _linear_params(keys[0], c, c_in)
    out_w, out_b = _linear_params(keys[1], 1, c)
    params = {"proj_w": proj_w, "proj_b": proj_b,
              "out_w": out_w, "out_b": out_b, "blocks": []}
    for i in range(num_blocks):
        bk = jax.random.split(keys[2 + i], 4)
        qkv_w = _linear_params(bk[0], 3 * c, c, bias=False)
        attn_out_w, attn_out_b = _linear_params(bk[1], c, c, weight_std=1e-5)
        lin_in_w, lin_in_b = _linear_params(bk[2], hidden, c)
        lin_out_w, lin_out_b = _linear_params(bk[3], c, hidden, weight_std=1e-5)
        params["blocks"].append({
            "in_norm_g": jnp.ones((c,), jnp.float32),
            "in_norm_b": jnp.zeros((c,), jnp.float32),
            "qkv_w": qkv_w,
            "cos_norm_g": jnp.ones((d,), jnp.float32),
            "cos_norm_b": jnp.zeros((d,), jnp.float32),
            "scaling": jnp.full((n_heads,), 1.0 / sqrt(d), jnp.float32),
            "attn_out_w": attn_out_w, "attn_out_b": attn_out_b,
            "mlp_norm_g": jnp.ones((c,), jnp.float32),
            "mlp_norm_b": jnp.zeros((c,), jnp.float32),
            "lin_in_w": lin_in_w, "lin_in_b": lin_in_b,
            "lin_out_w": lin_out_w, "lin_out_b": lin_out_b,
        })
    return params


# ------------------------------------ main --------------------------------------

if __name__ == "__main__":
    key = jax.random.PRNGKey(0)
    pkey, xkey = jax.random.split(key)

    # small shapes: n_data_shape = (t, h, w, c_in)
    n_data_shape = (2, 2, 2, 4)
    batch, ensemble = 2, 8
    n_heads, mlp_mult, projection_channels, num_blocks = 2, 2, 16, 2

    params = init_params(pkey, n_data_shape, n_heads, mlp_mult,
                         projection_channels, num_blocks)
    x = jax.random.normal(xkey, (batch, ensemble) + n_data_shape, jnp.float32)

    fwd = jax.jit(functools.partial(stacked_transformer_forward, n_heads=n_heads))
    out = fwd(x, params)
    jax.block_until_ready(out)

    assert out.shape == (batch, ensemble) + n_data_shape[:-1] + (1,), out.shape
    assert bool(jnp.all(jnp.isfinite(out)))
    print("KERNEL_OK")
</pallas_src>

<mosaic_0001>
module attributes {stable_mosaic.version = 11 : i64} {
  func.func @_proj_ln_qkv_kernel(%arg0: i32, %arg1: memref<4x128xf32, #tpu.memory_space<vmem>>, %arg2: memref<16x4xbf16, #tpu.memory_space<vmem>>, %arg3: memref<16x1xf32, #tpu.memory_space<vmem>>, %arg4: memref<16x1xf32, #tpu.memory_space<vmem>>, %arg5: memref<16x1xf32, #tpu.memory_space<vmem>>, %arg6: memref<48x16xbf16, #tpu.memory_space<vmem>>, %arg7: memref<16x128xf32, #tpu.memory_space<vmem>>, %arg8: memref<48x128xf32, #tpu.memory_space<vmem>>) attributes {dimension_semantics = [#tpu.dimension_semantics<parallel>], iteration_bounds = array<i64: 1>, scalar_prefetch = 0 : i64, scratch_operands = 0 : i64, tpu.core_type = #tpu.core_type<tc>, window_params = [{transform_indices = @transform_0, window_bounds = array<i64: 4, 128>}, {pipeline_mode = #tpu.pipeline_mode<synchronous>, transform_indices = @transform_1, window_bounds = array<i64: 16, 4>}, {pipeline_mode = #tpu.pipeline_mode<synchronous>, transform_indices = @transform_2, window_bounds = array<i64: 16, 1>}, {pipeline_mode = #tpu.pipeline_mode<synchronous>, transform_indices = @transform_3, window_bounds = array<i64: 16, 1>}, {pipeline_mode = #tpu.pipeline_mode<synchronous>, transform_indices = @transform_4, window_bounds = array<i64: 16, 1>}, {pipeline_mode = #tpu.pipeline_mode<synchronous>, transform_indices = @transform_5, window_bounds = array<i64: 48, 16>}, {transform_indices = @transform_6, window_bounds = array<i64: 16, 128>}, {transform_indices = @transform_7, window_bounds = array<i64: 48, 128>}]} {
    %c0 = arith.constant 0 : index
    %c0_0 = arith.constant 0 : index
    %0 = vector.load %arg2[%c0, %c0_0] : memref<16x4xbf16, #tpu.memory_space<vmem>>, vector<16x4xbf16>
    %c0_1 = arith.constant 0 : index
    %c0_2 = arith.constant 0 : index
    %1 = vector.load %arg1[%c0_1, %c0_2] : memref<4x128xf32, #tpu.memory_space<vmem>>, vector<4x128xf32>
    %2 = arith.truncf %1 : vector<4x128xf32> to vector<4x128xbf16>
    %cst = arith.constant dense<0.000000e+00> : vector<16x128xf32>
    %3 = tpu.matmul %0, %2, %cst {dimension_numbers = #tpu.dot_dimension_numbers<[1], [0], [0], [1], [0, 0, 1, 1], [], []>} : vector<16x4xbf16>, vector<4x128xbf16>, vector<16x128xf32> -> vector<16x128xf32>
    %c0_3 = arith.constant 0 : index
    %c0_4 = arith.constant 0 : index
    %4 = vector.load %arg3[%c0_3, %c0_4] : memref<16x1xf32, #tpu.memory_space<vmem>>, vector<16x1xf32>
    %5 = vector.broadcast %4 : vector<16x1xf32> to vector<16x128xf32>
    %6 = arith.addf %3, %5 : vector<16x128xf32>
    %c0_5 = arith.constant 0 : index
    %c0_6 = arith.constant 0 : index
    %7 = vector.load %arg7[%c0_5, %c0_6] : memref<16x128xf32, #tpu.memory_space<vmem>>, vector<16x128xf32>
    tpu.vector_store %arg7[%c0_5, %c0_6], %6 {strides = array<i32>} : memref<16x128xf32, #tpu.memory_space<vmem>>, vector<16x128xf32>,
    %c0_7 = arith.constant 0 : index
    %c0_8 = arith.constant 0 : index
    %8 = vector.load %arg4[%c0_7, %c0_8] : memref<16x1xf32, #tpu.memory_space<vmem>>, vector<16x1xf32>
    %c0_9 = arith.constant 0 : index
    %c0_10 = arith.constant 0 : index
    %9 = vector.load %arg5[%c0_9, %c0_10] : memref<16x1xf32, #tpu.memory_space<vmem>>, vector<16x1xf32>
    %cst_11 = arith.constant dense<0.000000e+00> : vector<128xf32>
    %10 = vector.multi_reduction <add>, %6, %cst_11 [0] : vector<16x128xf32> to vector<128xf32>
    %11 = vector.shape_cast %10 : vector<128xf32> to vector<1x128xf32>
    %cst_12 = arith.constant 1.600000e+01 : f32
    %12 = vector.broadcast %cst_12 : f32 to vector<1x128xf32>
    %13 = arith.divf %11, %12 : vector<1x128xf32>
    %14 = vector.broadcast %13 : vector<1x128xf32> to vector<16x128xf32>
    %15 = arith.subf %6, %14 : vector<16x128xf32>
    %16 = arith.mulf %15, %15 : vector<16x128xf32>
    %cst_13 = arith.constant dense<0.000000e+00> : vector<128xf32>
    %17 = vector.multi_reduction <add>, %16, %cst_13 [0] : vector<16x128xf32> to vector<128xf32>
    %18 = vector.shape_cast %17 : vector<128xf32> to vector<1x128xf32>
    %cst_14 = arith.constant 1.600000e+01 : f32
    %19 = vector.broadcast %cst_14 : f32 to vector<1x128xf32>
    %20 = arith.divf %18, %19 : vector<1x128xf32>
    %21 = vector.broadcast %13 : vector<1x128xf32> to vector<16x128xf32>
    %22 = arith.subf %6, %21 : vector<16x128xf32>
    %cst_15 = arith.constant 9.99999974E-6 : f32
    %23 = vector.broadcast %cst_15 : f32 to vector<1x128xf32>
    %24 = arith.addf %20, %23 : vector<1x128xf32>
    %25 = math.rsqrt %24 : vector<1x128xf32>
    %26 = vector.broadcast %25 : vector<1x128xf32> to vector<16x128xf32>
    %27 = arith.mulf %22, %26 : vector<16x128xf32>
    %28 = vector.broadcast %8 : vector<16x1xf32> to vector<16x128xf32>
    %29 = arith.mulf %27, %28 : vector<16x128xf32>
    %30 = vector.broadcast %9 : vector<16x1xf32> to vector<16x128xf32>
    %31 = arith.addf %29, %30 : vector<16x128xf32>
    %c0_16 = arith.constant 0 : index
    %c0_17 = arith.constant 0 : index
    %32 = vector.load %arg6[%c0_16, %c0_17] : memref<48x16xbf16, #tpu.memory_space<vmem>>, vector<48x16xbf16>
    %33 = arith.truncf %31 : vector<16x128xf32> to vector<16x128xbf16>
    %cst_18 = arith.constant dense<0.000000e+00> : vector<48x128xf32>
    %34 = tpu.matmul %32, %33, %cst_18 {dimension_numbers = #tpu.dot_dimension_numbers<[1], [0], [0], [1], [0, 0, 1, 1], [], []>} : vector<48x16xbf16>, vector<16x128xbf16>, vector<48x128xf32> -> vector<48x128xf32>
    %c0_19 = arith.constant 0 : index
    %c0_20 = arith.constant 0 : index
    %35 = vector.load %arg8[%c0_19, %c0_20] : memref<48x128xf32, #tpu.memory_space<vmem>>, vector<48x128xf32>
    tpu.vector_store %arg8[%c0_19, %c0_20], %34 {strides = array<i32>} : memref<48x128xf32, #tpu.memory_space<vmem>>, vector<48x128xf32>,
    return
  }
  func.func @transform_0(%arg0: i32) -> (i32, i32) {
    %c0_i32 = arith.constant 0 : i32
    %c0_i32_0 = arith.constant 0 : i32
    return %c0_i32, %arg0 : i32, i32
  }
  func.func @transform_1(%arg0: i32) -> (i32, i32) {
    %c0_i32 = arith.constant 0 : i32
    %c0_i32_0 = arith.constant 0 : i32
    %c0_i32_1 = arith.constant 0 : i32
    return %c0_i32, %c0_i32_0 : i32, i32
  }
  func.func @transform_2(%arg0: i32) -> (i32, i32) {
    %c0_i32 = arith.constant 0 : i32
    %c0_i32_0 = arith.constant 0 : i32
    %c0_i32_1 = arith.constant 0 : i32
    return %c0_i32, %c0_i32_0 : i32, i32
  }
  func.func @transform_3(%arg0: i32) -> (i32, i32) {
    %c0_i32 = arith.constant 0 : i32
    %c0_i32_0 = arith.constant 0 : i32
    %c0_i32_1 = arith.constant 0 : i32
    return %c0_i32, %c0_i32_0 : i32, i32
  }
  func.func @transform_4(%arg0: i32) -> (i32, i32) {
    %c0_i32 = arith.constant 0 : i32
    %c0_i32_0 = arith.constant 0 : i32
    %c0_i32_1 = arith.constant 0 : i32
    return %c0_i32, %c0_i32_0 : i32, i32
  }
  func.func @transform_5(%arg0: i32) -> (i32, i32) {
    %c0_i32 = arith.constant 0 : i32
    %c0_i32_0 = arith.constant 0 : i32
    %c0_i32_1 = arith.constant 0 : i32
    return %c0_i32, %c0_i32_0 : i32, i32
  }
  func.func @transform_6(%arg0: i32) -> (i32, i32) {
    %c0_i32 = arith.constant 0 : i32
    %c0_i32_0 = arith.constant 0 : i32
    return %c0_i32, %arg0 : i32, i32
  }
  func.func @transform_7(%arg0: i32) -> (i32, i32) {
    %c0_i32 = arith.constant 0 : i32
    %c0_i32_0 = arith.constant 0 : i32
    return %c0_i32, %arg0 : i32, i32
  }
}

module attributes {stable_mosaic.version = 11 : i64} {
  func.func @_ens_attention_kernel(%arg0: i32, %arg1: memref<2x2x8x64xf32, #tpu.memory_space<vmem>>, %arg2: memref<2x2x8x64xf32, #tpu.memory_space<vmem>>, %arg3: memref<2x2x8x64xf32, #tpu.memory_space<vmem>>, %arg4: memref<1x1x1x64xf32, #tpu.memory_space<vmem>>, %arg5: memref<1x1x1x64xf32, #tpu.memory_space<vmem>>, %arg6: memref<1x2x1x1xf32, #tpu.memory_space<vmem>>, %arg7: memref<2x2x8x64xf32, #tpu.memory_space<vmem>>) attributes {dimension_semantics = [#tpu.dimension_semantics<parallel>], iteration_bounds = array<i64: 1>, scalar_prefetch = 0 : i64, scratch_operands = 0 : i64, tpu.core_type = #tpu.core_type<tc>, window_params = [{transform_indices = @transform_0, window_bounds = array<i64: 2, 2, 8, 64>}, {transform_indices = @transform_1, window_bounds = array<i64: 2, 2, 8, 64>}, {transform_indices = @transform_2, window_bounds = array<i64: 2, 2, 8, 64>}, {pipeline_mode = #tpu.pipeline_mode<synchronous>, transform_indices = @transform_3, window_bounds = array<i64: 1, 1, 1, 64>}, {pipeline_mode = #tpu.pipeline_mode<synchronous>, transform_indices = @transform_4, window_bounds = array<i64: 1, 1, 1, 64>}, {pipeline_mode = #tpu.pipeline_mode<synchronous>, transform_indices = @transform_5, window_bounds = array<i64: 1, 2, 1, 1>}, {transform_indices = @transform_6, window_bounds = array<i64: 2, 2, 8, 64>}]} {
    %c0 = arith.constant 0 : index
    %c0_0 = arith.constant 0 : index
    %c0_1 = arith.constant 0 : index
    %c0_2 = arith.constant 0 : index
    %0 = vector.load %arg4[%c0, %c0_0, %c0_1, %c0_2] : memref<1x1x1x64xf32, #tpu.memory_space<vmem>>, vector<1x1x1x64xf32>
    %c0_3 = arith.constant 0 : index
    %c0_4 = arith.constant 0 : index
    %c0_5 = arith.constant 0 : index
    %c0_6 = arith.constant 0 : index
    %1 = vector.load %arg5[%c0_3, %c0_4, %c0_5, %c0_6] : memref<1x1x1x64xf32, #tpu.memory_space<vmem>>, vector<1x1x1x64xf32>
    %c0_7 = arith.constant 0 : index
    %c0_8 = arith.constant 0 : index
    %c0_9 = arith.constant 0 : index
    %c0_10 = arith.constant 0 : index
    %2 = vector.load %arg6[%c0_7, %c0_8, %c0_9, %c0_10] : memref<1x2x1x1xf32, #tpu.memory_space<vmem>>, vector<1x2x1x1xf32>
    %c0_11 = arith.constant 0 : index
    %c0_12 = arith.constant 0 : index
    %c0_13 = arith.constant 0 : index
    %c0_14 = arith.constant 0 : index
    %3 = vector.load %arg1[%c0_11, %c0_12, %c0_13, %c0_14] : memref<2x2x8x64xf32, #tpu.memory_space<vmem>>, vector<2x2x8x64xf32>
    %cst = arith.constant dense<0.000000e+00> : vector<2x2x8xf32>
    %4 = vector.multi_reduction <add>, %3, %cst [3] : vector<2x2x8x64xf32> to vector<2x2x8xf32>
    %5 = vector.shape_cast %4 : vector<2x2x8xf32> to vector<2x2x8x1xf32>
    %cst_15 = arith.constant 6.400000e+01 : f32
    %6 = vector.broadcast %cst_15 : f32 to vector<2x2x8x1xf32>
    %7 = arith.divf %5, %6 : vector<2x2x8x1xf32>
    %8 = vector.broadcast %7 : vector<2x2x8x1xf32> to vector<2x2x8x64xf32>
    %9 = arith.subf %3, %8 : vector<2x2x8x64xf32>
    %10 = arith.mulf %9, %9 : vector<2x2x8x64xf32>
    %cst_16 = arith.constant dense<0.000000e+00> : vector<2x2x8xf32>
    %11 = vector.multi_reduction <add>, %10, %cst_16 [3] : vector<2x2x8x64xf32> to vector<2x2x8xf32>
    %12 = vector.shape_cast %11 : vector<2x2x8xf32> to vector<2x2x8x1xf32>
    %cst_17 = arith.constant 6.400000e+01 : f32
    %13 = vector.broadcast %cst_17 : f32 to vector<2x2x8x1xf32>
    %14 = arith.divf %12, %13 : vector<2x2x8x1xf32>
    %15 = vector.broadcast %7 : vector<2x2x8x1xf32> to vector<2x2x8x64xf32>
    %16 = arith.subf %3, %15 : vector<2x2x8x64xf32>
    %cst_18 = arith.constant 9.99999974E-6 : f32
    %17 = vector.broadcast %cst_18 : f32 to vector<2x2x8x1xf32>
    %18 = arith.addf %14, %17 : vector<2x2x8x1xf32>
    %19 = math.rsqrt %18 : vector<2x2x8x1xf32>
    %20 = vector.broadcast %19 : vector<2x2x8x1xf32> to vector<2x2x8x64xf32>
    %21 = arith.mulf %16, %20 : vector<2x2x8x64xf32>
    %22 = vector.broadcast %0 : vector<1x1x1x64xf32> to vector<2x2x8x64xf32>
    %23 = arith.mulf %21, %22 : vector<2x2x8x64xf32>
    %24 = vector.broadcast %1 : vector<1x1x1x64xf32> to vector<2x2x8x64xf32>
    %25 = arith.addf %23, %24 : vector<2x2x8x64xf32>
    %26 = vector.broadcast %2 : vector<1x2x1x1xf32> to vector<2x2x8x64xf32>
    %27 = arith.mulf %25, %26 : vector<2x2x8x64xf32>
    %28 = arith.truncf %27 : vector<2x2x8x64xf32> to vector<2x2x8x64xbf16>
    %29 = vector.shape_cast %28 : vector<2x2x8x64xbf16> to vector<4x8x64xbf16>
    %c0_19 = arith.constant 0 : index
    %c0_20 = arith.constant 0 : index
    %c0_21 = arith.constant 0 : index
    %c0_22 = arith.constant 0 : index
    %30 = vector.load %arg2[%c0_19, %c0_20, %c0_21, %c0_22] : memref<2x2x8x64xf32, #tpu.memory_space<vmem>>, vector<2x2x8x64xf32>
    %cst_23 = arith.constant dense<0.000000e+00> : vector<2x2x8xf32>
    %31 = vector.multi_reduction <add>, %30, %cst_23 [3] : vector<2x2x8x64xf32> to vector<2x2x8xf32>
    %32 = vector.shape_cast %31 : vector<2x2x8xf32> to vector<2x2x8x1xf32>
    %cst_24 = arith.constant 6.400000e+01 : f32
    %33 = vector.broadcast %cst_24 : f32 to vector<2x2x8x1xf32>
    %34 = arith.divf %32, %33 : vector<2x2x8x1xf32>
    %35 = vector.broadcast %34 : vector<2x2x8x1xf32> to vector<2x2x8x64xf32>
    %36 = arith.subf %30, %35 : vector<2x2x8x64xf32>
    %37 = arith.mulf %36, %36 : vector<2x2x8x64xf32>
    %cst_25 = arith.constant dense<0.000000e+00> : vector<2x2x8xf32>
    %38 = vector.multi_reduction <add>, %37, %cst_25 [3] : vector<2x2x8x64xf32> to vector<2x2x8xf32>
    %39 = vector.shape_cast %38 : vector<2x2x8xf32> to vector<2x2x8x1xf32>
    %cst_26 = arith.constant 6.400000e+01 : f32
    %40 = vector.broadcast %cst_26 : f32 to vector<2x2x8x1xf32>
    %41 = arith.divf %39, %40 : vector<2x2x8x1xf32>
    %42 = vector.broadcast %34 : vector<2x2x8x1xf32> to vector<2x2x8x64xf32>
    %43 = arith.subf %30, %42 : vector<2x2x8x64xf32>
    %cst_27 = arith.constant 9.99999974E-6 : f32
    %44 = vector.broadcast %cst_27 : f32 to vector<2x2x8x1xf32>
    %45 = arith.addf %41, %44 : vector<2x2x8x1xf32>
    %46 = math.rsqrt %45 : vector<2x2x8x1xf32>
    %47 = vector.broadcast %46 : vector<2x2x8x1xf32> to vector<2x2x8x64xf32>
    %48 = arith.mulf %43, %47 : vector<2x2x8x64xf32>
    %49 = vector.broadcast %0 : vector<1x1x1x64xf32> to vector<2x2x8x64xf32>
    %50 = arith.mulf %48, %49 : vector<2x2x8x64xf32>
    %51 = vector.broadcast %1 : vector<1x1x1x64xf32> to vector<2x2x8x64xf32>
    %52 = arith.addf %50, %51 : vector<2x2x8x64xf32>
    %53 = vector.broadcast %2 : vector<1x2x1x1xf32> to vector<2x2x8x64xf32>
    %54 = arith.mulf %52, %53 : vector<2x2x8x64xf32>
    %55 = arith.truncf %54 : vector<2x2x8x64xf32> to vector<2x2x8x64xbf16>
    %56 = vector.shape_cast %55 : vector<2x2x8x64xbf16> to vector<4x8x64xbf16>
    %c0_28 = arith.constant 0 : index
    %c0_29 = arith.constant 0 : index
    %c0_30 = arith.constant 0 : index
    %c0_31 = arith.constant 0 : index
    %57 = vector.load %arg3[%c0_28, %c0_29, %c0_30, %c0_31] : memref<2x2x8x64xf32, #tpu.memory_space<vmem>>, vector<2x2x8x64xf32>
    %58 = arith.truncf %57 : vector<2x2x8x64xf32> to vector<2x2x8x64xbf16>
    %59 = vector.shape_cast %58 : vector<2x2x8x64xbf16> to vector<4x8x64xbf16>
    "tpu.trace_start"() <{level = 10 : i32, message = "bqd,bkd->bqk"}> : () -> ()
    %cst_32 = arith.constant dense<0.000000e+00> : vector<4x8x8xf32>
    %60 = tpu.matmul %29, %56, %cst_32 {dimension_numbers = #tpu.dot_dimension_numbers<[2], [2], [1], [1], [0, 0, 0, 1, 1, 1], [0], [0]>} : vector<4x8x64xbf16>, vector<4x8x64xbf16>, vector<4x8x8xf32> -> vector<4x8x8xf32>
    "tpu.trace_stop"() : () -> ()
    %cst_33 = arith.constant dense<0xFF800000> : vector<4x8xf32>
    %61 = vector.multi_reduction <maximumf>, %60, %cst_33 [2] : vector<4x8x8xf32> to vector<4x8xf32>
    %62 = vector.shape_cast %61 : vector<4x8xf32> to vector<4x8x1xf32>
    %63 = vector.broadcast %62 : vector<4x8x1xf32> to vector<4x8x8xf32>
    %64 = arith.subf %60, %63 : vector<4x8x8xf32>
    %65 = math.exp %64 : vector<4x8x8xf32>
    %cst_34 = arith.constant dense<0.000000e+00> : vector<4x8xf32>
    %66 = vector.multi_reduction <add>, %65, %cst_34 [2] : vector<4x8x8xf32> to vector<4x8xf32>
    %67 = vector.shape_cast %66 : vector<4x8xf32> to vector<4x8x1xf32>
    %68 = tpu.reciprocal %67 {approx = true} : vector<4x8x1xf32> -> vector<4x8x1xf32>
    %69 = vector.broadcast %68 : vector<4x8x1xf32> to vector<4x8x8xf32>
    %70 = arith.mulf %65, %69 : vector<4x8x8xf32>
    %71 = arith.truncf %70 : vector<4x8x8xf32> to vector<4x8x8xbf16>
    "tpu.trace_start"() <{level = 10 : i32, message = "bqk,bkd->bqd"}> : () -> ()
    %cst_35 = arith.constant dense<0.000000e+00> : vector<4x8x64xf32>
    %72 = tpu.matmul %71, %59, %cst_35 {dimension_numbers = #tpu.dot_dimension_numbers<[2], [1], [1], [2], [0, 0, 0, 1, 1, 2], [0], [0]>} : vector<4x8x8xbf16>, vector<4x8x64xbf16>, vector<4x8x64xf32> -> vector<4x8x64xf32>
    "tpu.trace_stop"() : () -> ()
    %73 = vector.shape_cast %72 : vector<4x8x64xf32> to vector<2x2x8x64xf32>
    %c0_36 = arith.constant 0 : index
    %c0_37 = arith.constant 0 : index
    %c0_38 = arith.constant 0 : index
    %c0_39 = arith.constant 0 : index
    %74 = vector.load %arg7[%c0_36, %c0_37, %c0_38, %c0_39] : memref<2x2x8x64xf32, #tpu.memory_space<vmem>>, vector<2x2x8x64xf32>
    tpu.vector_store %arg7[%c0_36, %c0_37, %c0_38, %c0_39], %73 {strides = array<i32>} : memref<2x2x8x64xf32, #tpu.memory_space<vmem>>, vector<2x2x8x64xf32>,
    return
  }
  func.func @transform_0(%arg0: i32) -> (i32, i32, i32, i32) {
    %c0_i32 = arith.constant 0 : i32
    %c0_i32_0 = arith.constant 0 : i32
    %c0_i32_1 = arith.constant 0 : i32
    %c0_i32_2 = arith.constant 0 : i32
    return %arg0, %c0_i32, %c0_i32_0, %c0_i32_1 : i32, i32, i32, i32
  }
  func.func @transform_1(%arg0: i32) -> (i32, i32, i32, i32) {
    %c0_i32 = arith.constant 0 : i32
    %c0_i32_0 = arith.constant 0 : i32
    %c0_i32_1 = arith.constant 0 : i32
    %c0_i32_2 = arith.constant 0 : i32
    return %arg0, %c0_i32, %c0_i32_0, %c0_i32_1 : i32, i32, i32, i32
  }
  func.func @transform_2(%arg0: i32) -> (i32, i32, i32, i32) {
    %c0_i32 = arith.constant 0 : i32
    %c0_i32_0 = arith.constant 0 : i32
    %c0_i32_1 = arith.constant 0 : i32
    %c0_i32_2 = arith.constant 0 : i32
    return %arg0, %c0_i32, %c0_i32_0, %c0_i32_1 : i32, i32, i32, i32
  }
  func.func @transform_3(%arg0: i32) -> (i32, i32, i32, i32) {
    %c0_i32 = arith.constant 0 : i32
    %c0_i32_0 = arith.constant 0 : i32
    %c0_i32_1 = arith.constant 0 : i32
    %c0_i32_2 = arith.constant 0 : i32
    %c0_i32_3 = arith.constant 0 : i32
    return %c0_i32, %c0_i32_0, %c0_i32_1, %c0_i32_2 : i32, i32, i32, i32
  }
  func.func @transform_4(%arg0: i32) -> (i32, i32, i32, i32) {
    %c0_i32 = arith.constant 0 : i32
    %c0_i32_0 = arith.constant 0 : i32
    %c0_i32_1 = arith.constant 0 : i32
    %c0_i32_2 = arith.constant 0 : i32
    %c0_i32_3 = arith.constant 0 : i32
    return %c0_i32, %c0_i32_0, %c0_i32_1, %c0_i32_2 : i32, i32, i32, i32
  }
  func.func @transform_5(%arg0: i32) -> (i32, i32, i32, i32) {
    %c0_i32 = arith.constant 0 : i32
    %c0_i32_0 = arith.constant 0 : i32
    %c0_i32_1 = arith.constant 0 : i32
    %c0_i32_2 = arith.constant 0 : i32
    %c0_i32_3 = arith.constant 0 : i32
    return %c0_i32, %c0_i32_0, %c0_i32_1, %c0_i32_2 : i32, i32, i32, i32
  }
  func.func @transform_6(%arg0: i32) -> (i32, i32, i32, i32) {
    %c0_i32 = arith.constant 0 : i32
    %c0_i32_0 = arith.constant 0 : i32
    %c0_i32_1 = arith.constant 0 : i32
    %c0_i32_2 = arith.constant 0 : i32
    return %arg0, %c0_i32, %c0_i32_0, %c0_i32_1 : i32, i32, i32, i32
  }
}

module attributes {stable_mosaic.version = 11 : i64} {
  func.func @_ln_qkv_kernel(%arg0: i32, %arg1: memref<16x128xf32, #tpu.memory_space<vmem>>, %arg2: memref<16x1xf32, #tpu.memory_space<vmem>>, %arg3: memref<16x1xf32, #tpu.memory_space<vmem>>, %arg4: memref<48x16xbf16, #tpu.memory_space<vmem>>, %arg5: memref<48x128xf32, #tpu.memory_space<vmem>>) attributes {dimension_semantics = [#tpu.dimension_semantics<parallel>], iteration_bounds = array<i64: 1>, scalar_prefetch = 0 : i64, scratch_operands = 0 : i64, tpu.core_type = #tpu.core_type<tc>, window_params = [{transform_indices = @transform_0, window_bounds = array<i64: 16, 128>}, {pipeline_mode = #tpu.pipeline_mode<synchronous>, transform_indices = @transform_1, window_bounds = array<i64: 16, 1>}, {pipeline_mode = #tpu.pipeline_mode<synchronous>, transform_indices = @transform_2, window_bounds = array<i64: 16, 1>}, {pipeline_mode = #tpu.pipeline_mode<synchronous>, transform_indices = @transform_3, window_bounds = array<i64: 48, 16>}, {transform_indices = @transform_4, window_bounds = array<i64: 48, 128>}]} {
    %c0 = arith.constant 0 : index
    %c0_0 = arith.constant 0 : index
    %0 = vector.load %arg1[%c0, %c0_0] : memref<16x128xf32, #tpu.memory_space<vmem>>, vector<16x128xf32>
    %c0_1 = arith.constant 0 : index
    %c0_2 = arith.constant 0 : index
    %1 = vector.load %arg2[%c0_1, %c0_2] : memref<16x1xf32, #tpu.memory_space<vmem>>, vector<16x1xf32>
    %c0_3 = arith.constant 0 : index
    %c0_4 = arith.constant 0 : index
    %2 = vector.load %arg3[%c0_3, %c0_4] : memref<16x1xf32, #tpu.memory_space<vmem>>, vector<16x1xf32>
    %cst = arith.constant dense<0.000000e+00> : vector<128xf32>
    %3 = vector.multi_reduction <add>, %0, %cst [0] : vector<16x128xf32> to vector<128xf32>
    %4 = vector.shape_cast %3 : vector<128xf32> to vector<1x128xf32>
    %cst_5 = arith.constant 1.600000e+01 : f32
    %5 = vector.broadcast %cst_5 : f32 to vector<1x128xf32>
    %6 = arith.divf %4, %5 : vector<1x128xf32>
    %7 = vector.broadcast %6 : vector<1x128xf32> to vector<16x128xf32>
    %8 = arith.subf %0, %7 : vector<16x128xf32>
    %9 = arith.mulf %8, %8 : vector<16x128xf32>
    %cst_6 = arith.constant dense<0.000000e+00> : vector<128xf32>
    %10 = vector.multi_reduction <add>, %9, %cst_6 [0] : vector<16x128xf32> to vector<128xf32>
    %11 = vector.shape_cast %10 : vector<128xf32> to vector<1x128xf32>
    %cst_7 = arith.constant 1.600000e+01 : f32
    %12 = vector.broadcast %cst_7 : f32 to vector<1x128xf32>
    %13 = arith.divf %11, %12 : vector<1x128xf32>
    %14 = vector.broadcast %6 : vector<1x128xf32> to vector<16x128xf32>
    %15 = arith.subf %0, %14 : vector<16x128xf32>
    %cst_8 = arith.constant 9.99999974E-6 : f32
    %16 = vector.broadcast %cst_8 : f32 to vector<1x128xf32>
    %17 = arith.addf %13, %16 : vector<1x128xf32>
    %18 = math.rsqrt %17 : vector<1x128xf32>
    %19 = vector.broadcast %18 : vector<1x128xf32> to vector<16x128xf32>
    %20 = arith.mulf %15, %19 : vector<16x128xf32>
    %21 = vector.broadcast %1 : vector<16x1xf32> to vector<16x128xf32>
    %22 = arith.mulf %20, %21 : vector<16x128xf32>
    %23 = vector.broadcast %2 : vector<16x1xf32> to vector<16x128xf32>
    %24 = arith.addf %22, %23 : vector<16x128xf32>
    %c0_9 = arith.constant 0 : index
    %c0_10 = arith.constant 0 : index
    %25 = vector.load %arg4[%c0_9, %c0_10] : memref<48x16xbf16, #tpu.memory_space<vmem>>, vector<48x16xbf16>
    %26 = arith.truncf %24 : vector<16x128xf32> to vector<16x128xbf16>
    %cst_11 = arith.constant dense<0.000000e+00> : vector<48x128xf32>
    %27 = tpu.matmul %25, %26, %cst_11 {dimension_numbers = #tpu.dot_dimension_numbers<[1], [0], [0], [1], [0, 0, 1, 1], [], []>} : vector<48x16xbf16>, vector<16x128xbf16>, vector<48x128xf32> -> vector<48x128xf32>
    %c0_12 = arith.constant 0 : index
    %c0_13 = arith.constant 0 : index
    %28 = vector.load %arg5[%c0_12, %c0_13] : memref<48x128xf32, #tpu.memory_space<vmem>>, vector<48x128xf32>
    tpu.vector_store %arg5[%c0_12, %c0_13], %27 {strides = array<i32>} : memref<48x128xf32, #tpu.memory_space<vmem>>, vector<48x128xf32>,
    return
  }
  func.func @transform_0(%arg0: i32) -> (i32, i32) {
    %c0_i32 = arith.constant 0 : i32
    %c0_i32_0 = arith.constant 0 : i32
    return %c0_i32, %arg0 : i32, i32
  }
  func.func @transform_1(%arg0: i32) -> (i32, i32) {
    %c0_i32 = arith.constant 0 : i32
    %c0_i32_0 = arith.constant 0 : i32
    %c0_i32_1 = arith.constant 0 : i32
    return %c0_i32, %c0_i32_0 : i32, i32
  }
  func.func @transform_2(%arg0: i32) -> (i32, i32) {
    %c0_i32 = arith.constant 0 : i32
    %c0_i32_0 = arith.constant 0 : i32
    %c0_i32_1 = arith.constant 0 : i32
    return %c0_i32, %c0_i32_0 : i32, i32
  }
  func.func @transform_3(%arg0: i32) -> (i32, i32) {
    %c0_i32 = arith.constant 0 : i32
    %c0_i32_0 = arith.constant 0 : i32
    %c0_i32_1 = arith.constant 0 : i32
    return %c0_i32, %c0_i32_0 : i32, i32
  }
  func.func @transform_4(%arg0: i32) -> (i32, i32) {
    %c0_i32 = arith.constant 0 : i32
    %c0_i32_0 = arith.constant 0 : i32
    return %c0_i32, %arg0 : i32, i32
  }
}

module attributes {stable_mosaic.version = 11 : i64} {
  func.func @_epilogue_kernel(%arg0: i32, %arg1: memref<16x128xf32, #tpu.memory_space<vmem>>, %arg2: memref<16x128xf32, #tpu.memory_space<vmem>>, %arg3: memref<16x16xbf16, #tpu.memory_space<vmem>>, %arg4: memref<16x1xf32, #tpu.memory_space<vmem>>, %arg5: memref<16x1xf32, #tpu.memory_space<vmem>>, %arg6: memref<16x1xf32, #tpu.memory_space<vmem>>, %arg7: memref<32x16xbf16, #tpu.memory_space<vmem>>, %arg8: memref<32x1xf32, #tpu.memory_space<vmem>>, %arg9: memref<16x32xbf16, #tpu.memory_space<vmem>>, %arg10: memref<16x1xf32, #tpu.memory_space<vmem>>, %arg11: memref<16x128xf32, #tpu.memory_space<vmem>>) attributes {dimension_semantics = [#tpu.dimension_semantics<parallel>], iteration_bounds = array<i64: 1>, scalar_prefetch = 0 : i64, scratch_operands = 0 : i64, tpu.core_type = #tpu.core_type<tc>, window_params = [{transform_indices = @transform_0, window_bounds = array<i64: 16, 128>}, {transform_indices = @transform_1, window_bounds = array<i64: 16, 128>}, {pipeline_mode = #tpu.pipeline_mode<synchronous>, transform_indices = @transform_2, window_bounds = array<i64: 16, 16>}, {pipeline_mode = #tpu.pipeline_mode<synchronous>, transform_indices = @transform_3, window_bounds = array<i64: 16, 1>}, {pipeline_mode = #tpu.pipeline_mode<synchronous>, transform_indices = @transform_4, window_bounds = array<i64: 16, 1>}, {pipeline_mode = #tpu.pipeline_mode<synchronous>, transform_indices = @transform_5, window_bounds = array<i64: 16, 1>}, {pipeline_mode = #tpu.pipeline_mode<synchronous>, transform_indices = @transform_6, window_bounds = array<i64: 32, 16>}, {pipeline_mode = #tpu.pipeline_mode<synchronous>, transform_indices = @transform_7, window_bounds = array<i64: 32, 1>}, {pipeline_mode = #tpu.pipeline_mode<synchronous>, transform_indices = @transform_8, window_bounds = array<i64: 16, 32>}, {pipeline_mode = #tpu.pipeline_mode<synchronous>, transform_indices = @transform_9, window_bounds = array<i64: 16, 1>}, {transform_indices = @transform_10, window_bounds = array<i64: 16, 128>}]} {
    %c0 = arith.constant 0 : index
    %c0_0 = arith.constant 0 : index
    %0 = vector.load %arg2[%c0, %c0_0] : memref<16x128xf32, #tpu.memory_space<vmem>>, vector<16x128xf32>
    %c0_1 = arith.constant 0 : index
    %c0_2 = arith.constant 0 : index
    %1 = vector.load %arg3[%c0_1, %c0_2] : memref<16x16xbf16, #tpu.memory_space<vmem>>, vector<16x16xbf16>
    %c0_3 = arith.constant 0 : index
    %c0_4 = arith.constant 0 : index
    %2 = vector.load %arg1[%c0_3, %c0_4] : memref<16x128xf32, #tpu.memory_space<vmem>>, vector<16x128xf32>
    %3 = arith.truncf %2 : vector<16x128xf32> to vector<16x128xbf16>
    %cst = arith.constant dense<0.000000e+00> : vector<16x128xf32>
    %4 = tpu.matmul %1, %3, %cst {dimension_numbers = #tpu.dot_dimension_numbers<[1], [0], [0], [1], [0, 0, 1, 1], [], []>} : vector<16x16xbf16>, vector<16x128xbf16>, vector<16x128xf32> -> vector<16x128xf32>
    %5 = arith.addf %0, %4 : vector<16x128xf32>
    %c0_5 = arith.constant 0 : index
    %c0_6 = arith.constant 0 : index
    %6 = vector.load %arg4[%c0_5, %c0_6] : memref<16x1xf32, #tpu.memory_space<vmem>>, vector<16x1xf32>
    %7 = vector.broadcast %6 : vector<16x1xf32> to vector<16x128xf32>
    %8 = arith.addf %5, %7 : vector<16x128xf32>
    %c0_7 = arith.constant 0 : index
    %c0_8 = arith.constant 0 : index
    %9 = vector.load %arg7[%c0_7, %c0_8] : memref<32x16xbf16, #tpu.memory_space<vmem>>, vector<32x16xbf16>
    %c0_9 = arith.constant 0 : index
    %c0_10 = arith.constant 0 : index
    %10 = vector.load %arg5[%c0_9, %c0_10] : memref<16x1xf32, #tpu.memory_space<vmem>>, vector<16x1xf32>
    %c0_11 = arith.constant 0 : index
    %c0_12 = arith.constant 0 : index
    %11 = vector.load %arg6[%c0_11, %c0_12] : memref<16x1xf32, #tpu.memory_space<vmem>>, vector<16x1xf32>
    %cst_13 = arith.constant dense<0.000000e+00> : vector<128xf32>
    %12 = vector.multi_reduction <add>, %8, %cst_13 [0] : vector<16x128xf32> to vector<128xf32>
    %13 = vector.shape_cast %12 : vector<128xf32> to vector<1x128xf32>
    %cst_14 = arith.constant 1.600000e+01 : f32
    %14 = vector.broadcast %cst_14 : f32 to vector<1x128xf32>
    %15 = arith.divf %13, %14 : vector<1x128xf32>
    %16 = vector.broadcast %15 : vector<1x128xf32> to vector<16x128xf32>
    %17 = arith.subf %8, %16 : vector<16x128xf32>
    %18 = arith.mulf %17, %17 : vector<16x128xf32>
    %cst_15 = arith.constant dense<0.000000e+00> : vector<128xf32>
    %19 = vector.multi_reduction <add>, %18, %cst_15 [0] : vector<16x128xf32> to vector<128xf32>
    %20 = vector.shape_cast %19 : vector<128xf32> to vector<1x128xf32>
    %cst_16 = arith.constant 1.600000e+01 : f32
    %21 = vector.broadcast %cst_16 : f32 to vector<1x128xf32>
    %22 = arith.divf %20, %21 : vector<1x128xf32>
    %23 = vector.broadcast %15 : vector<1x128xf32> to vector<16x128xf32>
    %24 = arith.subf %8, %23 : vector<16x128xf32>
    %cst_17 = arith.constant 9.99999974E-6 : f32
    %25 = vector.broadcast %cst_17 : f32 to vector<1x128xf32>
    %26 = arith.addf %22, %25 : vector<1x128xf32>
    %27 = math.rsqrt %26 : vector<1x128xf32>
    %28 = vector.broadcast %27 : vector<1x128xf32> to vector<16x128xf32>
    %29 = arith.mulf %24, %28 : vector<16x128xf32>
    %30 = vector.broadcast %10 : vector<16x1xf32> to vector<16x128xf32>
    %31 = arith.mulf %29, %30 : vector<16x128xf32>
    %32 = vector.broadcast %11 : vector<16x1xf32> to vector<16x128xf32>
    %33 = arith.addf %31, %32 : vector<16x128xf32>
    %34 = arith.truncf %33 : vector<16x128xf32> to vector<16x128xbf16>
    %cst_18 = arith.constant dense<0.000000e+00> : vector<32x128xf32>
    %35 = tpu.matmul %9, %34, %cst_18 {dimension_numbers = #tpu.dot_dimension_numbers<[1], [0], [0], [1], [0, 0, 1, 1], [], []>} : vector<32x16xbf16>, vector<16x128xbf16>, vector<32x128xf32> -> vector<32x128xf32>
    %c0_19 = arith.constant 0 : index
    %c0_20 = arith.constant 0 : index
    %36 = vector.load %arg8[%c0_19, %c0_20] : memref<32x1xf32, #tpu.memory_space<vmem>>, vector<32x1xf32>
    %37 = vector.broadcast %36 : vector<32x1xf32> to vector<32x128xf32>
    %38 = arith.addf %35, %37 : vector<32x128xf32>
    %cst_21 = arith.constant 0.636619746 : f32
    %39 = math.sqrt %cst_21 : f32
    %cst_22 = arith.constant 5.000000e-01 : f32
    %40 = vector.broadcast %cst_22 : f32 to vector<32x128xf32>
    %41 = arith.mulf %40, %38 : vector<32x128xf32>
    %cst_23 = arith.constant 4.471500e-02 : f32
    %42 = vector.broadcast %cst_23 : f32 to vector<32x128xf32>
    %43 = arith.mulf %42, %38 : vector<32x128xf32>
    %44 = arith.mulf %43, %38 : vector<32x128xf32>
    %45 = arith.mulf %44, %38 : vector<32x128xf32>
    %46 = arith.addf %38, %45 : vector<32x128xf32>
    %47 = vector.broadcast %39 : f32 to vector<32x128xf32>
    %48 = arith.mulf %47, %46 : vector<32x128xf32>
    %49 = math.tanh %48 : vector<32x128xf32>
    %cst_24 = arith.constant 1.000000e+00 : f32
    %50 = vector.broadcast %cst_24 : f32 to vector<32x128xf32>
    %51 = arith.addf %50, %49 : vector<32x128xf32>
    %52 = arith.mulf %41, %51 : vector<32x128xf32>
    %c0_25 = arith.constant 0 : index
    %c0_26 = arith.constant 0 : index
    %53 = vector.load %arg9[%c0_25, %c0_26] : memref<16x32xbf16, #tpu.memory_space<vmem>>, vector<16x32xbf16>
    %54 = arith.truncf %52 : vector<32x128xf32> to vector<32x128xbf16>
    %cst_27 = arith.constant dense<0.000000e+00> : vector<16x128xf32>
    %55 = tpu.matmul %53, %54, %cst_27 {dimension_numbers = #tpu.dot_dimension_numbers<[1], [0], [0], [1], [0, 0, 1, 1], [], []>} : vector<16x32xbf16>, vector<32x128xbf16>, vector<16x128xf32> -> vector<16x128xf32>
    %56 = arith.addf %8, %55 : vector<16x128xf32>
    %c0_28 = arith.constant 0 : index
    %c0_29 = arith.constant 0 : index
    %57 = vector.load %arg10[%c0_28, %c0_29] : memref<16x1xf32, #tpu.memory_space<vmem>>, vector<16x1xf32>
    %58 = vector.broadcast %57 : vector<16x1xf32> to vector<16x128xf32>
    %59 = arith.addf %56, %58 : vector<16x128xf32>
    %c0_30 = arith.constant 0 : index
    %c0_31 = arith.constant 0 : index
    %60 = vector.load %arg11[%c0_30, %c0_31] : memref<16x128xf32, #tpu.memory_space<vmem>>, vector<16x128xf32>
    tpu.vector_store %arg11[%c0_30, %c0_31], %59 {strides = array<i32>} : memref<16x128xf32, #tpu.memory_space<vmem>>, vector<16x128xf32>,
    return
  }
  func.func @transform_0(%arg0: i32) -> (i32, i32) {
    %c0_i32 = arith.constant 0 : i32
    %c0_i32_0 = arith.constant 0 : i32
    return %c0_i32, %arg0 : i32, i32
  }
  func.func @transform_1(%arg0: i32) -> (i32, i32) {
    %c0_i32 = arith.constant 0 : i32
    %c0_i32_0 = arith.constant 0 : i32
    return %c0_i32, %arg0 : i32, i32
  }
  func.func @transform_2(%arg0: i32) -> (i32, i32) {
    %c0_i32 = arith.constant 0 : i32
    %c0_i32_0 = arith.constant 0 : i32
    %c0_i32_1 = arith.constant 0 : i32
    return %c0_i32, %c0_i32_0 : i32, i32
  }
  func.func @transform_3(%arg0: i32) -> (i32, i32) {
    %c0_i32 = arith.constant 0 : i32
    %c0_i32_0 = arith.constant 0 : i32
    %c0_i32_1 = arith.constant 0 : i32
    return %c0_i32, %c0_i32_0 : i32, i32
  }
  func.func @transform_4(%arg0: i32) -> (i32, i32) {
    %c0_i32 = arith.constant 0 : i32
    %c0_i32_0 = arith.constant 0 : i32
    %c0_i32_1 = arith.constant 0 : i32
    return %c0_i32, %c0_i32_0 : i32, i32
  }
  func.func @transform_5(%arg0: i32) -> (i32, i32) {
    %c0_i32 = arith.constant 0 : i32
    %c0_i32_0 = arith.constant 0 : i32
    %c0_i32_1 = arith.constant 0 : i32
    return %c0_i32, %c0_i32_0 : i32, i32
  }
  func.func @transform_6(%arg0: i32) -> (i32, i32) {
    %c0_i32 = arith.constant 0 : i32
    %c0_i32_0 = arith.constant 0 : i32
    %c0_i32_1 = arith.constant 0 : i32
    return %c0_i32, %c0_i32_0 : i32, i32
  }
  func.func @transform_7(%arg0: i32) -> (i32, i32) {
    %c0_i32 = arith.constant 0 : i32
    %c0_i32_0 = arith.constant 0 : i32
    %c0_i32_1 = arith.constant 0 : i32
    return %c0_i32, %c0_i32_0 : i32, i32
  }
  func.func @transform_8(%arg0: i32) -> (i32, i32) {
    %c0_i32 = arith.constant 0 : i32
    %c0_i32_0 = arith.constant 0 : i32
    %c0_i32_1 = arith.constant 0 : i32
    return %c0_i32, %c0_i32_0 : i32, i32
  }
  func.func @transform_9(%arg0: i32) -> (i32, i32) {
    %c0_i32 = arith.constant 0 : i32
    %c0_i32_0 = arith.constant 0 : i32
    %c0_i32_1 = arith.constant 0 : i32
    return %c0_i32, %c0_i32_0 : i32, i32
  }
  func.func @transform_10(%arg0: i32) -> (i32, i32) {
    %c0_i32 = arith.constant 0 : i32
    %c0_i32_0 = arith.constant 0 : i32
    return %c0_i32, %arg0 : i32, i32
  }
}

module attributes {stable_mosaic.version = 11 : i64} {
  func.func @_epilogue_out_kernel(%arg0: i32, %arg1: memref<16x128xf32, #tpu.memory_space<vmem>>, %arg2: memref<16x128xf32, #tpu.memory_space<vmem>>, %arg3: memref<16x16xbf16, #tpu.memory_space<vmem>>, %arg4: memref<16x1xf32, #tpu.memory_space<vmem>>, %arg5: memref<16x1xf32, #tpu.memory_space<vmem>>, %arg6: memref<16x1xf32, #tpu.memory_space<vmem>>, %arg7: memref<32x16xbf16, #tpu.memory_space<vmem>>, %arg8: memref<32x1xf32, #tpu.memory_space<vmem>>, %arg9: memref<16x32xbf16, #tpu.memory_space<vmem>>, %arg10: memref<16x1xf32, #tpu.memory_space<vmem>>, %arg11: memref<1x16xbf16, #tpu.memory_space<vmem>>, %arg12: memref<1x1xf32, #tpu.memory_space<vmem>>, %arg13: memref<1x128xf32, #tpu.memory_space<vmem>>) attributes {dimension_semantics = [#tpu.dimension_semantics<parallel>], iteration_bounds = array<i64: 1>, scalar_prefetch = 0 : i64, scratch_operands = 0 : i64, tpu.core_type = #tpu.core_type<tc>, window_params = [{transform_indices = @transform_0, window_bounds = array<i64: 16, 128>}, {transform_indices = @transform_1, window_bounds = array<i64: 16, 128>}, {pipeline_mode = #tpu.pipeline_mode<synchronous>, transform_indices = @transform_2, window_bounds = array<i64: 16, 16>}, {pipeline_mode = #tpu.pipeline_mode<synchronous>, transform_indices = @transform_3, window_bounds = array<i64: 16, 1>}, {pipeline_mode = #tpu.pipeline_mode<synchronous>, transform_indices = @transform_4, window_bounds = array<i64: 16, 1>}, {pipeline_mode = #tpu.pipeline_mode<synchronous>, transform_indices = @transform_5, window_bounds = array<i64: 16, 1>}, {pipeline_mode = #tpu.pipeline_mode<synchronous>, transform_indices = @transform_6, window_bounds = array<i64: 32, 16>}, {pipeline_mode = #tpu.pipeline_mode<synchronous>, transform_indices = @transform_7, window_bounds = array<i64: 32, 1>}, {pipeline_mode = #tpu.pipeline_mode<synchronous>, transform_indices = @transform_8, window_bounds = array<i64: 16, 32>}, {pipeline_mode = #tpu.pipeline_mode<synchronous>, transform_indices = @transform_9, window_bounds = array<i64: 16, 1>}, {pipeline_mode = #tpu.pipeline_mode<synchronous>, transform_indices = @transform_10, window_bounds = array<i64: 1, 16>}, {pipeline_mode = #tpu.pipeline_mode<synchronous>, transform_indices = @transform_11, window_bounds = array<i64: 1, 1>}, {transform_indices = @transform_12, window_bounds = array<i64: 1, 128>}]} {
    %c0 = arith.constant 0 : index
    %c0_0 = arith.constant 0 : index
    %0 = vector.load %arg2[%c0, %c0_0] : memref<16x128xf32, #tpu.memory_space<vmem>>, vector<16x128xf32>
    %c0_1 = arith.constant 0 : index
    %c0_2 = arith.constant 0 : index
    %1 = vector.load %arg3[%c0_1, %c0_2] : memref<16x16xbf16, #tpu.memory_space<vmem>>, vector<16x16xbf16>
    %c0_3 = arith.constant 0 : index
    %c0_4 = arith.constant 0 : index
    %2 = vector.load %arg1[%c0_3, %c0_4] : memref<16x128xf32, #tpu.memory_space<vmem>>, vector<16x128xf32>
    %3 = arith.truncf %2 : vector<16x128xf32> to vector<16x128xbf16>
    %cst = arith.constant dense<0.000000e+00> : vector<16x128xf32>
    %4 = tpu.matmul %1, %3, %cst {dimension_numbers = #tpu.dot_dimension_numbers<[1], [0], [0], [1], [0, 0, 1, 1], [], []>} : vector<16x16xbf16>, vector<16x128xbf16>, vector<16x128xf32> -> vector<16x128xf32>
    %5 = arith.addf %0, %4 : vector<16x128xf32>
    %c0_5 = arith.constant 0 : index
    %c0_6 = arith.constant 0 : index
    %6 = vector.load %arg4[%c0_5, %c0_6] : memref<16x1xf32, #tpu.memory_space<vmem>>, vector<16x1xf32>
    %7 = vector.broadcast %6 : vector<16x1xf32> to vector<16x128xf32>
    %8 = arith.addf %5, %7 : vector<16x128xf32>
    %c0_7 = arith.constant 0 : index
    %c0_8 = arith.constant 0 : index
    %9 = vector.load %arg7[%c0_7, %c0_8] : memref<32x16xbf16, #tpu.memory_space<vmem>>, vector<32x16xbf16>
    %c0_9 = arith.constant 0 : index
    %c0_10 = arith.constant 0 : index
    %10 = vector.load %arg5[%c0_9, %c0_10] : memref<16x1xf32, #tpu.memory_space<vmem>>, vector<16x1xf32>
    %c0_11 = arith.constant 0 : index
    %c0_12 = arith.constant 0 : index
    %11 = vector.load %arg6[%c0_11, %c0_12] : memref<16x1xf32, #tpu.memory_space<vmem>>, vector<16x1xf32>
    %cst_13 = arith.constant dense<0.000000e+00> : vector<128xf32>
    %12 = vector.multi_reduction <add>, %8, %cst_13 [0] : vector<16x128xf32> to vector<128xf32>
    %13 = vector.shape_cast %12 : vector<128xf32> to vector<1x128xf32>
    %cst_14 = arith.constant 1.600000e+01 : f32
    %14 = vector.broadcast %cst_14 : f32 to vector<1x128xf32>
    %15 = arith.divf %13, %14 : vector<1x128xf32>
    %16 = vector.broadcast %15 : vector<1x128xf32> to vector<16x128xf32>
    %17 = arith.subf %8, %16 : vector<16x128xf32>
    %18 = arith.mulf %17, %17 : vector<16x128xf32>
    %cst_15 = arith.constant dense<0.000000e+00> : vector<128xf32>
    %19 = vector.multi_reduction <add>, %18, %cst_15 [0] : vector<16x128xf32> to vector<128xf32>
    %20 = vector.shape_cast %19 : vector<128xf32> to vector<1x128xf32>
    %cst_16 = arith.constant 1.600000e+01 : f32
    %21 = vector.broadcast %cst_16 : f32 to vector<1x128xf32>
    %22 = arith.divf %20, %21 : vector<1x128xf32>
    %23 = vector.broadcast %15 : vector<1x128xf32> to vector<16x128xf32>
    %24 = arith.subf %8, %23 : vector<16x128xf32>
    %cst_17 = arith.constant 9.99999974E-6 : f32
    %25 = vector.broadcast %cst_17 : f32 to vector<1x128xf32>
    %26 = arith.addf %22, %25 : vector<1x128xf32>
    %27 = math.rsqrt %26 : vector<1x128xf32>
    %28 = vector.broadcast %27 : vector<1x128xf32> to vector<16x128xf32>
    %29 = arith.mulf %24, %28 : vector<16x128xf32>
    %30 = vector.broadcast %10 : vector<16x1xf32> to vector<16x128xf32>
    %31 = arith.mulf %29, %30 : vector<16x128xf32>
    %32 = vector.broadcast %11 : vector<16x1xf32> to vector<16x128xf32>
    %33 = arith.addf %31, %32 : vector<16x128xf32>
    %34 = arith.truncf %33 : vector<16x128xf32> to vector<16x128xbf16>
    %cst_18 = arith.constant dense<0.000000e+00> : vector<32x128xf32>
    %35 = tpu.matmul %9, %34, %cst_18 {dimension_numbers = #tpu.dot_dimension_numbers<[1], [0], [0], [1], [0, 0, 1, 1], [], []>} : vector<32x16xbf16>, vector<16x128xbf16>, vector<32x128xf32> -> vector<32x128xf32>
    %c0_19 = arith.constant 0 : index
    %c0_20 = arith.constant 0 : index
    %36 = vector.load %arg8[%c0_19, %c0_20] : memref<32x1xf32, #tpu.memory_space<vmem>>, vector<32x1xf32>
    %37 = vector.broadcast %36 : vector<32x1xf32> to vector<32x128xf32>
    %38 = arith.addf %35, %37 : vector<32x128xf32>
    %cst_21 = arith.constant 0.636619746 : f32
    %39 = math.sqrt %cst_21 : f32
    %cst_22 = arith.constant 5.000000e-01 : f32
    %40 = vector.broadcast %cst_22 : f32 to vector<32x128xf32>
    %41 = arith.mulf %40, %38 : vector<32x128xf32>
    %cst_23 = arith.constant 4.471500e-02 : f32
    %42 = vector.broadcast %cst_23 : f32 to vector<32x128xf32>
    %43 = arith.mulf %42, %38 : vector<32x128xf32>
    %44 = arith.mulf %43, %38 : vector<32x128xf32>
    %45 = arith.mulf %44, %38 : vector<32x128xf32>
    %46 = arith.addf %38, %45 : vector<32x128xf32>
    %47 = vector.broadcast %39 : f32 to vector<32x128xf32>
    %48 = arith.mulf %47, %46 : vector<32x128xf32>
    %49 = math.tanh %48 : vector<32x128xf32>
    %cst_24 = arith.constant 1.000000e+00 : f32
    %50 = vector.broadcast %cst_24 : f32 to vector<32x128xf32>
    %51 = arith.addf %50, %49 : vector<32x128xf32>
    %52 = arith.mulf %41, %51 : vector<32x128xf32>
    %c0_25 = arith.constant 0 : index
    %c0_26 = arith.constant 0 : index
    %53 = vector.load %arg9[%c0_25, %c0_26] : memref<16x32xbf16, #tpu.memory_space<vmem>>, vector<16x32xbf16>
    %54 = arith.truncf %52 : vector<32x128xf32> to vector<32x128xbf16>
    %cst_27 = arith.constant dense<0.000000e+00> : vector<16x128xf32>
    %55 = tpu.matmul %53, %54, %cst_27 {dimension_numbers = #tpu.dot_dimension_numbers<[1], [0], [0], [1], [0, 0, 1, 1], [], []>} : vector<16x32xbf16>, vector<32x128xbf16>, vector<16x128xf32> -> vector<16x128xf32>
    %56 = arith.addf %8, %55 : vector<16x128xf32>
    %c0_28 = arith.constant 0 : index
    %c0_29 = arith.constant 0 : index
    %57 = vector.load %arg10[%c0_28, %c0_29] : memref<16x1xf32, #tpu.memory_space<vmem>>, vector<16x1xf32>
    %58 = vector.broadcast %57 : vector<16x1xf32> to vector<16x128xf32>
    %59 = arith.addf %56, %58 : vector<16x128xf32>
    %c0_30 = arith.constant 0 : index
    %c0_31 = arith.constant 0 : index
    %60 = vector.load %arg11[%c0_30, %c0_31] : memref<1x16xbf16, #tpu.memory_space<vmem>>, vector<1x16xbf16>
    %61 = arith.truncf %59 : vector<16x128xf32> to vector<16x128xbf16>
    %cst_32 = arith.constant dense<0.000000e+00> : vector<1x128xf32>
    %62 = tpu.matmul %60, %61, %cst_32 {dimension_numbers = #tpu.dot_dimension_numbers<[1], [0], [0], [1], [0, 0, 1, 1], [], []>} : vector<1x16xbf16>, vector<16x128xbf16>, vector<1x128xf32> -> vector<1x128xf32>
    %c0_33 = arith.constant 0 : index
    %c0_34 = arith.constant 0 : index
    %63 = vector.load %arg12[%c0_33, %c0_34] : memref<1x1xf32, #tpu.memory_space<vmem>>, vector<1x1xf32>
    %64 = vector.broadcast %63 : vector<1x1xf32> to vector<1x128xf32>
    %65 = arith.addf %62, %64 : vector<1x128xf32>
    %c0_35 = arith.constant 0 : index
    %c0_36 = arith.constant 0 : index
    %66 = vector.load %arg13[%c0_35, %c0_36] : memref<1x128xf32, #tpu.memory_space<vmem>>, vector<1x128xf32>
    tpu.vector_store %arg13[%c0_35, %c0_36], %65 {strides = array<i32>} : memref<1x128xf32, #tpu.memory_space<vmem>>, vector<1x128xf32>,
    return
  }
  func.func @transform_0(%arg0: i32) -> (i32, i32) {
    %c0_i32 = arith.constant 0 : i32
    %c0_i32_0 = arith.constant 0 : i32
    return %c0_i32, %arg0 : i32, i32
  }
  func.func @transform_1(%arg0: i32) -> (i32, i32) {
    %c0_i32 = arith.constant 0 : i32
    %c0_i32_0 = arith.constant 0 : i32
    return %c0_i32, %arg0 : i32, i32
  }
  func.func @transform_2(%arg0: i32) -> (i32, i32) {
    %c0_i32 = arith.constant 0 : i32
    %c0_i32_0 = arith.constant 0 : i32
    %c0_i32_1 = arith.constant 0 : i32
    return %c0_i32, %c0_i32_0 : i32, i32
  }
  func.func @transform_3(%arg0: i32) -> (i32, i32) {
    %c0_i32 = arith.constant 0 : i32
    %c0_i32_0 = arith.constant 0 : i32
    %c0_i32_1 = arith.constant 0 : i32
    return %c0_i32, %c0_i32_0 : i32, i32
  }
  func.func @transform_4(%arg0: i32) -> (i32, i32) {
    %c0_i32 = arith.constant 0 : i32
    %c0_i32_0 = arith.constant 0 : i32
    %c0_i32_1 = arith.constant 0 : i32
    return %c0_i32, %c0_i32_0 : i32, i32
  }
  func.func @transform_5(%arg0: i32) -> (i32, i32) {
    %c0_i32 = arith.constant 0 : i32
    %c0_i32_0 = arith.constant 0 : i32
    %c0_i32_1 = arith.constant 0 : i32
    return %c0_i32, %c0_i32_0 : i32, i32
  }
  func.func @transform_6(%arg0: i32) -> (i32, i32) {
    %c0_i32 = arith.constant 0 : i32
    %c0_i32_0 = arith.constant 0 : i32
    %c0_i32_1 = arith.constant 0 : i32
    return %c0_i32, %c0_i32_0 : i32, i32
  }
  func.func @transform_7(%arg0: i32) -> (i32, i32) {
    %c0_i32 = arith.constant 0 : i32
    %c0_i32_0 = arith.constant 0 : i32
    %c0_i32_1 = arith.constant 0 : i32
    return %c0_i32, %c0_i32_0 : i32, i32
  }
  func.func @transform_8(%arg0: i32) -> (i32, i32) {
    %c0_i32 = arith.constant 0 : i32
    %c0_i32_0 = arith.constant 0 : i32
    %c0_i32_1 = arith.constant 0 : i32
    return %c0_i32, %c0_i32_0 : i32, i32
  }
  func.func @transform_9(%arg0: i32) -> (i32, i32) {
    %c0_i32 = arith.constant 0 : i32
    %c0_i32_0 = arith.constant 0 : i32
    %c0_i32_1 = arith.constant 0 : i32
    return %c0_i32, %c0_i32_0 : i32, i32
  }
  func.func @transform_10(%arg0: i32) -> (i32, i32) {
    %c0_i32 = arith.constant 0 : i32
    %c0_i32_0 = arith.constant 0 : i32
    %c0_i32_1 = arith.constant 0 : i32
    return %c0_i32, %c0_i32_0 : i32, i32
  }
  func.func @transform_11(%arg0: i32) -> (i32, i32) {
    %c0_i32 = arith.constant 0 : i32
    %c0_i32_0 = arith.constant 0 : i32
    %c0_i32_1 = arith.constant 0 : i32
    return %c0_i32, %c0_i32_0 : i32, i32
  }
  func.func @transform_12(%arg0: i32) -> (i32, i32) {
    %c0_i32 = arith.constant 0 : i32
    %c0_i32_0 = arith.constant 0 : i32
    return %c0_i32, %arg0 : i32, i32
  }
}

</mosaic_0001>

<llo_original>
// kernel: squeeze.6
$region0: #{squeeze.6}
  %s0 = inlined_call_operand.vmem [shape: f32[1,2,2,8,8,8], index: 0, kind: input, shape index: {}]
  %s1 = inlined_call_operand.vmem [shape: f32[2,2,8,64], index: 1, kind: output, shape index: {}]
  %v2 = vld [vmem:[%s0] ss:$8 sm:$0xf]
  %v3 = vld [vmem:[%s0] ss:$8 sm:$0xf0]
  %vm4 = vcmask 1047556
  %v5 = vsel %vm4, %v3, %v2
  %vm6 = vcmask 64512
  %7 = vst.msk [vmem:[%s1] sm:$0xff] %vm6, %v5
  %s8 = scalar_lea.vmem %s0, 64
  %v9 = vld [vmem:[%s8] ss:$8 sm:$0xf]
  %s10 = scalar_lea.vmem %s0, 64
  %v11 = vld [vmem:[%s10] ss:$8 sm:$0xf0]
  %vm12 = vcmask 1047556
  %v13 = vsel %vm12, %v11, %v9
  %vm14 = vcmask 64512
  %s15 = scalar_lea.vmem %s1, 8
  %16 = vst.msk [vmem:[%s15] sm:$0xff] %vm14, %v13
  %s17 = scalar_lea.vmem %s0, 128
  %v18 = vld [vmem:[%s17] ss:$8 sm:$0xf]
  %s19 = scalar_lea.vmem %s0, 128
  %v20 = vld [vmem:[%s19] ss:$8 sm:$0xf0]
  %vm21 = vcmask 1047556
  %v22 = vsel %vm21, %v20, %v18
  %vm23 = vcmask 64512
  %s24 = scalar_lea.vmem %s1, 16
  %25 = vst.msk [vmem:[%s24] sm:$0xff] %vm23, %v22
  %s26 = scalar_lea.vmem %s0, 192
  %v27 = vld [vmem:[%s26] ss:$8 sm:$0xf]
  %s28 = scalar_lea.vmem %s0, 192
  %v29 = vld [vmem:[%s28] ss:$8 sm:$0xf0]
  %vm30 = vcmask 1047556
  %v31 = vsel %vm30, %v29, %v27
  %vm32 = vcmask 64512
  %s33 = scalar_lea.vmem %s1, 24
  %34 = vst.msk [vmem:[%s33] sm:$0xff] %vm32, %v31
  %s35 = scalar_lea.vmem %s0, 7
  %v36 = vld [vmem:[%s35] ss:$8 sm:$0xf]
  %s37 = scalar_lea.vmem %s0, 7
  %v38 = vld [vmem:[%s37] ss:$8 sm:$0xf0]
  %vm39 = vcmask 1047556
  %v40 = vsel %vm39, %v38, %v36
  %41 = vrot.lane.b32.xlu0 %v40, 56
  %v42 = vpop.permute.xlu0 %41
  %vm43 = vcmask 523712
  %44 = vst.msk [vmem:[%s1] sm:$0xff] %vm43, %v42
  %s45 = scalar_lea.vmem %s0, 71
  %v46 = vld [vmem:[%s45] ss:$8 sm:$0xf]
  %s47 = scalar_lea.vmem %s0, 71
  %v48 = vld [vmem:[%s47] ss:$8 sm:$0xf0]
  %vm49 = vcmask 1047556
  %v50 = vsel %vm49, %v48, %v46
  %51 = vrot.lane.b32.xlu0 %v50, 56
  %v52 = vpop.permute.xlu0 %51
  %vm53 = vcmask 523712
  %s54 = scalar_lea.vmem %s1, 8
  %55 = vst.msk [vmem:[%s54] sm:$0xff] %vm53, %v52
  %s56 = scalar_lea.vmem %s0, 135
  %v57 = vld [vmem:[%s56] ss:$8 sm:$0xf]
  %s58 = scalar_lea.vmem %s0, 135
  %v59 = vld [vmem:[%s58] ss:$8 sm:$0xf0]
  %vm60 = vcmask 1047556
  %v61 = vsel %vm60, %v59, %v57
  %62 = vrot.lane.b32.xlu0 %v61, 56
  %v63 = vpop.permute.xlu0 %62
  %vm64 = vcmask 523712
  %s65 = scalar_lea.vmem %s1, 16
  %66 = vst.msk [vmem:[%s65] sm:$0xff] %vm64, %v63
  %s67 = scalar_lea.vmem %s0, 199
  %v68 = vld [vmem:[%s67] ss:$8 sm:$0xf]
  %s69 = scalar_lea.vmem %s0, 199
  %v70 = vld [vmem:[%s69] ss:$8 sm:$0xf0]
  %vm71 = vcmask 1047556
  %v72 = vsel %vm71, %v70, %v68
  %73 = vrot.lane.b32.xlu0 %v72, 56
  %v74 = vpop.permute.xlu0 %73
  %vm75 = vcmask 523712
  %s76 = scalar_lea.vmem %s1, 24
  %77 = vst.msk [vmem:[%s76] sm:$0xff] %vm75, %v74
  %s78 = scalar_lea.vmem %s0, 6
  %v79 = vld [vmem:[%s78] ss:$8 sm:$0xf]
  %s80 = scalar_lea.vmem %s0, 6
  %v81 = vld [vmem:[%s80] ss:$8 sm:$0xf0]
  %vm82 = vcmask 1047556
  %v83 = vsel %vm82, %v81, %v79
  %84 = vrot.lane.b32.xlu0 %v83, 48
  %v85 = vpop.permute.xlu0 %84
  %vm86 = vcmask 458112
  %87 = vst.msk [vmem:[%s1] sm:$0xff] %vm86, %v85
  %s88 = scalar_lea.vmem %s0, 70
  %v89 = vld [vmem:[%s88] ss:$8 sm:$0xf]
  %s90 = scalar_lea.vmem %s0, 70
  %v91 = vld [vmem:[%s90] ss:$8 sm:$0xf0]
  %vm92 = vcmask 1047556
  %v93 = vsel %vm92, %v91, %v89
  %94 = vrot.lane.b32.xlu0 %v93, 48
  %v95 = vpop.permute.xlu0 %94
  %vm96 = vcmask 458112
  %s97 = scalar_lea.vmem %s1, 8
  %98 = vst.msk [vmem:[%s97] sm:$0xff] %vm96, %v95
  %s99 = scalar_lea.vmem %s0, 134
  %v100 = vld [vmem:[%s99] ss:$8 sm:$0xf]
  %s101 = scalar_lea.vmem %s0, 134
  %v102 = vld [vmem:[%s101] ss:$8 sm:$0xf0]
  %vm103 = vcmask 1047556
  %v104 = vsel %vm103, %v102, %v100
  %105 = vrot.lane.b32.xlu0 %v104, 48
  %v106 = vpop.permute.xlu0 %105
  %vm107 = vcmask 458112
  %s108 = scalar_lea.vmem %s1, 16
  %109 = vst.msk [vmem:[%s108] sm:$0xff] %vm107, %v106
  %s110 = scalar_lea.vmem %s0, 198
  %v111 = vld [vmem:[%s110] ss:$8 sm:$0xf]
  %s112 = scalar_lea.vmem %s0, 198
  %v113 = vld [vmem:[%s112] ss:$8 sm:$0xf0]
  %vm114 = vcmask 1047556
  %v115 = vsel %vm114, %v113, %v111
  %116 = vrot.lane.b32.xlu0 %v115, 48
  %v117 = vpop.permute.xlu0 %116
  %vm118 = vcmask 458112
  %s119 = scalar_lea.vmem %s1, 24
  %120 = vst.msk [vmem:[%s119] sm:$0xff] %vm118, %v117
  %s121 = scalar_lea.vmem %s0, 5
  %v122 = vld [vmem:[%s121] ss:$8 sm:$0xf]
  %s123 = scalar_lea.vmem %s0, 5
  %v124 = vld [vmem:[%s123] ss:$8 sm:$0xf0]
  %vm125 = vcmask 1047556
  %v126 = vsel %vm125, %v124, %v122
  %127 = vrot.lane.b32.xlu0 %v126, 40
  %v128 = vpop.permute.xlu0 %127
  %vm129 = vcmask 392512
  %130 = vst.msk [vmem:[%s1] sm:$0xff] %vm129, %v128
  %s131 = scalar_lea.vmem %s0, 69
  %v132 = vld [vmem:[%s131] ss:$8 sm:$0xf]
  %s133 = scalar_lea.vmem %s0, 69
  %v134 = vld [vmem:[%s133] ss:$8 sm:$0xf0]
  %vm135 = vcmask 1047556
  %v136 = vsel %vm135, %v134, %v132
  %137 = vrot.lane.b32.xlu0 %v136, 40
  %v138 = vpop.permute.xlu0 %137
  %vm139 = vcmask 392512
  %s140 = scalar_lea.vmem %s1, 8
  %141 = vst.msk [vmem:[%s140] sm:$0xff] %vm139, %v138
  %s142 = scalar_lea.vmem %s0, 133
  %v143 = vld [vmem:[%s142] ss:$8 sm:$0xf]
  %s144 = scalar_lea.vmem %s0, 133
  %v145 = vld [vmem:[%s144] ss:$8 sm:$0xf0]
  %vm146 = vcmask 1047556
  %v147 = vsel %vm146, %v145, %v143
  %148 = vrot.lane.b32.xlu0 %v147, 40
  %v149 = vpop.permute.xlu0 %148
  %vm150 = vcmask 392512
  %s151 = scalar_lea.vmem %s1, 16
  %152 = vst.msk [vmem:[%s151] sm:$0xff] %vm150, %v149
  %s153 = scalar_lea.vmem %s0, 197
  %v154 = vld [vmem:[%s153] ss:$8 sm:$0xf]
  %s155 = scalar_lea.vmem %s0, 197
  %v156 = vld [vmem:[%s155] ss:$8 sm:$0xf0]
  %vm157 = vcmask 1047556
  %v158 = vsel %vm157, %v156, %v154
  %159 = vrot.lane.b32.xlu0 %v158, 40
  %v160 = vpop.permute.xlu0 %159
  %vm161 = vcmask 392512
  %s162 = scalar_lea.vmem %s1, 24
  %163 = vst.msk [vmem:[%s162] sm:$0xff] %vm161, %v160
  %s164 = scalar_lea.vmem %s0, 4
  %v165 = vld [vmem:[%s164] ss:$8 sm:$0xf]
  %s166 = scalar_lea.vmem %s0, 4
  %v167 = vld [vmem:[%s166] ss:$8 sm:$0xf0]
  %vm168 = vcmask 1047556
  %v169 = vsel %vm168, %v167, %v165
  %170 = vrot.lane.b32.xlu0 %v169, 32
  %v171 = vpop.permute.xlu0 %170
  %vm172 = vcmask 326912
  %173 = vst.msk [vmem:[%s1] sm:$0xff] %vm172, %v171
  %s174 = scalar_lea.vmem %s0, 68
  %v175 = vld [vmem:[%s174] ss:$8 sm:$0xf]
  %s176 = scalar_lea.vmem %s0, 68
  %v177 = vld [vmem:[%s176] ss:$8 sm:$0xf0]
  %vm178 = vcmask 1047556
  %v179 = vsel %vm178, %v177, %v175
  %180 = vrot.lane.b32.xlu0 %v179, 32
  %v181 = vpop.permute.xlu0 %180
  %vm182 = vcmask 326912
  %s183 = scalar_lea.vmem %s1, 8
  %184 = vst.msk [vmem:[%s183] sm:$0xff] %vm182, %v181
  %s185 = scalar_lea.vmem %s0, 132
  %v186 = vld [vmem:[%s185] ss:$8 sm:$0xf]
  %s187 = scalar_lea.vmem %s0, 132
  %v188 = vld [vmem:[%s187] ss:$8 sm:$0xf0]
  %vm189 = vcmask 1047556
  %v190 = vsel %vm189, %v188, %v186
  %191 = vrot.lane.b32.xlu0 %v190, 32
  %v192 = vpop.permute.xlu0 %191
  %vm193 = vcmask 326912
  %s194 = scalar_lea.vmem %s1, 16
  %195 = vst.msk [vmem:[%s194] sm:$0xff] %vm193, %v192
  %s196 = scalar_lea.vmem %s0, 196
  %v197 = vld [vmem:[%s196] ss:$8 sm:$0xf]
  %s198 = scalar_lea.vmem %s0, 196
  %v199 = vld [vmem:[%s198] ss:$8 sm:$0xf0]
  %vm200 = vcmask 1047556
  %v201 = vsel %vm200, %v199, %v197
  %202 = vrot.lane.b32.xlu0 %v201, 32
  %v203 = vpop.permute.xlu0 %202
  %vm204 = vcmask 326912
  %s205 = scalar_lea.vmem %s1, 24
  %206 = vst.msk [vmem:[%s205] sm:$0xff] %vm204, %v203
  %s207 = scalar_lea.vmem %s0, 3
  %v208 = vld [vmem:[%s207] ss:$8 sm:$0xf]
  %s209 = scalar_lea.vmem %s0, 3
  %v210 = vld [vmem:[%s209] ss:$8 sm:$0xf0]
  %vm211 = vcmask 1047556
  %v212 = vsel %vm211, %v210, %v208
  %213 = vrot.lane.b32.xlu0 %v212, 24
  %v214 = vpop.permute.xlu0 %213
  %vm215 = vcmask 261312
  %216 = vst.msk [vmem:[%s1] sm:$0xff] %vm215, %v214
  %s217 = scalar_lea.vmem %s0, 67
  %v218 = vld [vmem:[%s217] ss:$8 sm:$0xf]
  %s219 = scalar_lea.vmem %s0, 67
  %v220 = vld [vmem:[%s219] ss:$8 sm:$0xf0]
  %vm221 = vcmask 1047556
  %v222 = vsel %vm221, %v220, %v218
  %223 = vrot.lane.b32.xlu0 %v222, 24
  %v224 = vpop.permute.xlu0 %223
  %vm225 = vcmask 261312
  %s226 = scalar_lea.vmem %s1, 8
  %227 = vst.msk [vmem:[%s226] sm:$0xff] %vm225, %v224
  %s228 = scalar_lea.vmem %s0, 131
  %v229 = vld [vmem:[%s228] ss:$8 sm:$0xf]
  %s230 = scalar_lea.vmem %s0, 131
  %v231 = vld [vmem:[%s230] ss:$8 sm:$0xf0]
  %vm232 = vcmask 1047556
  %v233 = vsel %vm232, %v231, %v229
  %234 = vrot.lane.b32.xlu0 %v233, 24
  %v235 = vpop.permute.xlu0 %234
  %vm236 = vcmask 261312
  %s237 = scalar_lea.vmem %s1, 16
  %238 = vst.msk [vmem:[%s237] sm:$0xff] %vm236, %v235
  %s239 = scalar_lea.vmem %s0, 195
  %v240 = vld [vmem:[%s239] ss:$8 sm:$0xf]
  %s241 = scalar_lea.vmem %s0, 195
  %v242 = vld [vmem:[%s241] ss:$8 sm:$0xf0]
  %vm243 = vcmask 1047556
  %v244 = vsel %vm243, %v242, %v240
  %245 = vrot.lane.b32.xlu0 %v244, 24
  %v246 = vpop.permute.xlu0 %245
  %vm247 = vcmask 261312
  %s248 = scalar_lea.vmem %s1, 24
  %249 = vst.msk [vmem:[%s248] sm:$0xff] %vm247, %v246
  %s250 = scalar_lea.vmem %s0, 2
  %v251 = vld [vmem:[%s250] ss:$8 sm:$0xf]
  %s252 = scalar_lea.vmem %s0, 2
  %v253 = vld [vmem:[%s252] ss:$8 sm:$0xf0]
  %vm254 = vcmask 1047556
  %v255 = vsel %vm254, %v253, %v251
  %256 = vrot.lane.b32.xlu0 %v255, 16
  %v257 = vpop.permute.xlu0 %256
  %vm258 = vcmask 195712
  %259 = vst.msk [vmem:[%s1] sm:$0xff] %vm258, %v257
  %s260 = scalar_lea.vmem %s0, 66
  %v261 = vld [vmem:[%s260] ss:$8 sm:$0xf]
  %s262 = scalar_lea.vmem %s0, 66
  %v263 = vld [vmem:[%s262] ss:$8 sm:$0xf0]
  %vm264 = vcmask 1047556
  %v265 = vsel %vm264, %v263, %v261
  %266 = vrot.lane.b32.xlu0 %v265, 16
  %v267 = vpop.permute.xlu0 %266
  %vm268 = vcmask 195712
  %s269 = scalar_lea.vmem %s1, 8
  %270 = vst.msk [vmem:[%s269] sm:$0xff] %vm268, %v267
  %s271 = scalar_lea.vmem %s0, 130
  %v272 = vld [vmem:[%s271] ss:$8 sm:$0xf]
  %s273 = scalar_lea.vmem %s0, 130
  %v274 = vld [vmem:[%s273] ss:$8 sm:$0xf0]
  %vm275 = vcmask 1047556
  %v276 = vsel %vm275, %v274, %v272
  %277 = vrot.lane.b32.xlu0 %v276, 16
  %v278 = vpop.permute.xlu0 %277
  %vm279 = vcmask 195712
  %s280 = scalar_lea.vmem %s1, 16
  %281 = vst.msk [vmem:[%s280] sm:$0xff] %vm279, %v278
  %s282 = scalar_lea.vmem %s0, 194
  %v283 = vld [vmem:[%s282] ss:$8 sm:$0xf]
  %s284 = scalar_lea.vmem %s0, 194
  %v285 = vld [vmem:[%s284] ss:$8 sm:$0xf0]
  %vm286 = vcmask 1047556
  %v287 = vsel %vm286, %v285, %v283
  %288 = vrot.lane.b32.xlu0 %v287, 16
  %v289 = vpop.permute.xlu0 %288
  %vm290 = vcmask 195712
  %s291 = scalar_lea.vmem %s1, 24
  %292 = vst.msk [vmem:[%s291] sm:$0xff] %vm290, %v289
  %s293 = scalar_lea.vmem %s0, 1
  %v294 = vld [vmem:[%s293] ss:$8 sm:$0xf]
  %s295 = scalar_lea.vmem %s0, 1
  %v296 = vld [vmem:[%s295] ss:$8 sm:$0xf0]
  %vm297 = vcmask 1047556
  %v298 = vsel %vm297, %v296, %v294
  %299 = vrot.lane.b32.xlu0 %v298, 8
  %v300 = vpop.permute.xlu0 %299
  %vm301 = vcmask 130112
  %302 = vst.msk [vmem:[%s1] sm:$0xff] %vm301, %v300
  %s303 = scalar_lea.vmem %s0, 65
  %v304 = vld [vmem:[%s303] ss:$8 sm:$0xf]
  %s305 = scalar_lea.vmem %s0, 65
  %v306 = vld [vmem:[%s305] ss:$8 sm:$0xf0]
  %vm307 = vcmask 1047556
  %v308 = vsel %vm307, %v306, %v304
  %309 = vrot.lane.b32.xlu0 %v308, 8
  %v310 = vpop.permute.xlu0 %309
  %vm311 = vcmask 130112
  %s312 = scalar_lea.vmem %s1, 8
  %313 = vst.msk [vmem:[%s312] sm:$0xff] %vm311, %v310
  %s314 = scalar_lea.vmem %s0, 129
  %v315 = vld [vmem:[%s314] ss:$8 sm:$0xf]
  %s316 = scalar_lea.vmem %s0, 129
  %v317 = vld [vmem:[%s316] ss:$8 sm:$0xf0]
  %vm318 = vcmask 1047556
  %v319 = vsel %vm318, %v317, %v315
  %320 = vrot.lane.b32.xlu0 %v319, 8
  %v321 = vpop.permute.xlu0 %320
  %vm322 = vcmask 130112
  %s323 = scalar_lea.vmem %s1, 16
  %324 = vst.msk [vmem:[%s323] sm:$0xff] %vm322, %v321
  %s325 = scalar_lea.vmem %s0, 193
  %v326 = vld [vmem:[%s325] ss:$8 sm:$0xf]
  %s327 = scalar_lea.vmem %s0, 193
  %v328 = vld [vmem:[%s327] ss:$8 sm:$0xf0]
  %vm329 = vcmask 1047556
  %v330 = vsel %vm329, %v328, %v326
  %331 = vrot.lane.b32.xlu0 %v330, 8
  %v332 = vpop.permute.xlu0 %331
  %vm333 = vcmask 130112
  %s334 = scalar_lea.vmem %s1, 24
  %335 = vst.msk [vmem:[%s334] sm:$0xff] %vm333, %v332

// kernel: stacked_transformer_forward.6
$region0: #{stacked_transformer_forward.6}
  #allocation0 [shape = 'u32[]', space=smem, size = 0x4, offset = 0x4, fixed_abs, tag = 'smem constant byte address 0x4 - core index']
  #allocation1 [shape = 'u32[144,128]{1,0:T(1,128)}', space=vmem, size = 0x12000, scoped, tag = 'internal scratch']
  %s0 = inlined_call_operand.vmem [shape: f32[4,128], index: 0, kind: input, shape index: {}]
  %s1 = inlined_call_operand.vmem [shape: bf16[16,4], index: 1, kind: input, shape index: {}]
  %s2 = inlined_call_operand.vmem [shape: f32[16,1], index: 2, kind: input, shape index: {}]
  %s3 = inlined_call_operand.vmem [shape: f32[16,1], index: 3, kind: input, shape index: {}]
  %s4 = inlined_call_operand.vmem [shape: f32[16,1], index: 4, kind: input, shape index: {}]
  %s5 = inlined_call_operand.vmem [shape: bf16[48,16], index: 5, kind: input, shape index: {}]
  %s6 = inlined_call_operand.vmem [shape: f32[16,128], index: 6, kind: output, shape index: {0}]
  %s7 = inlined_call_operand.vmem [shape: f32[48,128], index: 7, kind: output, shape index: {1}]
  %8 = xla_tuple %s6, %s7
  %s9 = sld [smem:[#allocation0]]
  $region42: #{stacked_transformer_forward.6} parent=0
    _
  %s11 = ssub.s32 1, %s9
  %s12 = scalar_select 0, %s11, %s9
  // Predicated region
  $region2: #{stacked_transformer_forward.6} parent=0 // pred_check
    _
  $region3: #{stacked_transformer_forward.6} parent=0 // pred_check_branch
    %14 = sbr.rel (0) target = $region5
  $region4: #{stacked_transformer_forward.6} parent=0 // pred_region
    _
  $region5: #{stacked_transformer_forward.6} parent=0 // pred_fallthru
    _
  // Predicated region
  $region6: #{stacked_transformer_forward.6} parent=0 // pred_check
    _
  $region7: #{stacked_transformer_forward.6} parent=0 // pred_check_branch
    %16 = sbr.rel (0) target = $region9
  $region8: #{stacked_transformer_forward.6} parent=0 // pred_region
    _
  $region9: #{stacked_transformer_forward.6} parent=0 // pred_fallthru
    _
  // Predicated region
  $region10: #{stacked_transformer_forward.6} parent=0 // pred_check
    _
  $region11: #{stacked_transformer_forward.6} parent=0 // pred_check_branch
    %18 = sbr.rel (0) target = $region13
  $region12: #{stacked_transformer_forward.6} parent=0 // pred_region
    _
  $region13: #{stacked_transformer_forward.6} parent=0 // pred_fallthru
    _
  // Predicated region
  $region14: #{stacked_transformer_forward.6} parent=0 // pred_check
    _
  $region15: #{stacked_transformer_forward.6} parent=0 // pred_check_branch
    %20 = sbr.rel (0) target = $region17
  $region16: #{stacked_transformer_forward.6} parent=0 // pred_region
    _
  $region17: #{stacked_transformer_forward.6} parent=0 // pred_fallthru
    _
  // Predicated region
  $region18: #{stacked_transformer_forward.6} parent=0 // pred_check
    _
  $region19: #{stacked_transformer_forward.6} parent=0 // pred_check_branch
    %22 = sbr.rel (0) target = $region21
  $region20: #{stacked_transformer_forward.6} parent=0 // pred_region
    _
  $region21: #{stacked_transformer_forward.6} parent=0 // pred_fallthru
    _
  // Predicated region
  $region22: #{stacked_transformer_forward.6} parent=0 // pred_check
    _
  $region23: #{stacked_transformer_forward.6} parent=0 // pred_check_branch
    %24 = sbr.rel (0) target = $region25
  $region24: #{stacked_transformer_forward.6} parent=0 // pred_region
    _
  $region25: #{stacked_transformer_forward.6} parent=0 // pred_fallthru
    _
  %v26 = vld [vmem:[%s1] sm:$0xf]
  %v27 = vld [vmem:[%s1 + $0x4] sm:$0xf]
  %v28 = vld [vmem:[%s0] sm:$0xf]
  %v29 = vpack.c.bf16 %v28, %v28
  %v30 = vld [vmem:[%s2] sm:$0xff]
  %v31 = vld [vmem:[%s2 + $0x8] sm:$0xff]
  %33 = vset.pattern.permute.xlu0 0
  %34 = vperm.xlu0 %33, %v30
  %v35 = vpop.permute.xlu0 %34
  %38 = vset.pattern.permute.xlu0 0
  %39 = vperm.xlu0 %38, %v31
  %v40 = vpop.permute.xlu0 %39
  %v44 = vunpack.c.l.b16 %v26
  %v45 = vunpack.c.l.b16 %v27
  %v46 = vpack.c.b16 %v45, %v44
  %vm47 = vcmask 31744
  %v49 = vsel %vm47, %v46, 0
  %vm51 = vcmask 1041408
  %v53 = vsel %vm51, %v29, 0
  %55 = vmatprep.subr.bf16.mxu0 0
  %56 = vmatpush1.bf16.msra.mxu0 %v53
  %57 = vmatprep.subr.bf16.mxu0 0
  %58 = vmatpush1.bf16.msra.mxu0 0
  %59 = vmatprep.subr.bf16.mxu0 0
  %60 = vmatpush1.bf16.msra.mxu0 0
  %61 = vmatprep.subr.bf16.mxu0 0
  %62 = vmatpush1.bf16.msra.mxu0 0
  %63 = vmatprep.subr.bf16.mxu0 0
  %64 = vmatpush1.bf16.msra.mxu0 0
  %65 = vmatprep.subr.bf16.mxu0 0
  %66 = vmatpush1.bf16.msra.mxu0 0
  %67 = vmatprep.subr.bf16.mxu0 0
  %68 = vmatpush1.bf16.msra.mxu0 0
  %69 = vmatprep.subr.bf16.mxu0 0
  %70 = vmatpush1.bf16.msra.mxu0 0
  %71 = vmatprep.subr.bf16.mxu0 0
  %72 = vmatpush1.bf16.msra.mxu0 0
  %73 = vmatprep.subr.bf16.mxu0 0
  %74 = vmatpush1.bf16.msra.mxu0 0
  %75 = vmatprep.subr.bf16.mxu0 0
  %76 = vmatpush1.bf16.msra.mxu0 0
  %77 = vmatprep.subr.bf16.mxu0 0
  %78 = vmatpush1.bf16.msra.mxu0 0
  %79 = vmatprep.subr.bf16.mxu0 0
  %80 = vmatpush1.bf16.msra.mxu0 0
  %81 = vmatprep.subr.bf16.mxu0 0
  %82 = vmatpush1.bf16.msra.mxu0 0
  %83 = vmatprep.subr.bf16.mxu0 0
  %84 = vmatpush1.bf16.msra.mxu0 0
  %85 = vmatprep.subr.bf16.mxu0 0
  %86 = vmatpush1.bf16.msra.mxu0 0
  %87 = vmatprep.mubr.bf16.mxu0 0
  %88 = vmatmul.mubr.bf16.gmra.mrb[0].mxu0 %v49
  %v89 = vpop.f32.mrb[0].mxu0
  %v90 = vadd.f32 %v35, %v89
  %v91 = vpop.f32.mrb[0].mxu0
  %v92 = vpop.f32.mrb[0].mxu0
  %v93 = vadd.f32 %v40, %v92
  %v94 = vpop.f32.mrb[0].mxu0
  %95 = vdwg.mxu0
  %96 = vst [vmem:[%s6] sm:$0xff] %v90
  %97 = vst [vmem:[%s6 + $0x8] sm:$0xff] %v93
  %v98 = vld [vmem:[%s3] sm:$0xff]
  %v99 = vld [vmem:[%s3 + $0x8] sm:$0xff]
  %v100 = vld [vmem:[%s4] sm:$0xff]
  %v101 = vld [vmem:[%s4 + $0x8] sm:$0xff]
  %v102 = vadd.f32 %v90, %v93
  %v103 = vrot.slane %v102, 4
  %v104 = vadd.f32 %v102, %v103
  %v105 = vrot.slane %v104, 2
  %v106 = vadd.f32 %v104, %v105
  %v107 = vrot.slane %v106, 1
  %v108 = vadd.f32 %v106, %v107
  %v109 = vrcp.pop 16.0
  %v110 = vmul.f32 %v108, %v109
  %v111 = vsub.f32 %v90, %v110
  %v112 = vsub.f32 %v93, %v110
  %v113 = vmul.f32 %v111, %v111
  %v114 = vmul.f32 %v112, %v112
  %v115 = vadd.f32 %v113, %v114
  %v116 = vrot.slane %v115, 4
  %v117 = vadd.f32 %v115, %v116
  %v118 = vrot.slane %v117, 2
  %v119 = vadd.f32 %v117, %v118
  %v120 = vrot.slane %v119, 1
  %v121 = vadd.f32 %v119, %v120
  %v122 = vmul.f32 %v121, %v109
  %v123 = vadd.f32 %v122, 1e-05
  %v124 = vrsqrt.pop %v123
  %v125 = vmul.f32 %v111, %v124
  %v126 = vmul.f32 %v112, %v124
  %128 = vset.pattern.permute.xlu0 0
  %129 = vperm.xlu0 %128, %v98
  %v130 = vpop.permute.xlu0 %129
  %133 = vset.pattern.permute.xlu0 0
  %134 = vperm.xlu0 %133, %v99
  %v135 = vpop.permute.xlu0 %134
  %v137 = vmul.f32 %v125, %v130
  %v138 = vmul.f32 %v126, %v135
  %140 = vset.pattern.permute.xlu0 0
  %141 = vperm.xlu0 %140, %v100
  %v142 = vpop.permute.xlu0 %141
  %145 = vset.pattern.permute.xlu0 0
  %146 = vperm.xlu0 %145, %v101
  %v147 = vpop.permute.xlu0 %146
  %v149 = vadd.f32 %v137, %v142
  %v150 = vadd.f32 %v138, %v147
  %v151 = vld [vmem:[%s5] sm:$0xf]
  %v152 = vld [vmem:[%s5 + $0x4] sm:$0xf]
  %v153 = vld [vmem:[%s5 + $0x8] sm:$0xf]
  %v154 = vld [vmem:[%s5 + $0xc] sm:$0xf]
  %v155 = vld [vmem:[%s5 + $0x10] sm:$0xf]
  %v156 = vld [vmem:[%s5 + $0x14] sm:$0xf]
  %v157 = vpack.c.bf16 %v150, %v149
  %v164 = vunpack.c.l.b16 %v151
  %v165 = vunpack.c.l.b16 %v152
  %v166 = vunpack.c.l.b16 %v153
  %v167 = vunpack.c.l.b16 %v154
  %v168 = vunpack.c.l.b16 %v155
  %v169 = vunpack.c.l.b16 %v156
  %v170 = vpack.c.b16 %v165, %v164
  %v171 = vpack.c.b16 %v167, %v166
  %v172 = vpack.c.b16 %v169, %v168
  %vm173 = vcmask 130048
  %v175 = vsel %vm173, %v170, 0
  %v178 = vsel %vm173, %v171, 0
  %v181 = vsel %vm173, %v172, 0
  %183 = vmatprep.subr.bf16.mxu0 0
  %184 = vmatpush1.bf16.msra.mxu0 %v157
  %185 = vmatprep.subr.bf16.mxu0 0
  %186 = vmatpush1.bf16.msra.mxu0 0
  %187 = vmatprep.subr.bf16.mxu0 0
  %188 = vmatpush1.bf16.msra.mxu0 0
  %189 = vmatprep.subr.bf16.mxu0 0
  %190 = vmatpush1.bf16.msra.mxu0 0
  %191 = vmatprep.subr.bf16.mxu0 0
  %192 = vmatpush1.bf16.msra.mxu0 0
  %193 = vmatprep.subr.bf16.mxu0 0
  %194 = vmatpush1.bf16.msra.mxu0 0
  %195 = vmatprep.subr.bf16.mxu0 0
  %196 = vmatpush1.bf16.msra.mxu0 0
  %197 = vmatprep.subr.bf16.mxu0 0
  %198 = vmatpush1.bf16.msra.mxu0 0
  %199 = vmatprep.subr.bf16.mxu0 0
  %200 = vmatpush1.bf16.msra.mxu0 0
  %201 = vmatprep.subr.bf16.mxu0 0
  %202 = vmatpush1.bf16.msra.mxu0 0
  %203 = vmatprep.subr.bf16.mxu0 0
  %204 = vmatpush1.bf16.msra.mxu0 0
  %205 = vmatprep.subr.bf16.mxu0 0
  %206 = vmatpush1.bf16.msra.mxu0 0
  %207 = vmatprep.subr.bf16.mxu0 0
  %208 = vmatpush1.bf16.msra.mxu0 0
  %209 = vmatprep.subr.bf16.mxu0 0
  %210 = vmatpush1.bf16.msra.mxu0 0
  %211 = vmatprep.subr.bf16.mxu0 0
  %212 = vmatpush1.bf16.msra.mxu0 0
  %213 = vmatprep.subr.bf16.mxu0 0
  %214 = vmatpush1.bf16.msra.mxu0 0
  %215 = vmatprep.mubr.bf16.mxu0 0
  %216 = vmatmul.mubr.bf16.gmra.mrb[0].mxu0 %v175
  %v217 = vpop.f32.mrb[0].mxu0
  %v218 = vadd.f32 0.0, %v217
  %v219 = vpop.f32.mrb[0].mxu0
  %v220 = vpop.f32.mrb[0].mxu0
  %v221 = vadd.f32 0.0, %v220
  %v222 = vpop.f32.mrb[0].mxu0
  %223 = vmatprep.mubr.bf16.mxu0 0
  %224 = vmatmul.mubr.bf16.gmra.mrb[0].mxu0 %v178
  %v225 = vpop.f32.mrb[0].mxu0
  %v226 = vadd.f32 0.0, %v225
  %v227 = vpop.f32.mrb[0].mxu0
  %v228 = vpop.f32.mrb[0].mxu0
  %v229 = vadd.f32 0.0, %v228
  %v230 = vpop.f32.mrb[0].mxu0
  %231 = vmatprep.mubr.bf16.mxu0 0
  %232 = vmatmul.mubr.bf16.gmra.mrb[0].mxu0 %v181
  %v233 = vpop.f32.mrb[0].mxu0
  %v234 = vadd.f32 0.0, %v233
  %v235 = vpop.f32.mrb[0].mxu0
  %v236 = vpop.f32.mrb[0].mxu0
  %v237 = vadd.f32 0.0, %v236
  %v238 = vpop.f32.mrb[0].mxu0
  %239 = vdwg.mxu0
  %240 = vst [vmem:[%s7] sm:$0xff] %v218
  %241 = vst [vmem:[%s7 + $0x8] sm:$0xff] %v221
  %242 = vst [vmem:[%s7 + $0x10] sm:$0xff] %v226
  %243 = vst [vmem:[%s7 + $0x18] sm:$0xff] %v229
  %244 = vst [vmem:[%s7 + $0x20] sm:$0xff] %v234
  %245 = vst [vmem:[%s7 + $0x28] sm:$0xff] %v237
  // Predicated region
  $region26: #{stacked_transformer_forward.6} parent=0 // pred_check
    _
  $region27: #{stacked_transformer_forward.6} parent=0 // pred_check_branch
    %247 = sbr.rel (0) target = $region29
  $region28: #{stacked_transformer_forward.6} parent=0 // pred_region
    _
  $region29: #{stacked_transformer_forward.6} parent=0 // pred_fallthru
    _
  // Predicated region
  $region30: #{stacked_transformer_forward.6} parent=0 // pred_check
    _
  $region31: #{stacked_transformer_forward.6} parent=0 // pred_check_branch
    %249 = sbr.rel (0) target = $region33
  $region32: #{stacked_transformer_forward.6} parent=0 // pred_region
    _
  $region33: #{stacked_transformer_forward.6} parent=0 // pred_fallthru
    _
  // Predicated region
  $region34: #{stacked_transformer_forward.6} parent=0 // pred_check
    _
  $region35: #{stacked_transformer_forward.6} parent=0 // pred_check_branch
    %251 = sbr.rel (0) target = $region37
  $region36: #{stacked_transformer_forward.6} parent=0 // pred_region
    _
  $region37: #{stacked_transformer_forward.6} parent=0 // pred_fallthru
    _
  // Predicated region
  $region38: #{stacked_transformer_forward.6} parent=0 // pred_check
    _
  $region39: #{stacked_transformer_forward.6} parent=0 // pred_check_branch
    %253 = sbr.rel (0) target = $region41
  $region40: #{stacked_transformer_forward.6} parent=0 // pred_region
    _
  $region41: #{stacked_transformer_forward.6} parent=0 // pred_fallthru
    _

// kernel: stacked_transformer_forward.7
$region0: #{stacked_transformer_forward.7}
  #allocation0 [shape = 'u32[]', space=smem, size = 0x4, offset = 0x4, fixed_abs, tag = 'smem constant byte address 0x4 - core index']
  #allocation1 [shape = 'u32[144,128]{1,0:T(1,128)}', space=vmem, size = 0x12000, scoped, tag = 'internal scratch']
  %s0 = inlined_call_operand.vmem [shape: f32[2,2,8,64], index: 0, kind: input, shape index: {}]
  %s1 = inlined_call_operand.vmem [shape: f32[2,2,8,64], index: 1, kind: input, shape index: {}]
  %s2 = inlined_call_operand.vmem [shape: f32[2,2,8,64], index: 2, kind: input, shape index: {}]
  %s3 = inlined_call_operand.vmem [shape: f32[1,1,1,64], index: 3, kind: input, shape index: {}]
  %s4 = inlined_call_operand.vmem [shape: f32[1,1,1,64], index: 4, kind: input, shape index: {}]
  %s5 = inlined_call_operand.vmem [shape: f32[1,2,1,1], index: 5, kind: input, shape index: {}]
  %s6 = inlined_call_operand.vmem [shape: f32[2,2,8,64], index: 6, kind: output, shape index: {}]
  %s7 = sld [smem:[#allocation0]]
  $region34: #{stacked_transformer_forward.7} parent=0
    _
  %s9 = ssub.s32 1, %s7
  %s10 = scalar_select 0, %s9, %s7
  // Predicated region
  $region2: #{stacked_transformer_forward.7} parent=0 // pred_check
    _
  $region3: #{stacked_transformer_forward.7} parent=0 // pred_check_branch
    %12 = sbr.rel (0) target = $region5
  $region4: #{stacked_transformer_forward.7} parent=0 // pred_region
    _
  $region5: #{stacked_transformer_forward.7} parent=0 // pred_fallthru
    _
  // Predicated region
  $region6: #{stacked_transformer_forward.7} parent=0 // pred_check
    _
  $region7: #{stacked_transformer_forward.7} parent=0 // pred_check_branch
    %14 = sbr.rel (0) target = $region9
  $region8: #{stacked_transformer_forward.7} parent=0 // pred_region
    _
  $region9: #{stacked_transformer_forward.7} parent=0 // pred_fallthru
    _
  // Predicated region
  $region10: #{stacked_transformer_forward.7} parent=0 // pred_check
    _
  $region11: #{stacked_transformer_forward.7} parent=0 // pred_check_branch
    %16 = sbr.rel (0) target = $region13
  $region12: #{stacked_transformer_forward.7} parent=0 // pred_region
    _
  $region13: #{stacked_transformer_forward.7} parent=0 // pred_fallthru
    _
  // Predicated region
  $region14: #{stacked_transformer_forward.7} parent=0 // pred_check
    _
  $region15: #{stacked_transformer_forward.7} parent=0 // pred_check_branch
    %18 = sbr.rel (0) target = $region17
  $region16: #{stacked_transformer_forward.7} parent=0 // pred_region
    _
  $region17: #{stacked_transformer_forward.7} parent=0 // pred_fallthru
    _
  // Predicated region
  $region18: #{stacked_transformer_forward.7} parent=0 // pred_check
    _
  $region19: #{stacked_transformer_forward.7} parent=0 // pred_check_branch
    %20 = sbr.rel (0) target = $region21
  $region20: #{stacked_transformer_forward.7} parent=0 // pred_region
    _
  $region21: #{stacked_transformer_forward.7} parent=0 // pred_fallthru
    _
  // Predicated region
  $region22: #{stacked_transformer_forward.7} parent=0 // pred_check
    _
  $region23: #{stacked_transformer_forward.7} parent=0 // pred_check_branch
    %22 = sbr.rel (0) target = $region25
  $region24: #{stacked_transformer_forward.7} parent=0 // pred_region
    _
  $region25: #{stacked_transformer_forward.7} parent=0 // pred_fallthru
    _
  %v24 = vld [vmem:[%s3] sm:$0x1]
  %v25 = vld [vmem:[%s4] sm:$0x1]
  %v26 = vld [vmem:[%s5] sm:$0x1]
  %v27 = vld [vmem:[%s5 + $0x1] sm:$0x1]
  %v28 = vld [vmem:[%s0] sm:$0xff]
  %v29 = vld [vmem:[%s0 + $0x8] sm:$0xff]
  %v30 = vld [vmem:[%s0 + $0x10] sm:$0xff]
  %v31 = vld [vmem:[%s0 + $0x18] sm:$0xff]
  %vm32 = vcmask 523264
  %v33 = vsel %vm32, %v28, 0.0
  %34 = vadd.xlane.f32.xlu0 %v33
  %v35 = vpop.xlane.xlu0 %34
  %v36 = vsel %vm32, %v29, 0.0
  %37 = vadd.xlane.f32.xlu0 %v36
  %v38 = vpop.xlane.xlu0 %37
  %v39 = vsel %vm32, %v30, 0.0
  %40 = vadd.xlane.f32.xlu0 %v39
  %v41 = vpop.xlane.xlu0 %40
  %v42 = vsel %vm32, %v31, 0.0
  %43 = vadd.xlane.f32.xlu0 %v42
  %v44 = vpop.xlane.xlu0 %43
  %v45 = vrcp.pop 64.0
  %v46 = vmul.f32 %v35, %v45
  %v47 = vmul.f32 %v38, %v45
  %v48 = vmul.f32 %v41, %v45
  %v49 = vmul.f32 %v44, %v45
  %v50 = vsub.f32 %v28, %v46
  %v51 = vsub.f32 %v29, %v47
  %v52 = vsub.f32 %v30, %v48
  %v53 = vsub.f32 %v31, %v49
  %v54 = vmul.f32 %v50, %v50
  %v55 = vmul.f32 %v51, %v51
  %v56 = vmul.f32 %v52, %v52
  %v57 = vmul.f32 %v53, %v53
  %v58 = vsel %vm32, %v54, 0.0
  %59 = vadd.xlane.f32.xlu0 %v58
  %v60 = vpop.xlane.xlu0 %59
  %v61 = vsel %vm32, %v55, 0.0
  %62 = vadd.xlane.f32.xlu0 %v61
  %v63 = vpop.xlane.xlu0 %62
  %v64 = vsel %vm32, %v56, 0.0
  %65 = vadd.xlane.f32.xlu0 %v64
  %v66 = vpop.xlane.xlu0 %65
  %v67 = vsel %vm32, %v57, 0.0
  %68 = vadd.xlane.f32.xlu0 %v67
  %v69 = vpop.xlane.xlu0 %68
  %v70 = vmul.f32 %v60, %v45
  %v71 = vmul.f32 %v63, %v45
  %v72 = vmul.f32 %v66, %v45
  %v73 = vmul.f32 %v69, %v45
  %v74 = vadd.f32 %v70, 1e-05
  %v75 = vadd.f32 %v71, 1e-05
  %v76 = vadd.f32 %v72, 1e-05
  %v77 = vadd.f32 %v73, 1e-05
  %v78 = vrsqrt.pop %v74
  %v79 = vrsqrt.pop %v75
  %v80 = vrsqrt.pop %v76
  %v81 = vrsqrt.pop %v77
  %v82 = vmul.f32 %v50, %v78
  %v83 = vmul.f32 %v51, %v79
  %v84 = vmul.f32 %v52, %v80
  %v85 = vmul.f32 %v53, %v81
  %v87 = vlaneseq
  %v88 = vshrl.u32 %v87, 7
  %v89 = vsub.s32 0, %v88
  %v90 = vrot.slane %v24, %v89
  %v92 = vmul.f32 %v82, %v90
  %v93 = vmul.f32 %v83, %v90
  %v94 = vmul.f32 %v84, %v90
  %v95 = vmul.f32 %v85, %v90
  %v97 = vlaneseq
  %v98 = vshrl.u32 %v97, 7
  %v99 = vsub.s32 0, %v98
  %v100 = vrot.slane %v25, %v99
  %v102 = vadd.f32 %v92, %v100
  %v103 = vadd.f32 %v93, %v100
  %v104 = vadd.f32 %v94, %v100
  %v105 = vadd.f32 %v95, %v100
  %v108 = vlaneseq
  %v109 = vshrl.u32 %v108, 7
  %v110 = vsub.s32 0, %v109
  %v111 = vrot.slane %v26, %v110
  %v112 = vlaneseq
  %v113 = vshrl.u32 %v112, 7
  %v114 = vsub.s32 0, %v113
  %v115 = vrot.slane %v27, %v114
  %116 = vset.pattern.permute.xlu0 0
  %117 = vperm.xlu0 %116, %v111
  %v118 = vpop.permute.xlu0 %117
  %120 = vset.pattern.permute.xlu0 0
  %121 = vperm.xlu0 %120, %v115
  %v122 = vpop.permute.xlu0 %121
  %v124 = vmul.f32 %v102, %v118
  %v125 = vmul.f32 %v103, %v122
  %v126 = vmul.f32 %v104, %v118
  %v127 = vmul.f32 %v105, %v122
  %v128 = vpack.c.bf16 %v124, %v124
  %v129 = vpack.c.bf16 %v125, %v125
  %v130 = vpack.c.bf16 %v126, %v126
  %v131 = vpack.c.bf16 %v127, %v127
  %v132 = vld [vmem:[%s1] sm:$0xff]
  %v133 = vld [vmem:[%s1 + $0x8] sm:$0xff]
  %v134 = vld [vmem:[%s1 + $0x10] sm:$0xff]
  %v135 = vld [vmem:[%s1 + $0x18] sm:$0xff]
  %v136 = vsel %vm32, %v132, 0.0
  %137 = vadd.xlane.f32.xlu0 %v136
  %v138 = vpop.xlane.xlu0 %137
  %v139 = vsel %vm32, %v133, 0.0
  %140 = vadd.xlane.f32.xlu0 %v139
  %v141 = vpop.xlane.xlu0 %140
  %v142 = vsel %vm32, %v134, 0.0
  %143 = vadd.xlane.f32.xlu0 %v142
  %v144 = vpop.xlane.xlu0 %143
  %v145 = vsel %vm32, %v135, 0.0
  %146 = vadd.xlane.f32.xlu0 %v145
  %v147 = vpop.xlane.xlu0 %146
  %v148 = vmul.f32 %v138, %v45
  %v149 = vmul.f32 %v141, %v45
  %v150 = vmul.f32 %v144, %v45
  %v151 = vmul.f32 %v147, %v45
  %v152 = vsub.f32 %v132, %v148
  %v153 = vsub.f32 %v133, %v149
  %v154 = vsub.f32 %v134, %v150
  %v155 = vsub.f32 %v135, %v151
  %v156 = vmul.f32 %v152, %v152
  %v157 = vmul.f32 %v153, %v153
  %v158 = vmul.f32 %v154, %v154
  %v159 = vmul.f32 %v155, %v155
  %v160 = vsel %vm32, %v156, 0.0
  %161 = vadd.xlane.f32.xlu0 %v160
  %v162 = vpop.xlane.xlu0 %161
  %v163 = vsel %vm32, %v157, 0.0
  %164 = vadd.xlane.f32.xlu0 %v163
  %v165 = vpop.xlane.xlu0 %164
  %v166 = vsel %vm32, %v158, 0.0
  %167 = vadd.xlane.f32.xlu0 %v166
  %v168 = vpop.xlane.xlu0 %167
  %v169 = vsel %vm32, %v159, 0.0
  %170 = vadd.xlane.f32.xlu0 %v169
  %v171 = vpop.xlane.xlu0 %170
  %v172 = vmul.f32 %v162, %v45
  %v173 = vmul.f32 %v165, %v45
  %v174 = vmul.f32 %v168, %v45
  %v175 = vmul.f32 %v171, %v45
  %v176 = vadd.f32 %v172, 1e-05
  %v177 = vadd.f32 %v173, 1e-05
  %v178 = vadd.f32 %v174, 1e-05
  %v179 = vadd.f32 %v175, 1e-05
  %v180 = vrsqrt.pop %v176
  %v181 = vrsqrt.pop %v177
  %v182 = vrsqrt.pop %v178
  %v183 = vrsqrt.pop %v179
  %v184 = vmul.f32 %v152, %v180
  %v185 = vmul.f32 %v153, %v181
  %v186 = vmul.f32 %v154, %v182
  %v187 = vmul.f32 %v155, %v183
  %v188 = vmul.f32 %v184, %v90
  %v189 = vmul.f32 %v185, %v90
  %v190 = vmul.f32 %v186, %v90
  %v191 = vmul.f32 %v187, %v90
  %v192 = vadd.f32 %v188, %v100
  %v193 = vadd.f32 %v189, %v100
  %v194 = vadd.f32 %v190, %v100
  %v195 = vadd.f32 %v191, %v100
  %v196 = vmul.f32 %v192, %v118
  %v197 = vmul.f32 %v193, %v122
  %v198 = vmul.f32 %v194, %v118
  %v199 = vmul.f32 %v195, %v122
  %v200 = vpack.c.bf16 %v196, %v196
  %v201 = vpack.c.bf16 %v197, %v197
  %v202 = vpack.c.bf16 %v198, %v198
  %v203 = vpack.c.bf16 %v199, %v199
  %v204 = vld [vmem:[%s2] sm:$0xff]
  %v205 = vld [vmem:[%s2 + $0x8] sm:$0xff]
  %v206 = vld [vmem:[%s2 + $0x10] sm:$0xff]
  %v207 = vld [vmem:[%s2 + $0x18] sm:$0xff]
  %v208 = vpack.c.bf16 %v204, %v204
  %v209 = vpack.c.bf16 %v205, %v205
  %v210 = vpack.c.bf16 %v206, %v206
  %v211 = vpack.c.bf16 %v207, %v207
  %v213 = vsel %vm32, %v128, 0
  %v216 = vsel %vm32, %v200, 0
  %218 = vmatprep.subr.bf16.mxu0 0
  %219 = vmatpush1.bf16.xpose.msra.mxu0 %v216
  %220 = vmatprep.subr.bf16.mxu0 0
  %221 = vmatpush1.bf16.xpose.msra.mxu0 0
  %222 = vmatprep.subr.bf16.mxu0 0
  %223 = vmatpush1.bf16.xpose.msra.mxu0 0
  %224 = vmatprep.subr.bf16.mxu0 0
  %225 = vmatpush1.bf16.xpose.msra.mxu0 0
  %226 = vmatprep.subr.bf16.mxu0 0
  %227 = vmatpush1.bf16.xpose.msra.mxu0 0
  %228 = vmatprep.subr.bf16.mxu0 0
  %229 = vmatpush1.bf16.xpose.msra.mxu0 0
  %230 = vmatprep.subr.bf16.mxu0 0
  %231 = vmatpush1.bf16.xpose.msra.mxu0 0
  %232 = vmatprep.subr.bf16.mxu0 0
  %233 = vmatpush1.bf16.xpose.msra.mxu0 0
  %234 = vmatprep.subr.bf16.mxu0 0
  %235 = vmatpush1.bf16.xpose.msra.mxu0 0
  %236 = vmatprep.subr.bf16.mxu0 0
  %237 = vmatpush1.bf16.xpose.msra.mxu0 0
  %238 = vmatprep.subr.bf16.mxu0 0
  %239 = vmatpush1.bf16.xpose.msra.mxu0 0
  %240 = vmatprep.subr.bf16.mxu0 0
  %241 = vmatpush1.bf16.xpose.msra.mxu0 0
  %242 = vmatprep.subr.bf16.mxu0 0
  %243 = vmatpush1.bf16.xpose.msra.mxu0 0
  %244 = vmatprep.subr.bf16.mxu0 0
  %245 = vmatpush1.bf16.xpose.msra.mxu0 0
  %246 = vmatprep.subr.bf16.mxu0 0
  %247 = vmatpush1.bf16.xpose.msra.mxu0 0
  %248 = vmatprep.subr.bf16.mxu0 0
  %249 = vmatpush1.bf16.xpose.msra.mxu0 0
  %250 = vmatprep.mubr.bf16.mxu0 0
  %251 = vmatmul.mubr.bf16.gmra.mrb[0].mxu0 %v213
  %v252 = vpop.f32.mrb[0].mxu0
  %v253 = vadd.f32 0.0, %v252
  %v254 = vpop.f32.mrb[0].mxu0
  %v255 = vpop.f32.mrb[0].mxu0
  %v256 = vpop.f32.mrb[0].mxu0
  %257 = vdwg.mxu0
  %v259 = vsel %vm32, %v129, 0
  %v262 = vsel %vm32, %v201, 0
  %264 = vmatprep.subr.bf16.mxu0 0
  %265 = vmatpush1.bf16.xpose.msra.mxu0 %v262
  %266 = vmatprep.subr.bf16.mxu0 0
  %267 = vmatpush1.bf16.xpose.msra.mxu0 0
  %268 = vmatprep.subr.bf16.mxu0 0
  %269 = vmatpush1.bf16.xpose.msra.mxu0 0
  %270 = vmatprep.subr.bf16.mxu0 0
  %271 = vmatpush1.bf16.xpose.msra.mxu0 0
  %272 = vmatprep.subr.bf16.mxu0 0
  %273 = vmatpush1.bf16.xpose.msra.mxu0 0
  %274 = vmatprep.subr.bf16.mxu0 0
  %275 = vmatpush1.bf16.xpose.msra.mxu0 0
  %276 = vmatprep.subr.bf16.mxu0 0
  %277 = vmatpush1.bf16.xpose.msra.mxu0 0
  %278 = vmatprep.subr.bf16.mxu0 0
  %279 = vmatpush1.bf16.xpose.msra.mxu0 0
  %280 = vmatprep.subr.bf16.mxu0 0
  %281 = vmatpush1.bf16.xpose.msra.mxu0 0
  %282 = vmatprep.subr.bf16.mxu0 0
  %283 = vmatpush1.bf16.xpose.msra.mxu0 0
  %284 = vmatprep.subr.bf16.mxu0 0
  %285 = vmatpush1.bf16.xpose.msra.mxu0 0
  %286 = vmatprep.subr.bf16.mxu0 0
  %287 = vmatpush1.bf16.xpose.msra.mxu0 0
  %288 = vmatprep.subr.bf16.mxu0 0
  %289 = vmatpush1.bf16.xpose.msra.mxu0 0
  %290 = vmatprep.subr.bf16.mxu0 0
  %291 = vmatpush1.bf16.xpose.msra.mxu0 0
  %292 = vmatprep.subr.bf16.mxu0 0
  %293 = vmatpush1.bf16.xpose.msra.mxu0 0
  %294 = vmatprep.subr.bf16.mxu0 0
  %295 = vmatpush1.bf16.xpose.msra.mxu0 0
  %296 = vmatprep.mubr.bf16.mxu0 0
  %297 = vmatmul.mubr.bf16.gmra.mrb[0].mxu0 %v259
  %v298 = vpop.f32.mrb[0].mxu0
  %v299 = vadd.f32 0.0, %v298
  %v300 = vpop.f32.mrb[0].mxu0
  %v301 = vpop.f32.mrb[0].mxu0
  %v302 = vpop.f32.mrb[0].mxu0
  %303 = vdwg.mxu0
  %v305 = vsel %vm32, %v130, 0
  %v308 = vsel %vm32, %v202, 0
  %310 = vmatprep.subr.bf16.mxu0 0
  %311 = vmatpush1.bf16.xpose.msra.mxu0 %v308
  %312 = vmatprep.subr.bf16.mxu0 0
  %313 = vmatpush1.bf16.xpose.msra.mxu0 0
  %314 = vmatprep.subr.bf16.mxu0 0
  %315 = vmatpush1.bf16.xpose.msra.mxu0 0
  %316 = vmatprep.subr.bf16.mxu0 0
  %317 = vmatpush1.bf16.xpose.msra.mxu0 0
  %318 = vmatprep.subr.bf16.mxu0 0
  %319 = vmatpush1.bf16.xpose.msra.mxu0 0
  %320 = vmatprep.subr.bf16.mxu0 0
  %321 = vmatpush1.bf16.xpose.msra.mxu0 0
  %322 = vmatprep.subr.bf16.mxu0 0
  %323 = vmatpush1.bf16.xpose.msra.mxu0 0
  %324 = vmatprep.subr.bf16.mxu0 0
  %325 = vmatpush1.bf16.xpose.msra.mxu0 0
  %326 = vmatprep.subr.bf16.mxu0 0
  %327 = vmatpush1.bf16.xpose.msra.mxu0 0
  %328 = vmatprep.subr.bf16.mxu0 0
  %329 = vmatpush1.bf16.xpose.msra.mxu0 0
  %330 = vmatprep.subr.bf16.mxu0 0
  %331 = vmatpush1.bf16.xpose.msra.mxu0 0
  %332 = vmatprep.subr.bf16.mxu0 0
  %333 = vmatpush1.bf16.xpose.msra.mxu0 0
  %334 = vmatprep.subr.bf16.mxu0 0
  %335 = vmatpush1.bf16.xpose.msra.mxu0 0
  %336 = vmatprep.subr.bf16.mxu0 0
  %337 = vmatpush1.bf16.xpose.msra.mxu0 0
  %338 = vmatprep.subr.bf16.mxu0 0
  %339 = vmatpush1.bf16.xpose.msra.mxu0 0
  %340 = vmatprep.subr.bf16.mxu0 0
  %341 = vmatpush1.bf16.xpose.msra.mxu0 0
  %342 = vmatprep.mubr.bf16.mxu0 0
  %343 = vmatmul.mubr.bf16.gmra.mrb[0].mxu0 %v305
  %v344 = vpop.f32.mrb[0].mxu0
  %v345 = vadd.f32 0.0, %v344
  %v346 = vpop.f32.mrb[0].mxu0
  %v347 = vpop.f32.mrb[0].mxu0
  %v348 = vpop.f32.mrb[0].mxu0
  %349 = vdwg.mxu0
  %v351 = vsel %vm32, %v131, 0
  %v354 = vsel %vm32, %v203, 0
  %356 = vmatprep.subr.bf16.mxu0 0
  %357 = vmatpush1.bf16.xpose.msra.mxu0 %v354
  %358 = vmatprep.subr.bf16.mxu0 0
  %359 = vmatpush1.bf16.xpose.msra.mxu0 0
  %360 = vmatprep.subr.bf16.mxu0 0
  %361 = vmatpush1.bf16.xpose.msra.mxu0 0
  %362 = vmatprep.subr.bf16.mxu0 0
  %363 = vmatpush1.bf16.xpose.msra.mxu0 0
  %364 = vmatprep.subr.bf16.mxu0 0
  %365 = vmatpush1.bf16.xpose.msra.mxu0 0
  %366 = vmatprep.subr.bf16.mxu0 0
  %367 = vmatpush1.bf16.xpose.msra.mxu0 0
  %368 = vmatprep.subr.bf16.mxu0 0
  %369 = vmatpush1.bf16.xpose.msra.mxu0 0
  %370 = vmatprep.subr.bf16.mxu0 0
  %371 = vmatpush1.bf16.xpose.msra.mxu0 0
  %372 = vmatprep.subr.bf16.mxu0 0
  %373 = vmatpush1.bf16.xpose.msra.mxu0 0
  %374 = vmatprep.subr.bf16.mxu0 0
  %375 = vmatpush1.bf16.xpose.msra.mxu0 0
  %376 = vmatprep.subr.bf16.mxu0 0
  %377 = vmatpush1.bf16.xpose.msra.mxu0 0
  %378 = vmatprep.subr.bf16.mxu0 0
  %379 = vmatpush1.bf16.xpose.msra.mxu0 0
  %380 = vmatprep.subr.bf16.mxu0 0
  %381 = vmatpush1.bf16.xpose.msra.mxu0 0
  %382 = vmatprep.subr.bf16.mxu0 0
  %383 = vmatpush1.bf16.xpose.msra.mxu0 0
  %384 = vmatprep.subr.bf16.mxu0 0
  %385 = vmatpush1.bf16.xpose.msra.mxu0 0
  %386 = vmatprep.subr.bf16.mxu0 0
  %387 = vmatpush1.bf16.xpose.msra.mxu0 0
  %388 = vmatprep.mubr.bf16.mxu0 0
  %389 = vmatmul.mubr.bf16.gmra.mrb[0].mxu0 %v351
  %v390 = vpop.f32.mrb[0].mxu0
  %v391 = vadd.f32 0.0, %v390
  %v392 = vpop.f32.mrb[0].mxu0
  %v393 = vpop.f32.mrb[0].mxu0
  %v394 = vpop.f32.mrb[0].mxu0
  %395 = vdwg.mxu0
  %vm396 = vcmask 64512
  %v397 = vsel %vm396, %v253, -inf
  %398 = vmax.xlane.f32.xlu0 %v397
  %v399 = vpop.xlane.xlu0 %398
  %v400 = vsel %vm396, %v299, -inf
  %401 = vmax.xlane.f32.xlu0 %v400
  %v402 = vpop.xlane.xlu0 %401
  %v403 = vsel %vm396, %v345, -inf
  %404 = vmax.xlane.f32.xlu0 %v403
  %v405 = vpop.xlane.xlu0 %404
  %v406 = vsel %vm396, %v391, -inf
  %407 = vmax.xlane.f32.xlu0 %v406
  %v408 = vpop.xlane.xlu0 %407
  %v409 = vsub.f32 %v253, %v399
  %v410 = vsub.f32 %v299, %v402
  %v411 = vsub.f32 %v345, %v405
  %v412 = vsub.f32 %v391, %v408
  %v413 = vmul.f32 %v409, 1.442695
  %v414 = vpow.pop %v413
  %v415 = vmul.f32 %v410, 1.442695
  %v416 = vpow.pop %v415
  %v417 = vmul.f32 %v411, 1.442695
  %v418 = vpow.pop %v417
  %v419 = vmul.f32 %v412, 1.442695
  %v420 = vpow.pop %v419
  %v421 = vsel %vm396, %v414, 0.0
  %422 = vadd.xlane.f32.xlu0 %v421
  %v423 = vpop.xlane.xlu0 %422
  %v424 = vsel %vm396, %v416, 0.0
  %425 = vadd.xlane.f32.xlu0 %v424
  %v426 = vpop.xlane.xlu0 %425
  %v427 = vsel %vm396, %v418, 0.0
  %428 = vadd.xlane.f32.xlu0 %v427
  %v429 = vpop.xlane.xlu0 %428
  %v430 = vsel %vm396, %v420, 0.0
  %431 = vadd.xlane.f32.xlu0 %v430
  %v432 = vpop.xlane.xlu0 %431
  %v433 = vrcp.pop %v423
  %v434 = vrcp.pop %v426
  %v435 = vrcp.pop %v429
  %v436 = vrcp.pop %v432
  %v437 = vmul.f32 %v414, %v433
  %v438 = vmul.f32 %v416, %v434
  %v439 = vmul.f32 %v418, %v435
  %v440 = vmul.f32 %v420, %v436
  %v441 = vpack.c.bf16 %v437, %v437
  %v442 = vpack.c.bf16 %v438, %v438
  %v443 = vpack.c.bf16 %v439, %v439
  %v444 = vpack.c.bf16 %v440, %v440
  %v446 = vsel %vm396, %v441, 0
  %vm448 = vcmask 1043456
  %v450 = vsel %vm448, %v208, 0
  %452 = vmatprep.subr.bf16.mxu0 0
  %453 = vmatpush1.bf16.msra.mxu0 %v450
  %454 = vmatprep.subr.bf16.mxu0 0
  %455 = vmatpush1.bf16.msra.mxu0 0
  %456 = vmatprep.subr.bf16.mxu0 0
  %457 = vmatpush1.bf16.msra.mxu0 0
  %458 = vmatprep.subr.bf16.mxu0 0
  %459 = vmatpush1.bf16.msra.mxu0 0
  %460 = vmatprep.subr.bf16.mxu0 0
  %461 = vmatpush1.bf16.msra.mxu0 0
  %462 = vmatprep.subr.bf16.mxu0 0
  %463 = vmatpush1.bf16.msra.mxu0 0
  %464 = vmatprep.subr.bf16.mxu0 0
  %465 = vmatpush1.bf16.msra.mxu0 0
  %466 = vmatprep.subr.bf16.mxu0 0
  %467 = vmatpush1.bf16.msra.mxu0 0
  %468 = vmatprep.subr.bf16.mxu0 0
  %469 = vmatpush1.bf16.msra.mxu0 0
  %470 = vmatprep.subr.bf16.mxu0 0
  %471 = vmatpush1.bf16.msra.mxu0 0
  %472 = vmatprep.subr.bf16.mxu0 0
  %473 = vmatpush1.bf16.msra.mxu0 0
  %474 = vmatprep.subr.bf16.mxu0 0
  %475 = vmatpush1.bf16.msra.mxu0 0
  %476 = vmatprep.subr.bf16.mxu0 0
  %477 = vmatpush1.bf16.msra.mxu0 0
  %478 = vmatprep.subr.bf16.mxu0 0
  %479 = vmatpush1.bf16.msra.mxu0 0
  %480 = vmatprep.subr.bf16.mxu0 0
  %481 = vmatpush1.bf16.msra.mxu0 0
  %482 = vmatprep.subr.bf16.mxu0 0
  %483 = vmatpush1.bf16.msra.mxu0 0
  %484 = vmatprep.mubr.bf16.mxu0 0
  %485 = vmatmul.mubr.bf16.gmra.mrb[0].mxu0 %v446
  %v486 = vpop.f32.mrb[0].mxu0
  %v487 = vadd.f32 0.0, %v486
  %v488 = vpop.f32.mrb[0].mxu0
  %v489 = vpop.f32.mrb[0].mxu0
  %v490 = vpop.f32.mrb[0].mxu0
  %491 = vdwg.mxu0
  %v493 = vsel %vm396, %v442, 0
  %v496 = vsel %vm448, %v209, 0
  %498 = vmatprep.subr.bf16.mxu0 0
  %499 = vmatpush1.bf16.msra.mxu0 %v496
  %500 = vmatprep.subr.bf16.mxu0 0
  %501 = vmatpush1.bf16.msra.mxu0 0
  %502 = vmatprep.subr.bf16.mxu0 0
  %503 = vmatpush1.bf16.msra.mxu0 0
  %504 = vmatprep.subr.bf16.mxu0 0
  %505 = vmatpush1.bf16.msra.mxu0 0
  %506 = vmatprep.subr.bf16.mxu0 0
  %507 = vmatpush1.bf16.msra.mxu0 0
  %508 = vmatprep.subr.bf16.mxu0 0
  %509 = vmatpush1.bf16.msra.mxu0 0
  %510 = vmatprep.subr.bf16.mxu0 0
  %511 = vmatpush1.bf16.msra.mxu0 0
  %512 = vmatprep.subr.bf16.mxu0 0
  %513 = vmatpush1.bf16.msra.mxu0 0
  %514 = vmatprep.subr.bf16.mxu0 0
  %515 = vmatpush1.bf16.msra.mxu0 0
  %516 = vmatprep.subr.bf16.mxu0 0
  %517 = vmatpush1.bf16.msra.mxu0 0
  %518 = vmatprep.subr.bf16.mxu0 0
  %519 = vmatpush1.bf16.msra.mxu0 0
  %520 = vmatprep.subr.bf16.mxu0 0
  %521 = vmatpush1.bf16.msra.mxu0 0
  %522 = vmatprep.subr.bf16.mxu0 0
  %523 = vmatpush1.bf16.msra.mxu0 0
  %524 = vmatprep.subr.bf16.mxu0 0
  %525 = vmatpush1.bf16.msra.mxu0 0
  %526 = vmatprep.subr.bf16.mxu0 0
  %527 = vmatpush1.bf16.msra.mxu0 0
  %528 = vmatprep.subr.bf16.mxu0 0
  %529 = vmatpush1.bf16.msra.mxu0 0
  %530 = vmatprep.mubr.bf16.mxu0 0
  %531 = vmatmul.mubr.bf16.gmra.mrb[0].mxu0 %v493
  %v532 = vpop.f32.mrb[0].mxu0
  %v533 = vadd.f32 0.0, %v532
  %v534 = vpop.f32.mrb[0].mxu0
  %v535 = vpop.f32.mrb[0].mxu0
  %v536 = vpop.f32.mrb[0].mxu0
  %537 = vdwg.mxu0
  %v539 = vsel %vm396, %v443, 0
  %v542 = vsel %vm448, %v210, 0
  %544 = vmatprep.subr.bf16.mxu0 0
  %545 = vmatpush1.bf16.msra.mxu0 %v542
  %546 = vmatprep.subr.bf16.mxu0 0
  %547 = vmatpush1.bf16.msra.mxu0 0
  %548 = vmatprep.subr.bf16.mxu0 0
  %549 = vmatpush1.bf16.msra.mxu0 0
  %550 = vmatprep.subr.bf16.mxu0 0
  %551 = vmatpush1.bf16.msra.mxu0 0
  %552 = vmatprep.subr.bf16.mxu0 0
  %553 = vmatpush1.bf16.msra.mxu0 0
  %554 = vmatprep.subr.bf16.mxu0 0
  %555 = vmatpush1.bf16.msra.mxu0 0
  %556 = vmatprep.subr.bf16.mxu0 0
  %557 = vmatpush1.bf16.msra.mxu0 0
  %558 = vmatprep.subr.bf16.mxu0 0
  %559 = vmatpush1.bf16.msra.mxu0 0
  %560 = vmatprep.subr.bf16.mxu0 0
  %561 = vmatpush1.bf16.msra.mxu0 0
  %562 = vmatprep.subr.bf16.mxu0 0
  %563 = vmatpush1.bf16.msra.mxu0 0
  %564 = vmatprep.subr.bf16.mxu0 0
  %565 = vmatpush1.bf16.msra.mxu0 0
  %566 = vmatprep.subr.bf16.mxu0 0
  %567 = vmatpush1.bf16.msra.mxu0 0
  %568 = vmatprep.subr.bf16.mxu0 0
  %569 = vmatpush1.bf16.msra.mxu0 0
  %570 = vmatprep.subr.bf16.mxu0 0
  %571 = vmatpush1.bf16.msra.mxu0 0
  %572 = vmatprep.subr.bf16.mxu0 0
  %573 = vmatpush1.bf16.msra.mxu0 0
  %574 = vmatprep.subr.bf16.mxu0 0
  %575 = vmatpush1.bf16.msra.mxu0 0
  %576 = vmatprep.mubr.bf16.mxu0 0
  %577 = vmatmul.mubr.bf16.gmra.mrb[0].mxu0 %v539
  %v578 = vpop.f32.mrb[0].mxu0
  %v579 = vadd.f32 0.0, %v578
  %v580 = vpop.f32.mrb[0].mxu0
  %v581 = vpop.f32.mrb[0].mxu0
  %v582 = vpop.f32.mrb[0].mxu0
  %583 = vdwg.mxu0
  %v585 = vsel %vm396, %v444, 0
  %v588 = vsel %vm448, %v211, 0
  %590 = vmatprep.subr.bf16.mxu0 0
  %591 = vmatpush1.bf16.msra.mxu0 %v588
  %592 = vmatprep.subr.bf16.mxu0 0
  %593 = vmatpush1.bf16.msra.mxu0 0
  %594 = vmatprep.subr.bf16.mxu0 0
  %595 = vmatpush1.bf16.msra.mxu0 0
  %596 = vmatprep.subr.bf16.mxu0 0
  %597 = vmatpush1.bf16.msra.mxu0 0
  %598 = vmatprep.subr.bf16.mxu0 0
  %599 = vmatpush1.bf16.msra.mxu0 0
  %600 = vmatprep.subr.bf16.mxu0 0
  %601 = vmatpush1.bf16.msra.mxu0 0
  %602 = vmatprep.subr.bf16.mxu0 0
  %603 = vmatpush1.bf16.msra.mxu0 0
  %604 = vmatprep.subr.bf16.mxu0 0
  %605 = vmatpush1.bf16.msra.mxu0 0
  %606 = vmatprep.subr.bf16.mxu0 0
  %607 = vmatpush1.bf16.msra.mxu0 0
  %608 = vmatprep.subr.bf16.mxu0 0
  %609 = vmatpush1.bf16.msra.mxu0 0
  %610 = vmatprep.subr.bf16.mxu0 0
  %611 = vmatpush1.bf16.msra.mxu0 0
  %612 = vmatprep.subr.bf16.mxu0 0
  %613 = vmatpush1.bf16.msra.mxu0 0
  %614 = vmatprep.subr.bf16.mxu0 0
  %615 = vmatpush1.bf16.msra.mxu0 0
  %616 = vmatprep.subr.bf16.mxu0 0
  %617 = vmatpush1.bf16.msra.mxu0 0
  %618 = vmatprep.subr.bf16.mxu0 0
  %619 = vmatpush1.bf16.msra.mxu0 0
  %620 = vmatprep.subr.bf16.mxu0 0
  %621 = vmatpush1.bf16.msra.mxu0 0
  %622 = vmatprep.mubr.bf16.mxu0 0
  %623 = vmatmul.mubr.bf16.gmra.mrb[0].mxu0 %v585
  %v624 = vpop.f32.mrb[0].mxu0
  %v625 = vadd.f32 0.0, %v624
  %v626 = vpop.f32.mrb[0].mxu0
  %v627 = vpop.f32.mrb[0].mxu0
  %v628 = vpop.f32.mrb[0].mxu0
  %629 = vdwg.mxu0
  %630 = vst.msk [vmem:[%s6] sm:$0xff] %vm32, %v487
  %631 = vst.msk [vmem:[%s6 + $0x8] sm:$0xff] %vm32, %v533
  %632 = vst.msk [vmem:[%s6 + $0x10] sm:$0xff] %vm32, %v579
  %633 = vst.msk [vmem:[%s6 + $0x18] sm:$0xff] %vm32, %v625
  // Predicated region
  $region26: #{stacked_transformer_forward.7} parent=0 // pred_check
    _
  $region27: #{stacked_transformer_forward.7} parent=0 // pred_check_branch
    %635 = sbr.rel (0) target = $region29
  $region28: #{stacked_transformer_forward.7} parent=0 // pred_region
    _
  $region29: #{stacked_transformer_forward.7} parent=0 // pred_fallthru
    _
  // Predicated region
  $region30: #{stacked_transformer_forward.7} parent=0 // pred_check
    _
  $region31: #{stacked_transformer_forward.7} parent=0 // pred_check_branch
    %637 = sbr.rel (0) target = $region33
  $region32: #{stacked_transformer_forward.7} parent=0 // pred_region
    _
  $region33: #{stacked_transformer_forward.7} parent=0 // pred_fallthru
    _

// kernel: stacked_transformer_forward.9
$region0: #{stacked_transformer_forward.9}
  #allocation0 [shape = 'u32[]', space=smem, size = 0x4, offset = 0x4, fixed_abs, tag = 'smem constant byte address 0x4 - core index']
  #allocation1 [shape = 'u32[144,128]{1,0:T(1,128)}', space=vmem, size = 0x12000, scoped, tag = 'internal scratch']
  %s0 = inlined_call_operand.vmem [shape: f32[16,128], index: 0, kind: input, shape index: {}]
  %s1 = inlined_call_operand.vmem [shape: f32[16,1], index: 1, kind: input, shape index: {}]
  %s2 = inlined_call_operand.vmem [shape: f32[16,1], index: 2, kind: input, shape index: {}]
  %s3 = inlined_call_operand.vmem [shape: bf16[48,16], index: 3, kind: input, shape index: {}]
  %s4 = inlined_call_operand.vmem [shape: f32[48,128], index: 4, kind: output, shape index: {}]
  %s5 = sld [smem:[#allocation0]]
  $region26: #{stacked_transformer_forward.9} parent=0
    _
  %s7 = ssub.s32 1, %s5
  %s8 = scalar_select 0, %s7, %s5
  // Predicated region
  $region2: #{stacked_transformer_forward.9} parent=0 // pred_check
    _
  $region3: #{stacked_transformer_forward.9} parent=0 // pred_check_branch
    %10 = sbr.rel (0) target = $region5
  $region4: #{stacked_transformer_forward.9} parent=0 // pred_region
    _
  $region5: #{stacked_transformer_forward.9} parent=0 // pred_fallthru
    _
  // Predicated region
  $region6: #{stacked_transformer_forward.9} parent=0 // pred_check
    _
  $region7: #{stacked_transformer_forward.9} parent=0 // pred_check_branch
    %12 = sbr.rel (0) target = $region9
  $region8: #{stacked_transformer_forward.9} parent=0 // pred_region
    _
  $region9: #{stacked_transformer_forward.9} parent=0 // pred_fallthru
    _
  // Predicated region
  $region10: #{stacked_transformer_forward.9} parent=0 // pred_check
    _
  $region11: #{stacked_transformer_forward.9} parent=0 // pred_check_branch
    %14 = sbr.rel (0) target = $region13
  $region12: #{stacked_transformer_forward.9} parent=0 // pred_region
    _
  $region13: #{stacked_transformer_forward.9} parent=0 // pred_fallthru
    _
  // Predicated region
  $region14: #{stacked_transformer_forward.9} parent=0 // pred_check
    _
  $region15: #{stacked_transformer_forward.9} parent=0 // pred_check_branch
    %16 = sbr.rel (0) target = $region17
  $region16: #{stacked_transformer_forward.9} parent=0 // pred_region
    _
  $region17: #{stacked_transformer_forward.9} parent=0 // pred_fallthru
    _
  %v18 = vld [vmem:[%s0] sm:$0xff]
  %v19 = vld [vmem:[%s0 + $0x8] sm:$0xff]
  %v20 = vld [vmem:[%s1] sm:$0xff]
  %v21 = vld [vmem:[%s1 + $0x8] sm:$0xff]
  %v22 = vld [vmem:[%s2] sm:$0xff]
  %v23 = vld [vmem:[%s2 + $0x8] sm:$0xff]
  %v24 = vadd.f32 %v18, %v19
  %v25 = vrot.slane %v24, 4
  %v26 = vadd.f32 %v24, %v25
  %v27 = vrot.slane %v26, 2
  %v28 = vadd.f32 %v26, %v27
  %v29 = vrot.slane %v28, 1
  %v30 = vadd.f32 %v28, %v29
  %v31 = vrcp.pop 16.0
  %v32 = vmul.f32 %v30, %v31
  %v33 = vsub.f32 %v18, %v32
  %v34 = vsub.f32 %v19, %v32
  %v35 = vmul.f32 %v33, %v33
  %v36 = vmul.f32 %v34, %v34
  %v37 = vadd.f32 %v35, %v36
  %v38 = vrot.slane %v37, 4
  %v39 = vadd.f32 %v37, %v38
  %v40 = vrot.slane %v39, 2
  %v41 = vadd.f32 %v39, %v40
  %v42 = vrot.slane %v41, 1
  %v43 = vadd.f32 %v41, %v42
  %v44 = vmul.f32 %v43, %v31
  %v45 = vadd.f32 %v44, 1e-05
  %v46 = vrsqrt.pop %v45
  %v47 = vmul.f32 %v33, %v46
  %v48 = vmul.f32 %v34, %v46
  %50 = vset.pattern.permute.xlu0 0
  %51 = vperm.xlu0 %50, %v20
  %v52 = vpop.permute.xlu0 %51
  %55 = vset.pattern.permute.xlu0 0
  %56 = vperm.xlu0 %55, %v21
  %v57 = vpop.permute.xlu0 %56
  %v59 = vmul.f32 %v47, %v52
  %v60 = vmul.f32 %v48, %v57
  %62 = vset.pattern.permute.xlu0 0
  %63 = vperm.xlu0 %62, %v22
  %v64 = vpop.permute.xlu0 %63
  %67 = vset.pattern.permute.xlu0 0
  %68 = vperm.xlu0 %67, %v23
  %v69 = vpop.permute.xlu0 %68
  %v71 = vadd.f32 %v59, %v64
  %v72 = vadd.f32 %v60, %v69
  %v73 = vld [vmem:[%s3] sm:$0xf]
  %v74 = vld [vmem:[%s3 + $0x4] sm:$0xf]
  %v75 = vld [vmem:[%s3 + $0x8] sm:$0xf]
  %v76 = vld [vmem:[%s3 + $0xc] sm:$0xf]
  %v77 = vld [vmem:[%s3 + $0x10] sm:$0xf]
  %v78 = vld [vmem:[%s3 + $0x14] sm:$0xf]
  %v79 = vpack.c.bf16 %v72, %v71
  %v86 = vunpack.c.l.b16 %v73
  %v87 = vunpack.c.l.b16 %v74
  %v88 = vunpack.c.l.b16 %v75
  %v89 = vunpack.c.l.b16 %v76
  %v90 = vunpack.c.l.b16 %v77
  %v91 = vunpack.c.l.b16 %v78
  %v92 = vpack.c.b16 %v87, %v86
  %v93 = vpack.c.b16 %v89, %v88
  %v94 = vpack.c.b16 %v91, %v90
  %vm95 = vcmask 130048
  %v97 = vsel %vm95, %v92, 0
  %v100 = vsel %vm95, %v93, 0
  %v103 = vsel %vm95, %v94, 0
  %105 = vmatprep.subr.bf16.mxu0 0
  %106 = vmatpush1.bf16.msra.mxu0 %v79
  %107 = vmatprep.subr.bf16.mxu0 0
  %108 = vmatpush1.bf16.msra.mxu0 0
  %109 = vmatprep.subr.bf16.mxu0 0
  %110 = vmatpush1.bf16.msra.mxu0 0
  %111 = vmatprep.subr.bf16.mxu0 0
  %112 = vmatpush1.bf16.msra.mxu0 0
  %113 = vmatprep.subr.bf16.mxu0 0
  %114 = vmatpush1.bf16.msra.mxu0 0
  %115 = vmatprep.subr.bf16.mxu0 0
  %116 = vmatpush1.bf16.msra.mxu0 0
  %117 = vmatprep.subr.bf16.mxu0 0
  %118 = vmatpush1.bf16.msra.mxu0 0
  %119 = vmatprep.subr.bf16.mxu0 0
  %120 = vmatpush1.bf16.msra.mxu0 0
  %121 = vmatprep.subr.bf16.mxu0 0
  %122 = vmatpush1.bf16.msra.mxu0 0
  %123 = vmatprep.subr.bf16.mxu0 0
  %124 = vmatpush1.bf16.msra.mxu0 0
  %125 = vmatprep.subr.bf16.mxu0 0
  %126 = vmatpush1.bf16.msra.mxu0 0
  %127 = vmatprep.subr.bf16.mxu0 0
  %128 = vmatpush1.bf16.msra.mxu0 0
  %129 = vmatprep.subr.bf16.mxu0 0
  %130 = vmatpush1.bf16.msra.mxu0 0
  %131 = vmatprep.subr.bf16.mxu0 0
  %132 = vmatpush1.bf16.msra.mxu0 0
  %133 = vmatprep.subr.bf16.mxu0 0
  %134 = vmatpush1.bf16.msra.mxu0 0
  %135 = vmatprep.subr.bf16.mxu0 0
  %136 = vmatpush1.bf16.msra.mxu0 0
  %137 = vmatprep.mubr.bf16.mxu0 0
  %138 = vmatmul.mubr.bf16.gmra.mrb[0].mxu0 %v97
  %v139 = vpop.f32.mrb[0].mxu0
  %v140 = vadd.f32 0.0, %v139
  %v141 = vpop.f32.mrb[0].mxu0
  %v142 = vpop.f32.mrb[0].mxu0
  %v143 = vadd.f32 0.0, %v142
  %v144 = vpop.f32.mrb[0].mxu0
  %145 = vmatprep.mubr.bf16.mxu0 0
  %146 = vmatmul.mubr.bf16.gmra.mrb[0].mxu0 %v100
  %v147 = vpop.f32.mrb[0].mxu0
  %v148 = vadd.f32 0.0, %v147
  %v149 = vpop.f32.mrb[0].mxu0
  %v150 = vpop.f32.mrb[0].mxu0
  %v151 = vadd.f32 0.0, %v150
  %v152 = vpop.f32.mrb[0].mxu0
  %153 = vmatprep.mubr.bf16.mxu0 0
  %154 = vmatmul.mubr.bf16.gmra.mrb[0].mxu0 %v103
  %v155 = vpop.f32.mrb[0].mxu0
  %v156 = vadd.f32 0.0, %v155
  %v157 = vpop.f32.mrb[0].mxu0
  %v158 = vpop.f32.mrb[0].mxu0
  %v159 = vadd.f32 0.0, %v158
  %v160 = vpop.f32.mrb[0].mxu0
  %161 = vdwg.mxu0
  %162 = vst [vmem:[%s4] sm:$0xff] %v140
  %163 = vst [vmem:[%s4 + $0x8] sm:$0xff] %v143
  %164 = vst [vmem:[%s4 + $0x10] sm:$0xff] %v148
  %165 = vst [vmem:[%s4 + $0x18] sm:$0xff] %v151
  %166 = vst [vmem:[%s4 + $0x20] sm:$0xff] %v156
  %167 = vst [vmem:[%s4 + $0x28] sm:$0xff] %v159
  // Predicated region
  $region18: #{stacked_transformer_forward.9} parent=0 // pred_check
    _
  $region19: #{stacked_transformer_forward.9} parent=0 // pred_check_branch
    %169 = sbr.rel (0) target = $region21
  $region20: #{stacked_transformer_forward.9} parent=0 // pred_region
    _
  $region21: #{stacked_transformer_forward.9} parent=0 // pred_fallthru
    _
  // Predicated region
  $region22: #{stacked_transformer_forward.9} parent=0 // pred_check
    _
  $region23: #{stacked_transformer_forward.9} parent=0 // pred_check_branch
    %171 = sbr.rel (0) target = $region25
  $region24: #{stacked_transformer_forward.9} parent=0 // pred_region
    _
  $region25: #{stacked_transformer_forward.9} parent=0 // pred_fallthru
    _

// kernel: stacked_transformer_forward.8
$region0: #{stacked_transformer_forward.8}
  #allocation0 [shape = 'u32[]', space=smem, size = 0x4, offset = 0x4, fixed_abs, tag = 'smem constant byte address 0x4 - core index']
  #allocation1 [shape = 'u32[144,128]{1,0:T(1,128)}', space=vmem, size = 0x12000, scoped, tag = 'internal scratch']
  %s0 = inlined_call_operand.vmem [shape: f32[16,128], index: 0, kind: input, shape index: {}]
  %s1 = inlined_call_operand.vmem [shape: f32[16,128], index: 1, kind: input, shape index: {}]
  %s2 = inlined_call_operand.vmem [shape: bf16[16,16], index: 2, kind: input, shape index: {}]
  %s3 = inlined_call_operand.vmem [shape: f32[16,1], index: 3, kind: input, shape index: {}]
  %s4 = inlined_call_operand.vmem [shape: f32[16,1], index: 4, kind: input, shape index: {}]
  %s5 = inlined_call_operand.vmem [shape: f32[16,1], index: 5, kind: input, shape index: {}]
  %s6 = inlined_call_operand.vmem [shape: bf16[32,16], index: 6, kind: input, shape index: {}]
  %s7 = inlined_call_operand.vmem [shape: f32[32,1], index: 7, kind: input, shape index: {}]
  %s8 = inlined_call_operand.vmem [shape: bf16[16,32], index: 8, kind: input, shape index: {}]
  %s9 = inlined_call_operand.vmem [shape: f32[16,1], index: 9, kind: input, shape index: {}]
  %s10 = inlined_call_operand.vmem [shape: f32[16,128], index: 10, kind: output, shape index: {}]
  %s11 = sld [smem:[#allocation0]]
  $region50: #{stacked_transformer_forward.8} parent=0
    _
  %s13 = ssub.s32 1, %s11
  %s14 = scalar_select 0, %s13, %s11
  // Predicated region
  $region2: #{stacked_transformer_forward.8} parent=0 // pred_check
    _
  $region3: #{stacked_transformer_forward.8} parent=0 // pred_check_branch
    %16 = sbr.rel (0) target = $region5
  $region4: #{stacked_transformer_forward.8} parent=0 // pred_region
    _
  $region5: #{stacked_transformer_forward.8} parent=0 // pred_fallthru
    _
  // Predicated region
  $region6: #{stacked_transformer_forward.8} parent=0 // pred_check
    _
  $region7: #{stacked_transformer_forward.8} parent=0 // pred_check_branch
    %18 = sbr.rel (0) target = $region9
  $region8: #{stacked_transformer_forward.8} parent=0 // pred_region
    _
  $region9: #{stacked_transformer_forward.8} parent=0 // pred_fallthru
    _
  // Predicated region
  $region10: #{stacked_transformer_forward.8} parent=0 // pred_check
    _
  $region11: #{stacked_transformer_forward.8} parent=0 // pred_check_branch
    %20 = sbr.rel (0) target = $region13
  $region12: #{stacked_transformer_forward.8} parent=0 // pred_region
    _
  $region13: #{stacked_transformer_forward.8} parent=0 // pred_fallthru
    _
  // Predicated region
  $region14: #{stacked_transformer_forward.8} parent=0 // pred_check
    _
  $region15: #{stacked_transformer_forward.8} parent=0 // pred_check_branch
    %22 = sbr.rel (0) target = $region17
  $region16: #{stacked_transformer_forward.8} parent=0 // pred_region
    _
  $region17: #{stacked_transformer_forward.8} parent=0 // pred_fallthru
    _
  // Predicated region
  $region18: #{stacked_transformer_forward.8} parent=0 // pred_check
    _
  $region19: #{stacked_transformer_forward.8} parent=0 // pred_check_branch
    %24 = sbr.rel (0) target = $region21
  $region20: #{stacked_transformer_forward.8} parent=0 // pred_region
    _
  $region21: #{stacked_transformer_forward.8} parent=0 // pred_fallthru
    _
  // Predicated region
  $region22: #{stacked_transformer_forward.8} parent=0 // pred_check
    _
  $region23: #{stacked_transformer_forward.8} parent=0 // pred_check_branch
    %26 = sbr.rel (0) target = $region25
  $region24: #{stacked_transformer_forward.8} parent=0 // pred_region
    _
  $region25: #{stacked_transformer_forward.8} parent=0 // pred_fallthru
    _
  // Predicated region
  $region26: #{stacked_transformer_forward.8} parent=0 // pred_check
    _
  $region27: #{stacked_transformer_forward.8} parent=0 // pred_check_branch
    %28 = sbr.rel (0) target = $region29
  $region28: #{stacked_transformer_forward.8} parent=0 // pred_region
    _
  $region29: #{stacked_transformer_forward.8} parent=0 // pred_fallthru
    _
  // Predicated region
  $region30: #{stacked_transformer_forward.8} parent=0 // pred_check
    _
  $region31: #{stacked_transformer_forward.8} parent=0 // pred_check_branch
    %30 = sbr.rel (0) target = $region33
  $region32: #{stacked_transformer_forward.8} parent=0 // pred_region
    _
  $region33: #{stacked_transformer_forward.8} parent=0 // pred_fallthru
    _
  // Predicated region
  $region34: #{stacked_transformer_forward.8} parent=0 // pred_check
    _
  $region35: #{stacked_transformer_forward.8} parent=0 // pred_check_branch
    %32 = sbr.rel (0) target = $region37
  $region36: #{stacked_transformer_forward.8} parent=0 // pred_region
    _
  $region37: #{stacked_transformer_forward.8} parent=0 // pred_fallthru
    _
  // Predicated region
  $region38: #{stacked_transformer_forward.8} parent=0 // pred_check
    _
  $region39: #{stacked_transformer_forward.8} parent=0 // pred_check_branch
    %34 = sbr.rel (0) target = $region41
  $region40: #{stacked_transformer_forward.8} parent=0 // pred_region
    _
  $region41: #{stacked_transformer_forward.8} parent=0 // pred_fallthru
    _
  %v36 = vld [vmem:[%s1] sm:$0xff]
  %v37 = vld [vmem:[%s1 + $0x8] sm:$0xff]
  %v38 = vld [vmem:[%s2] sm:$0xf]
  %v39 = vld [vmem:[%s2 + $0x4] sm:$0xf]
  %v40 = vld [vmem:[%s0] sm:$0xff]
  %v41 = vld [vmem:[%s0 + $0x8] sm:$0xff]
  %v42 = vpack.c.bf16 %v41, %v40
  %v45 = vunpack.c.l.b16 %v38
  %v46 = vunpack.c.l.b16 %v39
  %v47 = vpack.c.b16 %v46, %v45
  %vm48 = vcmask 130048
  %v50 = vsel %vm48, %v47, 0
  %52 = vmatprep.subr.bf16.mxu0 0
  %53 = vmatpush1.bf16.msra.mxu0 %v42
  %54 = vmatprep.subr.bf16.mxu0 0
  %55 = vmatpush1.bf16.msra.mxu0 0
  %56 = vmatprep.subr.bf16.mxu0 0
  %57 = vmatpush1.bf16.msra.mxu0 0
  %58 = vmatprep.subr.bf16.mxu0 0
  %59 = vmatpush1.bf16.msra.mxu0 0
  %60 = vmatprep.subr.bf16.mxu0 0
  %61 = vmatpush1.bf16.msra.mxu0 0
  %62 = vmatprep.subr.bf16.mxu0 0
  %63 = vmatpush1.bf16.msra.mxu0 0
  %64 = vmatprep.subr.bf16.mxu0 0
  %65 = vmatpush1.bf16.msra.mxu0 0
  %66 = vmatprep.subr.bf16.mxu0 0
  %67 = vmatpush1.bf16.msra.mxu0 0
  %68 = vmatprep.subr.bf16.mxu0 0
  %69 = vmatpush1.bf16.msra.mxu0 0
  %70 = vmatprep.subr.bf16.mxu0 0
  %71 = vmatpush1.bf16.msra.mxu0 0
  %72 = vmatprep.subr.bf16.mxu0 0
  %73 = vmatpush1.bf16.msra.mxu0 0
  %74 = vmatprep.subr.bf16.mxu0 0
  %75 = vmatpush1.bf16.msra.mxu0 0
  %76 = vmatprep.subr.bf16.mxu0 0
  %77 = vmatpush1.bf16.msra.mxu0 0
  %78 = vmatprep.subr.bf16.mxu0 0
  %79 = vmatpush1.bf16.msra.mxu0 0
  %80 = vmatprep.subr.bf16.mxu0 0
  %81 = vmatpush1.bf16.msra.mxu0 0
  %82 = vmatprep.subr.bf16.mxu0 0
  %83 = vmatpush1.bf16.msra.mxu0 0
  %84 = vmatprep.mubr.bf16.mxu0 0
  %85 = vmatmul.mubr.bf16.gmra.mrb[0].mxu0 %v50
  %v86 = vpop.f32.mrb[0].mxu0
  %v87 = vadd.f32 0.0, %v86
  %v88 = vpop.f32.mrb[0].mxu0
  %v89 = vpop.f32.mrb[0].mxu0
  %v90 = vadd.f32 0.0, %v89
  %v91 = vpop.f32.mrb[0].mxu0
  %92 = vdwg.mxu0
  %v93 = vadd.f32 %v36, %v87
  %v94 = vadd.f32 %v37, %v90
  %v95 = vld [vmem:[%s3] sm:$0xff]
  %v96 = vld [vmem:[%s3 + $0x8] sm:$0xff]
  %98 = vset.pattern.permute.xlu0 0
  %99 = vperm.xlu0 %98, %v95
  %v100 = vpop.permute.xlu0 %99
  %103 = vset.pattern.permute.xlu0 0
  %104 = vperm.xlu0 %103, %v96
  %v105 = vpop.permute.xlu0 %104
  %v107 = vadd.f32 %v93, %v100
  %v108 = vadd.f32 %v94, %v105
  %v109 = vld [vmem:[%s6] sm:$0xf]
  %v110 = vld [vmem:[%s6 + $0x4] sm:$0xf]
  %v111 = vld [vmem:[%s6 + $0x8] sm:$0xf]
  %v112 = vld [vmem:[%s6 + $0xc] sm:$0xf]
  %v113 = vld [vmem:[%s4] sm:$0xff]
  %v114 = vld [vmem:[%s4 + $0x8] sm:$0xff]
  %v115 = vld [vmem:[%s5] sm:$0xff]
  %v116 = vld [vmem:[%s5 + $0x8] sm:$0xff]
  %v117 = vadd.f32 %v107, %v108
  %v118 = vrot.slane %v117, 4
  %v119 = vadd.f32 %v117, %v118
  %v120 = vrot.slane %v119, 2
  %v121 = vadd.f32 %v119, %v120
  %v122 = vrot.slane %v121, 1
  %v123 = vadd.f32 %v121, %v122
  %v124 = vrcp.pop 16.0
  %v125 = vmul.f32 %v123, %v124
  %v126 = vsub.f32 %v107, %v125
  %v127 = vsub.f32 %v108, %v125
  %v128 = vmul.f32 %v126, %v126
  %v129 = vmul.f32 %v127, %v127
  %v130 = vadd.f32 %v128, %v129
  %v131 = vrot.slane %v130, 4
  %v132 = vadd.f32 %v130, %v131
  %v133 = vrot.slane %v132, 2
  %v134 = vadd.f32 %v132, %v133
  %v135 = vrot.slane %v134, 1
  %v136 = vadd.f32 %v134, %v135
  %v137 = vmul.f32 %v136, %v124
  %v138 = vadd.f32 %v137, 1e-05
  %v139 = vrsqrt.pop %v138
  %v140 = vmul.f32 %v126, %v139
  %v141 = vmul.f32 %v127, %v139
  %143 = vset.pattern.permute.xlu0 0
  %144 = vperm.xlu0 %143, %v113
  %v145 = vpop.permute.xlu0 %144
  %148 = vset.pattern.permute.xlu0 0
  %149 = vperm.xlu0 %148, %v114
  %v150 = vpop.permute.xlu0 %149
  %v152 = vmul.f32 %v140, %v145
  %v153 = vmul.f32 %v141, %v150
  %155 = vset.pattern.permute.xlu0 0
  %156 = vperm.xlu0 %155, %v115
  %v157 = vpop.permute.xlu0 %156
  %160 = vset.pattern.permute.xlu0 0
  %161 = vperm.xlu0 %160, %v116
  %v162 = vpop.permute.xlu0 %161
  %v164 = vadd.f32 %v152, %v157
  %v165 = vadd.f32 %v153, %v162
  %v166 = vpack.c.bf16 %v165, %v164
  %v167 = vld [vmem:[%s7] sm:$0xff]
  %v168 = vld [vmem:[%s7 + $0x8] sm:$0xff]
  %v169 = vld [vmem:[%s7 + $0x10] sm:$0xff]
  %v170 = vld [vmem:[%s7 + $0x18] sm:$0xff]
  %172 = vset.pattern.permute.xlu0 0
  %173 = vperm.xlu0 %172, %v167
  %v174 = vpop.permute.xlu0 %173
  %177 = vset.pattern.permute.xlu0 0
  %178 = vperm.xlu0 %177, %v168
  %v179 = vpop.permute.xlu0 %178
  %182 = vset.pattern.permute.xlu0 0
  %183 = vperm.xlu0 %182, %v169
  %v184 = vpop.permute.xlu0 %183
  %187 = vset.pattern.permute.xlu0 0
  %188 = vperm.xlu0 %187, %v170
  %v189 = vpop.permute.xlu0 %188
  %v195 = vunpack.c.l.b16 %v109
  %v196 = vunpack.c.l.b16 %v110
  %v197 = vunpack.c.l.b16 %v111
  %v198 = vunpack.c.l.b16 %v112
  %v199 = vpack.c.b16 %v196, %v195
  %v200 = vpack.c.b16 %v198, %v197
  %v202 = vsel %vm48, %v199, 0
  %v205 = vsel %vm48, %v200, 0
  %207 = vmatprep.subr.bf16.mxu0 0
  %208 = vmatpush1.bf16.msra.mxu0 %v166
  %209 = vmatprep.subr.bf16.mxu0 0
  %210 = vmatpush1.bf16.msra.mxu0 0
  %211 = vmatprep.subr.bf16.mxu0 0
  %212 = vmatpush1.bf16.msra.mxu0 0
  %213 = vmatprep.subr.bf16.mxu0 0
  %214 = vmatpush1.bf16.msra.mxu0 0
  %215 = vmatprep.subr.bf16.mxu0 0
  %216 = vmatpush1.bf16.msra.mxu0 0
  %217 = vmatprep.subr.bf16.mxu0 0
  %218 = vmatpush1.bf16.msra.mxu0 0
  %219 = vmatprep.subr.bf16.mxu0 0
  %220 = vmatpush1.bf16.msra.mxu0 0
  %221 = vmatprep.subr.bf16.mxu0 0
  %222 = vmatpush1.bf16.msra.mxu0 0
  %223 = vmatprep.subr.bf16.mxu0 0
  %224 = vmatpush1.bf16.msra.mxu0 0
  %225 = vmatprep.subr.bf16.mxu0 0
  %226 = vmatpush1.bf16.msra.mxu0 0
  %227 = vmatprep.subr.bf16.mxu0 0
  %228 = vmatpush1.bf16.msra.mxu0 0
  %229 = vmatprep.subr.bf16.mxu0 0
  %230 = vmatpush1.bf16.msra.mxu0 0
  %231 = vmatprep.subr.bf16.mxu0 0
  %232 = vmatpush1.bf16.msra.mxu0 0
  %233 = vmatprep.subr.bf16.mxu0 0
  %234 = vmatpush1.bf16.msra.mxu0 0
  %235 = vmatprep.subr.bf16.mxu0 0
  %236 = vmatpush1.bf16.msra.mxu0 0
  %237 = vmatprep.subr.bf16.mxu0 0
  %238 = vmatpush1.bf16.msra.mxu0 0
  %239 = vmatprep.mubr.bf16.mxu0 0
  %240 = vmatmul.mubr.bf16.gmra.mrb[0].mxu0 %v202
  %v241 = vpop.f32.mrb[0].mxu0
  %v242 = vadd.f32 %v174, %v241
  %v243 = vpop.f32.mrb[0].mxu0
  %v244 = vpop.f32.mrb[0].mxu0
  %v245 = vadd.f32 %v179, %v244
  %v246 = vpop.f32.mrb[0].mxu0
  %247 = vmatprep.mubr.bf16.mxu0 0
  %248 = vmatmul.mubr.bf16.gmra.mrb[0].mxu0 %v205
  %v249 = vpop.f32.mrb[0].mxu0
  %v250 = vadd.f32 %v184, %v249
  %v251 = vpop.f32.mrb[0].mxu0
  %v252 = vpop.f32.mrb[0].mxu0
  %v253 = vadd.f32 %v189, %v252
  %v254 = vpop.f32.mrb[0].mxu0
  %255 = vdwg.mxu0
  %v256 = vmul.f32 %v242, 0.5
  %v257 = vmul.f32 %v245, 0.5
  %v258 = vmul.f32 %v250, 0.5
  %v259 = vmul.f32 %v253, 0.5
  %v260 = vmul.f32 %v242, 0.044715
  %v261 = vmul.f32 %v245, 0.044715
  %v262 = vmul.f32 %v250, 0.044715
  %v263 = vmul.f32 %v253, 0.044715
  %v264 = vmul.f32 %v260, %v242
  %v265 = vmul.f32 %v261, %v245
  %v266 = vmul.f32 %v262, %v250
  %v267 = vmul.f32 %v263, %v253
  %v268 = vmul.f32 %v264, %v242
  %v269 = vmul.f32 %v265, %v245
  %v270 = vmul.f32 %v266, %v250
  %v271 = vmul.f32 %v267, %v253
  %v272 = vadd.f32 %v242, %v268
  %v273 = vadd.f32 %v245, %v269
  %v274 = vadd.f32 %v250, %v270
  %v275 = vadd.f32 %v253, %v271
  %v276 = vmul.f32 %v272, 0.7978845
  %v277 = vmul.f32 %v273, 0.7978845
  %v278 = vmul.f32 %v274, 0.7978845
  %v279 = vmul.f32 %v275, 0.7978845
  %v280 = vtanh.pop %v276
  %v281 = vtanh.pop %v277
  %v282 = vtanh.pop %v278
  %v283 = vtanh.pop %v279
  %v284 = vadd.f32 %v280, 1.0
  %v285 = vadd.f32 %v281, 1.0
  %v286 = vadd.f32 %v282, 1.0
  %v287 = vadd.f32 %v283, 1.0
  %v288 = vmul.f32 %v256, %v284
  %v289 = vmul.f32 %v257, %v285
  %v290 = vmul.f32 %v258, %v286
  %v291 = vmul.f32 %v259, %v287
  %v292 = vld [vmem:[%s8] sm:$0xf]
  %v293 = vld [vmem:[%s8 + $0x4] sm:$0xf]
  %v294 = vpack.c.bf16 %v289, %v288
  %v295 = vpack.c.bf16 %v291, %v290
  %v298 = vunpack.c.l.b16 %v292
  %v299 = vunpack.c.l.b16 %v293
  %v300 = vpack.c.b16 %v299, %v298
  %vm301 = vcmask 261120
  %v303 = vsel %vm301, %v300, 0
  %305 = vmatprep.subr.bf16.mxu0 0
  %306 = vmatpush1.bf16.msra.mxu0 %v294
  %307 = vmatprep.subr.bf16.mxu0 0
  %308 = vmatpush1.bf16.msra.mxu0 %v295
  %309 = vmatprep.subr.bf16.mxu0 0
  %310 = vmatpush1.bf16.msra.mxu0 0
  %311 = vmatprep.subr.bf16.mxu0 0
  %312 = vmatpush1.bf16.msra.mxu0 0
  %313 = vmatprep.subr.bf16.mxu0 0
  %314 = vmatpush1.bf16.msra.mxu0 0
  %315 = vmatprep.subr.bf16.mxu0 0
  %316 = vmatpush1.bf16.msra.mxu0 0
  %317 = vmatprep.subr.bf16.mxu0 0
  %318 = vmatpush1.bf16.msra.mxu0 0
  %319 = vmatprep.subr.bf16.mxu0 0
  %320 = vmatpush1.bf16.msra.mxu0 0
  %321 = vmatprep.subr.bf16.mxu0 0
  %322 = vmatpush1.bf16.msra.mxu0 0
  %323 = vmatprep.subr.bf16.mxu0 0
  %324 = vmatpush1.bf16.msra.mxu0 0
  %325 = vmatprep.subr.bf16.mxu0 0
  %326 = vmatpush1.bf16.msra.mxu0 0
  %327 = vmatprep.subr.bf16.mxu0 0
  %328 = vmatpush1.bf16.msra.mxu0 0
  %329 = vmatprep.subr.bf16.mxu0 0
  %330 = vmatpush1.bf16.msra.mxu0 0
  %331 = vmatprep.subr.bf16.mxu0 0
  %332 = vmatpush1.bf16.msra.mxu0 0
  %333 = vmatprep.subr.bf16.mxu0 0
  %334 = vmatpush1.bf16.msra.mxu0 0
  %335 = vmatprep.subr.bf16.mxu0 0
  %336 = vmatpush1.bf16.msra.mxu0 0
  %337 = vmatprep.mubr.bf16.mxu0 0
  %338 = vmatmul.mubr.bf16.gmra.mrb[0].mxu0 %v303
  %v339 = vpop.f32.mrb[0].mxu0
  %v340 = vadd.f32 0.0, %v339
  %v341 = vpop.f32.mrb[0].mxu0
  %v342 = vpop.f32.mrb[0].mxu0
  %v343 = vadd.f32 0.0, %v342
  %v344 = vpop.f32.mrb[0].mxu0
  %345 = vdwg.mxu0
  %v346 = vadd.f32 %v107, %v340
  %v347 = vadd.f32 %v108, %v343
  %v348 = vld [vmem:[%s9] sm:$0xff]
  %v349 = vld [vmem:[%s9 + $0x8] sm:$0xff]
  %351 = vset.pattern.permute.xlu0 0
  %352 = vperm.xlu0 %351, %v348
  %v353 = vpop.permute.xlu0 %352
  %356 = vset.pattern.permute.xlu0 0
  %357 = vperm.xlu0 %356, %v349
  %v358 = vpop.permute.xlu0 %357
  %v360 = vadd.f32 %v346, %v353
  %v361 = vadd.f32 %v347, %v358
  %362 = vst [vmem:[%s10] sm:$0xff] %v360
  %363 = vst [vmem:[%s10 + $0x8] sm:$0xff] %v361
  // Predicated region
  $region42: #{stacked_transformer_forward.8} parent=0 // pred_check
    _
  $region43: #{stacked_transformer_forward.8} parent=0 // pred_check_branch
    %365 = sbr.rel (0) target = $region45
  $region44: #{stacked_transformer_forward.8} parent=0 // pred_region
    _
  $region45: #{stacked_transformer_forward.8} parent=0 // pred_fallthru
    _
  // Predicated region
  $region46: #{stacked_transformer_forward.8} parent=0 // pred_check
    _
  $region47: #{stacked_transformer_forward.8} parent=0 // pred_check_branch
    %367 = sbr.rel (0) target = $region49
  $region48: #{stacked_transformer_forward.8} parent=0 // pred_region
    _
  $region49: #{stacked_transformer_forward.8} parent=0 // pred_fallthru
    _

// kernel: stacked_transformer_forward.11
$region0: #{stacked_transformer_forward.11}
  #allocation0 [shape = 'u32[]', space=smem, size = 0x4, offset = 0x4, fixed_abs, tag = 'smem constant byte address 0x4 - core index']
  #allocation1 [shape = 'u32[144,128]{1,0:T(1,128)}', space=vmem, size = 0x12000, scoped, tag = 'internal scratch']
  #allocation2 [shape = 'f32[1,1]{1,0:T(1,128)S(1)}', space=vmem, size = 0x200, scoped, tag = 'scoped memory for stacked_transformer_forward.11']
  %s0 = inlined_call_operand.vmem [shape: f32[16,128], index: 0, kind: input, shape index: {}]
  %s1 = inlined_call_operand.vmem [shape: f32[16,128], index: 1, kind: input, shape index: {}]
  %s2 = inlined_call_operand.vmem [shape: bf16[16,16], index: 2, kind: input, shape index: {}]
  %s3 = inlined_call_operand.vmem [shape: f32[16,1], index: 3, kind: input, shape index: {}]
  %s4 = inlined_call_operand.vmem [shape: f32[16,1], index: 4, kind: input, shape index: {}]
  %s5 = inlined_call_operand.vmem [shape: f32[16,1], index: 5, kind: input, shape index: {}]
  %s6 = inlined_call_operand.vmem [shape: bf16[32,16], index: 6, kind: input, shape index: {}]
  %s7 = inlined_call_operand.vmem [shape: f32[32,1], index: 7, kind: input, shape index: {}]
  %s8 = inlined_call_operand.vmem [shape: bf16[16,32], index: 8, kind: input, shape index: {}]
  %s9 = inlined_call_operand.vmem [shape: f32[16,1], index: 9, kind: input, shape index: {}]
  %s10 = inlined_call_operand.vmem [shape: bf16[1,16], index: 10, kind: input, shape index: {}]
  %s11 = inlined_call_operand.<no memory space> [shape: f32[1,1], index: 11, kind: input, shape index: {}]
  %s12 = inlined_call_operand.vmem [shape: f32[1,128], index: 12, kind: output, shape index: {}]
  %s13 = sld [smem:[#allocation0]]
  $region58: #{stacked_transformer_forward.11} parent=0
    _
  %s15 = ssub.s32 1, %s13
  %s16 = scalar_select 0, %s15, %s13
  %v17 = vstv %s11
  %18 = vst [vmem:[#allocation2] sm:$0x1] %v17
  // Predicated region
  $region2: #{stacked_transformer_forward.11} parent=0 // pred_check
    _
  $region3: #{stacked_transformer_forward.11} parent=0 // pred_check_branch
    %20 = sbr.rel (0) target = $region5
  $region4: #{stacked_transformer_forward.11} parent=0 // pred_region
    _
  $region5: #{stacked_transformer_forward.11} parent=0 // pred_fallthru
    _
  // Predicated region
  $region6: #{stacked_transformer_forward.11} parent=0 // pred_check
    _
  $region7: #{stacked_transformer_forward.11} parent=0 // pred_check_branch
    %22 = sbr.rel (0) target = $region9
  $region8: #{stacked_transformer_forward.11} parent=0 // pred_region
    _
  $region9: #{stacked_transformer_forward.11} parent=0 // pred_fallthru
    _
  // Predicated region
  $region10: #{stacked_transformer_forward.11} parent=0 // pred_check
    _
  $region11: #{stacked_transformer_forward.11} parent=0 // pred_check_branch
    %24 = sbr.rel (0) target = $region13
  $region12: #{stacked_transformer_forward.11} parent=0 // pred_region
    _
  $region13: #{stacked_transformer_forward.11} parent=0 // pred_fallthru
    _
  // Predicated region
  $region14: #{stacked_transformer_forward.11} parent=0 // pred_check
    _
  $region15: #{stacked_transformer_forward.11} parent=0 // pred_check_branch
    %26 = sbr.rel (0) target = $region17
  $region16: #{stacked_transformer_forward.11} parent=0 // pred_region
    _
  $region17: #{stacked_transformer_forward.11} parent=0 // pred_fallthru
    _
  // Predicated region
  $region18: #{stacked_transformer_forward.11} parent=0 // pred_check
    _
  $region19: #{stacked_transformer_forward.11} parent=0 // pred_check_branch
    %28 = sbr.rel (0) target = $region21
  $region20: #{stacked_transformer_forward.11} parent=0 // pred_region
    _
  $region21: #{stacked_transformer_forward.11} parent=0 // pred_fallthru
    _
  // Predicated region
  $region22: #{stacked_transformer_forward.11} parent=0 // pred_check
    _
  $region23: #{stacked_transformer_forward.11} parent=0 // pred_check_branch
    %30 = sbr.rel (0) target = $region25
  $region24: #{stacked_transformer_forward.11} parent=0 // pred_region
    _
  $region25: #{stacked_transformer_forward.11} parent=0 // pred_fallthru
    _
  // Predicated region
  $region26: #{stacked_transformer_forward.11} parent=0 // pred_check
    _
  $region27: #{stacked_transformer_forward.11} parent=0 // pred_check_branch
    %32 = sbr.rel (0) target = $region29
  $region28: #{stacked_transformer_forward.11} parent=0 // pred_region
    _
  $region29: #{stacked_transformer_forward.11} parent=0 // pred_fallthru
    _
  // Predicated region
  $region30: #{stacked_transformer_forward.11} parent=0 // pred_check
    _
  $region31: #{stacked_transformer_forward.11} parent=0 // pred_check_branch
    %34 = sbr.rel (0) target = $region33
  $region32: #{stacked_transformer_forward.11} parent=0 // pred_region
    _
  $region33: #{stacked_transformer_forward.11} parent=0 // pred_fallthru
    _
  // Predicated region
  $region34: #{stacked_transformer_forward.11} parent=0 // pred_check
    _
  $region35: #{stacked_transformer_forward.11} parent=0 // pred_check_branch
    %36 = sbr.rel (0) target = $region37
  $region36: #{stacked_transformer_forward.11} parent=0 // pred_region
    _
  $region37: #{stacked_transformer_forward.11} parent=0 // pred_fallthru
    _
  // Predicated region
  $region38: #{stacked_transformer_forward.11} parent=0 // pred_check
    _
  $region39: #{stacked_transformer_forward.11} parent=0 // pred_check_branch
    %38 = sbr.rel (0) target = $region41
  $region40: #{stacked_transformer_forward.11} parent=0 // pred_region
    _
  $region41: #{stacked_transformer_forward.11} parent=0 // pred_fallthru
    _
  // Predicated region
  $region42: #{stacked_transformer_forward.11} parent=0 // pred_check
    _
  $region43: #{stacked_transformer_forward.11} parent=0 // pred_check_branch
    %40 = sbr.rel (0) target = $region45
  $region44: #{stacked_transformer_forward.11} parent=0 // pred_region
    _
  $region45: #{stacked_transformer_forward.11} parent=0 // pred_fallthru
    _
  // Predicated region
  $region46: #{stacked_transformer_forward.11} parent=0 // pred_check
    _
  $region47: #{stacked_transformer_forward.11} parent=0 // pred_check_branch
    %42 = sbr.rel (0) target = $region49
  $region48: #{stacked_transformer_forward.11} parent=0 // pred_region
    _
  $region49: #{stacked_transformer_forward.11} parent=0 // pred_fallthru
    _
  %v44 = vld [vmem:[%s1] sm:$0xff]
  %v45 = vld [vmem:[%s1 + $0x8] sm:$0xff]
  %v46 = vld [vmem:[%s2] sm:$0xf]
  %v47 = vld [vmem:[%s2 + $0x4] sm:$0xf]
  %v48 = vld [vmem:[%s0] sm:$0xff]
  %v49 = vld [vmem:[%s0 + $0x8] sm:$0xff]
  %v50 = vpack.c.bf16 %v49, %v48
  %v53 = vunpack.c.l.b16 %v46
  %v54 = vunpack.c.l.b16 %v47
  %v55 = vpack.c.b16 %v54, %v53
  %vm56 = vcmask 130048
  %v58 = vsel %vm56, %v55, 0
  %60 = vmatprep.subr.bf16.mxu0 0
  %61 = vmatpush1.bf16.msra.mxu0 %v50
  %62 = vmatprep.subr.bf16.mxu0 0
  %63 = vmatpush1.bf16.msra.mxu0 0
  %64 = vmatprep.subr.bf16.mxu0 0
  %65 = vmatpush1.bf16.msra.mxu0 0
  %66 = vmatprep.subr.bf16.mxu0 0
  %67 = vmatpush1.bf16.msra.mxu0 0
  %68 = vmatprep.subr.bf16.mxu0 0
  %69 = vmatpush1.bf16.msra.mxu0 0
  %70 = vmatprep.subr.bf16.mxu0 0
  %71 = vmatpush1.bf16.msra.mxu0 0
  %72 = vmatprep.subr.bf16.mxu0 0
  %73 = vmatpush1.bf16.msra.mxu0 0
  %74 = vmatprep.subr.bf16.mxu0 0
  %75 = vmatpush1.bf16.msra.mxu0 0
  %76 = vmatprep.subr.bf16.mxu0 0
  %77 = vmatpush1.bf16.msra.mxu0 0
  %78 = vmatprep.subr.bf16.mxu0 0
  %79 = vmatpush1.bf16.msra.mxu0 0
  %80 = vmatprep.subr.bf16.mxu0 0
  %81 = vmatpush1.bf16.msra.mxu0 0
  %82 = vmatprep.subr.bf16.mxu0 0
  %83 = vmatpush1.bf16.msra.mxu0 0
  %84 = vmatprep.subr.bf16.mxu0 0
  %85 = vmatpush1.bf16.msra.mxu0 0
  %86 = vmatprep.subr.bf16.mxu0 0
  %87 = vmatpush1.bf16.msra.mxu0 0
  %88 = vmatprep.subr.bf16.mxu0 0
  %89 = vmatpush1.bf16.msra.mxu0 0
  %90 = vmatprep.subr.bf16.mxu0 0
  %91 = vmatpush1.bf16.msra.mxu0 0
  %92 = vmatprep.mubr.bf16.mxu0 0
  %93 = vmatmul.mubr.bf16.gmra.mrb[0].mxu0 %v58
  %v94 = vpop.f32.mrb[0].mxu0
  %v95 = vadd.f32 0.0, %v94
  %v96 = vpop.f32.mrb[0].mxu0
  %v97 = vpop.f32.mrb[0].mxu0
  %v98 = vadd.f32 0.0, %v97
  %v99 = vpop.f32.mrb[0].mxu0
  %100 = vdwg.mxu0
  %v101 = vadd.f32 %v44, %v95
  %v102 = vadd.f32 %v45, %v98
  %v103 = vld [vmem:[%s3] sm:$0xff]
  %v104 = vld [vmem:[%s3 + $0x8] sm:$0xff]
  %106 = vset.pattern.permute.xlu0 0
  %107 = vperm.xlu0 %106, %v103
  %v108 = vpop.permute.xlu0 %107
  %111 = vset.pattern.permute.xlu0 0
  %112 = vperm.xlu0 %111, %v104
  %v113 = vpop.permute.xlu0 %112
  %v115 = vadd.f32 %v101, %v108
  %v116 = vadd.f32 %v102, %v113
  %v117 = vld [vmem:[%s6] sm:$0xf]
  %v118 = vld [vmem:[%s6 + $0x4] sm:$0xf]
  %v119 = vld [vmem:[%s6 + $0x8] sm:$0xf]
  %v120 = vld [vmem:[%s6 + $0xc] sm:$0xf]
  %v121 = vld [vmem:[%s4] sm:$0xff]
  %v122 = vld [vmem:[%s4 + $0x8] sm:$0xff]
  %v123 = vld [vmem:[%s5] sm:$0xff]
  %v124 = vld [vmem:[%s5 + $0x8] sm:$0xff]
  %v125 = vadd.f32 %v115, %v116
  %v126 = vrot.slane %v125, 4
  %v127 = vadd.f32 %v125, %v126
  %v128 = vrot.slane %v127, 2
  %v129 = vadd.f32 %v127, %v128
  %v130 = vrot.slane %v129, 1
  %v131 = vadd.f32 %v129, %v130
  %v132 = vrcp.pop 16.0
  %v133 = vmul.f32 %v131, %v132
  %v134 = vsub.f32 %v115, %v133
  %v135 = vsub.f32 %v116, %v133
  %v136 = vmul.f32 %v134, %v134
  %v137 = vmul.f32 %v135, %v135
  %v138 = vadd.f32 %v136, %v137
  %v139 = vrot.slane %v138, 4
  %v140 = vadd.f32 %v138, %v139
  %v141 = vrot.slane %v140, 2
  %v142 = vadd.f32 %v140, %v141
  %v143 = vrot.slane %v142, 1
  %v144 = vadd.f32 %v142, %v143
  %v145 = vmul.f32 %v144, %v132
  %v146 = vadd.f32 %v145, 1e-05
  %v147 = vrsqrt.pop %v146
  %v148 = vmul.f32 %v134, %v147
  %v149 = vmul.f32 %v135, %v147
  %151 = vset.pattern.permute.xlu0 0
  %152 = vperm.xlu0 %151, %v121
  %v153 = vpop.permute.xlu0 %152
  %156 = vset.pattern.permute.xlu0 0
  %157 = vperm.xlu0 %156, %v122
  %v158 = vpop.permute.xlu0 %157
  %v160 = vmul.f32 %v148, %v153
  %v161 = vmul.f32 %v149, %v158
  %163 = vset.pattern.permute.xlu0 0
  %164 = vperm.xlu0 %163, %v123
  %v165 = vpop.permute.xlu0 %164
  %168 = vset.pattern.permute.xlu0 0
  %169 = vperm.xlu0 %168, %v124
  %v170 = vpop.permute.xlu0 %169
  %v172 = vadd.f32 %v160, %v165
  %v173 = vadd.f32 %v161, %v170
  %v174 = vpack.c.bf16 %v173, %v172
  %v175 = vld [vmem:[%s7] sm:$0xff]
  %v176 = vld [vmem:[%s7 + $0x8] sm:$0xff]
  %v177 = vld [vmem:[%s7 + $0x10] sm:$0xff]
  %v178 = vld [vmem:[%s7 + $0x18] sm:$0xff]
  %180 = vset.pattern.permute.xlu0 0
  %181 = vperm.xlu0 %180, %v175
  %v182 = vpop.permute.xlu0 %181
  %185 = vset.pattern.permute.xlu0 0
  %186 = vperm.xlu0 %185, %v176
  %v187 = vpop.permute.xlu0 %186
  %190 = vset.pattern.permute.xlu0 0
  %191 = vperm.xlu0 %190, %v177
  %v192 = vpop.permute.xlu0 %191
  %195 = vset.pattern.permute.xlu0 0
  %196 = vperm.xlu0 %195, %v178
  %v197 = vpop.permute.xlu0 %196
  %v203 = vunpack.c.l.b16 %v117
  %v204 = vunpack.c.l.b16 %v118
  %v205 = vunpack.c.l.b16 %v119
  %v206 = vunpack.c.l.b16 %v120
  %v207 = vpack.c.b16 %v204, %v203
  %v208 = vpack.c.b16 %v206, %v205
  %v210 = vsel %vm56, %v207, 0
  %v213 = vsel %vm56, %v208, 0
  %215 = vmatprep.subr.bf16.mxu0 0
  %216 = vmatpush1.bf16.msra.mxu0 %v174
  %217 = vmatprep.subr.bf16.mxu0 0
  %218 = vmatpush1.bf16.msra.mxu0 0
  %219 = vmatprep.subr.bf16.mxu0 0
  %220 = vmatpush1.bf16.msra.mxu0 0
  %221 = vmatprep.subr.bf16.mxu0 0
  %222 = vmatpush1.bf16.msra.mxu0 0
  %223 = vmatprep.subr.bf16.mxu0 0
  %224 = vmatpush1.bf16.msra.mxu0 0
  %225 = vmatprep.subr.bf16.mxu0 0
  %226 = vmatpush1.bf16.msra.mxu0 0
  %227 = vmatprep.subr.bf16.mxu0 0
  %228 = vmatpush1.bf16.msra.mxu0 0
  %229 = vmatprep.subr.bf16.mxu0 0
  %230 = vmatpush1.bf16.msra.mxu0 0
  %231 = vmatprep.subr.bf16.mxu0 0
  %232 = vmatpush1.bf16.msra.mxu0 0
  %233 = vmatprep.subr.bf16.mxu0 0
  %234 = vmatpush1.bf16.msra.mxu0 0
  %235 = vmatprep.subr.bf16.mxu0 0
  %236 = vmatpush1.bf16.msra.mxu0 0
  %237 = vmatprep.subr.bf16.mxu0 0
  %238 = vmatpush1.bf16.msra.mxu0 0
  %239 = vmatprep.subr.bf16.mxu0 0
  %240 = vmatpush1.bf16.msra.mxu0 0
  %241 = vmatprep.subr.bf16.mxu0 0
  %242 = vmatpush1.bf16.msra.mxu0 0
  %243 = vmatprep.subr.bf16.mxu0 0
  %244 = vmatpush1.bf16.msra.mxu0 0
  %245 = vmatprep.subr.bf16.mxu0 0
  %246 = vmatpush1.bf16.msra.mxu0 0
  %247 = vmatprep.mubr.bf16.mxu0 0
  %248 = vmatmul.mubr.bf16.gmra.mrb[0].mxu0 %v210
  %v249 = vpop.f32.mrb[0].mxu0
  %v250 = vadd.f32 %v182, %v249
  %v251 = vpop.f32.mrb[0].mxu0
  %v252 = vpop.f32.mrb[0].mxu0
  %v253 = vadd.f32 %v187, %v252
  %v254 = vpop.f32.mrb[0].mxu0
  %255 = vmatprep.mubr.bf16.mxu0 0
  %256 = vmatmul.mubr.bf16.gmra.mrb[0].mxu0 %v213
  %v257 = vpop.f32.mrb[0].mxu0
  %v258 = vadd.f32 %v192, %v257
  %v259 = vpop.f32.mrb[0].mxu0
  %v260 = vpop.f32.mrb[0].mxu0
  %v261 = vadd.f32 %v197, %v260
  %v262 = vpop.f32.mrb[0].mxu0
  %263 = vdwg.mxu0
  %v264 = vmul.f32 %v250, 0.5
  %v265 = vmul.f32 %v253, 0.5
  %v266 = vmul.f32 %v258, 0.5
  %v267 = vmul.f32 %v261, 0.5
  %v268 = vmul.f32 %v250, 0.044715
  %v269 = vmul.f32 %v253, 0.044715
  %v270 = vmul.f32 %v258, 0.044715
  %v271 = vmul.f32 %v261, 0.044715
  %v272 = vmul.f32 %v268, %v250
  %v273 = vmul.f32 %v269, %v253
  %v274 = vmul.f32 %v270, %v258
  %v275 = vmul.f32 %v271, %v261
  %v276 = vmul.f32 %v272, %v250
  %v277 = vmul.f32 %v273, %v253
  %v278 = vmul.f32 %v274, %v258
  %v279 = vmul.f32 %v275, %v261
  %v280 = vadd.f32 %v250, %v276
  %v281 = vadd.f32 %v253, %v277
  %v282 = vadd.f32 %v258, %v278
  %v283 = vadd.f32 %v261, %v279
  %v284 = vmul.f32 %v280, 0.7978845
  %v285 = vmul.f32 %v281, 0.7978845
  %v286 = vmul.f32 %v282, 0.7978845
  %v287 = vmul.f32 %v283, 0.7978845
  %v288 = vtanh.pop %v284
  %v289 = vtanh.pop %v285
  %v290 = vtanh.pop %v286
  %v291 = vtanh.pop %v287
  %v292 = vadd.f32 %v288, 1.0
  %v293 = vadd.f32 %v289, 1.0
  %v294 = vadd.f32 %v290, 1.0
  %v295 = vadd.f32 %v291, 1.0
  %v296 = vmul.f32 %v264, %v292
  %v297 = vmul.f32 %v265, %v293
  %v298 = vmul.f32 %v266, %v294
  %v299 = vmul.f32 %v267, %v295
  %v300 = vld [vmem:[%s8] sm:$0xf]
  %v301 = vld [vmem:[%s8 + $0x4] sm:$0xf]
  %v302 = vpack.c.bf16 %v297, %v296
  %v303 = vpack.c.bf16 %v299, %v298
  %v306 = vunpack.c.l.b16 %v300
  %v307 = vunpack.c.l.b16 %v301
  %v308 = vpack.c.b16 %v307, %v306
  %vm309 = vcmask 261120
  %v311 = vsel %vm309, %v308, 0
  %313 = vmatprep.subr.bf16.mxu0 0
  %314 = vmatpush1.bf16.msra.mxu0 %v302
  %315 = vmatprep.subr.bf16.mxu0 0
  %316 = vmatpush1.bf16.msra.mxu0 %v303
  %317 = vmatprep.subr.bf16.mxu0 0
  %318 = vmatpush1.bf16.msra.mxu0 0
  %319 = vmatprep.subr.bf16.mxu0 0
  %320 = vmatpush1.bf16.msra.mxu0 0
  %321 = vmatprep.subr.bf16.mxu0 0
  %322 = vmatpush1.bf16.msra.mxu0 0
  %323 = vmatprep.subr.bf16.mxu0 0
  %324 = vmatpush1.bf16.msra.mxu0 0
  %325 = vmatprep.subr.bf16.mxu0 0
  %326 = vmatpush1.bf16.msra.mxu0 0
  %327 = vmatprep.subr.bf16.mxu0 0
  %328 = vmatpush1.bf16.msra.mxu0 0
  %329 = vmatprep.subr.bf16.mxu0 0
  %330 = vmatpush1.bf16.msra.mxu0 0
  %331 = vmatprep.subr.bf16.mxu0 0
  %332 = vmatpush1.bf16.msra.mxu0 0
  %333 = vmatprep.subr.bf16.mxu0 0
  %334 = vmatpush1.bf16.msra.mxu0 0
  %335 = vmatprep.subr.bf16.mxu0 0
  %336 = vmatpush1.bf16.msra.mxu0 0
  %337 = vmatprep.subr.bf16.mxu0 0
  %338 = vmatpush1.bf16.msra.mxu0 0
  %339 = vmatprep.subr.bf16.mxu0 0
  %340 = vmatpush1.bf16.msra.mxu0 0
  %341 = vmatprep.subr.bf16.mxu0 0
  %342 = vmatpush1.bf16.msra.mxu0 0
  %343 = vmatprep.subr.bf16.mxu0 0
  %344 = vmatpush1.bf16.msra.mxu0 0
  %345 = vmatprep.mubr.bf16.mxu0 0
  %346 = vmatmul.mubr.bf16.gmra.mrb[0].mxu0 %v311
  %v347 = vpop.f32.mrb[0].mxu0
  %v348 = vadd.f32 0.0, %v347
  %v349 = vpop.f32.mrb[0].mxu0
  %v350 = vpop.f32.mrb[0].mxu0
  %v351 = vadd.f32 0.0, %v350
  %v352 = vpop.f32.mrb[0].mxu0
  %353 = vdwg.mxu0
  %v354 = vadd.f32 %v115, %v348
  %v355 = vadd.f32 %v116, %v351
  %v356 = vld [vmem:[%s9] sm:$0xff]
  %v357 = vld [vmem:[%s9 + $0x8] sm:$0xff]
  %359 = vset.pattern.permute.xlu0 0
  %360 = vperm.xlu0 %359, %v356
  %v361 = vpop.permute.xlu0 %360
  %364 = vset.pattern.permute.xlu0 0
  %365 = vperm.xlu0 %364, %v357
  %v366 = vpop.permute.xlu0 %365
  %v368 = vadd.f32 %v354, %v361
  %v369 = vadd.f32 %v355, %v366
  %v370 = vld [vmem:[%s10] sm:$0x1]
  %v371 = vpack.c.bf16 %v369, %v368
  %v372 = vld [vmem:[#allocation2] sm:$0x1]
  %374 = vset.pattern.permute.xlu0 0
  %375 = vperm.xlu0 %374, %v372
  %v376 = vpop.permute.xlu0 %375
  %v378 = vlaneseq
  %v379 = vshrl.u32 %v378, 7
  %v380 = vsub.s32 0, %v379
  %v381 = vrot.slane %v376, %v380
  %v383 = vsel %vm56, %v370, 0
  %385 = vmatprep.subr.bf16.mxu0 0
  %386 = vmatpush1.bf16.msra.mxu0 %v371
  %387 = vmatprep.subr.bf16.mxu0 0
  %388 = vmatpush1.bf16.msra.mxu0 0
  %389 = vmatprep.subr.bf16.mxu0 0
  %390 = vmatpush1.bf16.msra.mxu0 0
  %391 = vmatprep.subr.bf16.mxu0 0
  %392 = vmatpush1.bf16.msra.mxu0 0
  %393 = vmatprep.subr.bf16.mxu0 0
  %394 = vmatpush1.bf16.msra.mxu0 0
  %395 = vmatprep.subr.bf16.mxu0 0
  %396 = vmatpush1.bf16.msra.mxu0 0
  %397 = vmatprep.subr.bf16.mxu0 0
  %398 = vmatpush1.bf16.msra.mxu0 0
  %399 = vmatprep.subr.bf16.mxu0 0
  %400 = vmatpush1.bf16.msra.mxu0 0
  %401 = vmatprep.subr.bf16.mxu0 0
  %402 = vmatpush1.bf16.msra.mxu0 0
  %403 = vmatprep.subr.bf16.mxu0 0
  %404 = vmatpush1.bf16.msra.mxu0 0
  %405 = vmatprep.subr.bf16.mxu0 0
  %406 = vmatpush1.bf16.msra.mxu0 0
  %407 = vmatprep.subr.bf16.mxu0 0
  %408 = vmatpush1.bf16.msra.mxu0 0
  %409 = vmatprep.subr.bf16.mxu0 0
  %410 = vmatpush1.bf16.msra.mxu0 0
  %411 = vmatprep.subr.bf16.mxu0 0
  %412 = vmatpush1.bf16.msra.mxu0 0
  %413 = vmatprep.subr.bf16.mxu0 0
  %414 = vmatpush1.bf16.msra.mxu0 0
  %415 = vmatprep.subr.bf16.mxu0 0
  %416 = vmatpush1.bf16.msra.mxu0 0
  %417 = vmatprep.mubr.bf16.mxu0 0
  %418 = vmatmul.mubr.bf16.gmra.mrb[0].mxu0 %v383
  %v419 = vpop.f32.mrb[0].mxu0
  %v420 = vadd.f32 %v381, %v419
  %v421 = vpop.f32.mrb[0].mxu0
  %v422 = vpop.f32.mrb[0].mxu0
  %v423 = vpop.f32.mrb[0].mxu0
  %424 = vdwg.mxu0
  %425 = vst [vmem:[%s12] sm:$0x1] %v420
  // Predicated region
  $region50: #{stacked_transformer_forward.11} parent=0 // pred_check
    _
  $region51: #{stacked_transformer_forward.11} parent=0 // pred_check_branch
    %427 = sbr.rel (0) target = $region53
  $region52: #{stacked_transformer_forward.11} parent=0 // pred_region
    _
  $region53: #{stacked_transformer_forward.11} parent=0 // pred_fallthru
    _
  // Predicated region
  $region54: #{stacked_transformer_forward.11} parent=0 // pred_check
    _
  $region55: #{stacked_transformer_forward.11} parent=0 // pred_check_branch
    %429 = sbr.rel (0) target = $region57
  $region56: #{stacked_transformer_forward.11} parent=0 // pred_region
    _
  $region57: #{stacked_transformer_forward.11} parent=0 // pred_fallthru
    _

</llo_original>
